<compile_context>
chip_gen: v7x
topology: tpu7x:2x2x1
jax: 0.10.0
libtpu: 0.0.40
codegen_flags: <defaults>
</compile_context>

<pallas_src>
import functools

import jax
import jax.numpy as jnp
from jax.experimental import pallas as pl
from jax.experimental.pallas import tpu as pltpu


# --------------------------------------------------------------------------------------
# Kernel
# --------------------------------------------------------------------------------------
def mfnn_kernel(x_ref,
                w1_ref, b1_ref,
                w2_ref, b2_ref,
                w3_ref, b3_ref,
                w4_ref, b4_ref,
                w5_ref, b5_ref,
                w6_ref, b6_ref,
                w7_ref, b7_ref,
                wend_ref, bend_ref,
                o_ref,
                *, scalar_input, vpu_end):
    # ---- fc1 ----
    x = x_ref[...]
    if scalar_input:
        # HF_input_dim == 1: x @ W1 is a rank-1 broadcast -> keep it on the VPU, f32.
        h = jnp.maximum(x * w1_ref[...] + b1_ref[...], 0.0)
    else:
        h = jnp.maximum(
            jnp.dot(x.astype(w1_ref.dtype), w1_ref[...],
                    preferred_element_type=jnp.float32) + b1_ref[...],
            0.0)

    # ---- fc2 .. fc7 ----  bf16 MXU operands, f32 accumulation, f32 epilogue (VPU).
    hidden_layers = [(w2_ref, b2_ref), (w3_ref, b3_ref), (w4_ref, b4_ref),
                     (w5_ref, b5_ref), (w6_ref, b6_ref), (w7_ref, b7_ref)]
    for w_ref, b_ref in hidden_layers:
        h = jnp.maximum(
            jnp.dot(h.astype(w_ref.dtype), w_ref[...],
                    preferred_element_type=jnp.float32) + b_ref[...],
            0.0)

    # ---- fcEND (no activation) ----
    if vpu_end:
        # HF_output_dim == 1: wend passed as a (1, H) row; VPU multiply + lane reduce
        # instead of an N=1 MXU matmul (MXU has no useful output width there).
        o_ref[...] = (jnp.sum(h * wend_ref[...], axis=-1, keepdims=True)
                      + bend_ref[...])
    else:
        o_ref[...] = (jnp.dot(h.astype(wend_ref.dtype), wend_ref[...],
                              preferred_element_type=jnp.float32) + bend_ref[...])


# --------------------------------------------------------------------------------------
# Wrapper
# --------------------------------------------------------------------------------------
def _default_tile_b(batch):
    # Largest "nice" tile that (a) is a multiple of 8, (b) divides B, and (c) leaves
    # at least 2 grid steps so the parallel axis can shard across v7x's 2 TensorCores.
    for cand in (256, 128, 64, 32, 16, 8):
        if cand < batch and batch % cand == 0:
            return cand
    return batch  # tiny batch: single full-size tile


def high_fidelity_forward(x, params, *, tile_b=None):
    """x: (B, HF_input_dim) float32.  params: dict, weights stored as (in, out)."""
    B, in_dim = x.shape
    H = params["w2"].shape[0]
    out_dim = params["wend"].shape[1]

    if tile_b is None:
        tile_b = _default_tile_b(B)
    assert B % tile_b == 0, "batch must be divisible by tile_b"
    assert tile_b == B or tile_b % 8 == 0, "tile_b must be a multiple of 8 (f32 sublanes)"

    scalar_input = (in_dim == 1)
    vpu_end = (out_dim == 1)

    bf16 = jnp.bfloat16
    f32 = jnp.float32

    # fc1 weight stays f32 when it is used on the VPU; MXU-feeding weights go bf16.
    w1 = params["w1"].astype(f32) if scalar_input else params["w1"].astype(bf16)
    # fcEND weight: as a (1, H) f32 row for the VPU path, else bf16 (H, out_dim) for MXU.
    wend = (params["wend"].reshape(1, H).astype(f32) if vpu_end
            else params["wend"].astype(bf16))

    param_arrays = [
        w1, params["b1"].astype(f32),
        params["w2"].astype(bf16), params["b2"].astype(f32),
        params["w3"].astype(bf16), params["b3"].astype(f32),
        params["w4"].astype(bf16), params["b4"].astype(f32),
        params["w5"].astype(bf16), params["b5"].astype(f32),
        params["w6"].astype(bf16), params["b6"].astype(f32),
        params["w7"].astype(bf16), params["b7"].astype(f32),
        wend, params["bend"].astype(f32),
    ]

    def build_and_run(single_buffer_params):
        def param_spec(arr):
            nd = arr.ndim
            kwargs = {}
            if single_buffer_params:
                # Constant index_map -> nothing to double-buffer; halve resident VMEM.
                kwargs["pipeline_mode"] = pl.Buffered(1)
            return pl.BlockSpec(arr.shape, lambda i, _nd=nd: (0,) * _nd, **kwargs)

        in_specs = [pl.BlockSpec((tile_b, in_dim), lambda i: (i, 0))]
        in_specs += [param_spec(a) for a in param_arrays]
        out_spec = pl.BlockSpec((tile_b, out_dim), lambda i: (i, 0))

        flops = 2 * B * (in_dim * H + 6 * H * H + H * out_dim)
        bytes_accessed = (sum(int(a.size) * a.dtype.itemsize for a in param_arrays)
                          + B * (in_dim + out_dim) * 4)

        # NOTE: if H is scaled up far beyond this demo (e.g. >= 2048), also set
        # pltpu.CompilerParams(vmem_limit_bytes=...) and/or tile the weight matrices
        # with an extra grid axis so the resident-weights design still fits v7x's
        # smaller (64 MiB) VMEM.
        return pl.pallas_call(
            functools.partial(mfnn_kernel,
                              scalar_input=scalar_input, vpu_end=vpu_end),
            out_shape=jax.ShapeDtypeStruct((B, out_dim), f32),
            grid_spec=pltpu.PrefetchScalarGridSpec(
                num_scalar_prefetch=0,
                grid=(B // tile_b,),
                in_specs=in_specs,
                out_specs=out_spec,
            ),
            compiler_params=pltpu.CompilerParams(
                dimension_semantics=("parallel",)),
            cost_estimate=pl.CostEstimate(flops=flops, transcendentals=0,
                                          bytes_accessed=bytes_accessed),
        )(x, *param_arrays)

    try:
        return build_and_run(single_buffer_params=True)
    except Exception:
        # Best-effort fallback for environments where BlockSpec(pipeline_mode=...) is
        # not supported: identical math, just double-buffered parameters.
        return build_and_run(single_buffer_params=False)


# --------------------------------------------------------------------------------------
# Synthetic params + reference
# --------------------------------------------------------------------------------------
def init_params(key, hidden, in_dim, out_dim):
    """Deterministic synthetic init (shapes match the PyTorch module, (in, out) layout).

    Hidden-layer weights are stored directly as bf16 in HBM (MXU-native, half the DMA);
    biases and VPU-path weights stay f32.
    """
    ks = jax.random.split(key, 16)

    def w(k, shape, fan_in, dtype):
        scale = (2.0 / fan_in) ** 0.5
        return (scale * jax.random.normal(k, shape)).astype(dtype)

    def b(k, shape):
        return (0.01 * jax.random.normal(k, shape)).astype(jnp.float32)

    params = {
        "w1": w(ks[0], (in_dim, hidden), in_dim, jnp.float32),
        "b1": b(ks[1], (1, hidden)),
        "wend": w(ks[14], (hidden, out_dim), hidden, jnp.float32),
        "bend": b(ks[15], (1, out_dim)),
    }
    for i in range(2, 8):
        params[f"w{i}"] = w(ks[2 * (i - 1)], (hidden, hidden), hidden, jnp.bfloat16)
        params[f"b{i}"] = b(ks[2 * (i - 1) + 1], (1, hidden))
    return params


def reference_forward(x, p):
    """Pure-JAX reference mirroring the kernel numerics (bf16 MXU operands, f32 acc)."""
    h = jnp.maximum(x @ p["w1"].astype(jnp.float32) + p["b1"], 0.0)
    for i in range(2, 8):
        z = jnp.dot(h.astype(jnp.bfloat16), p[f"w{i}"].astype(jnp.bfloat16),
                    preferred_element_type=jnp.float32)
        h = jnp.maximum(z + p[f"b{i}"], 0.0)
    return jnp.dot(h, p["wend"].astype(jnp.float32),
                   preferred_element_type=jnp.float32) + p["bend"]


# --------------------------------------------------------------------------------------
# Demo / self-test
# --------------------------------------------------------------------------------------
if __name__ == "__main__":
    # Small shapes consistent with the module: HF_input_dim=1, HF_output_dim=1,
    # hidden width kept small (256) for the demo.  B=256 with tile_b=128 gives a
    # 2-step parallel grid (fills the MXU M dim and both v7x TensorCores).
    B, IN_DIM, OUT_DIM, HIDDEN = 256, 1, 1, 256

    key = jax.random.PRNGKey(0)
    kx, kp = jax.random.split(key)
    x = jax.random.normal(kx, (B, IN_DIM), dtype=jnp.float32)
    params = init_params(kp, HIDDEN, IN_DIM, OUT_DIM)

    y = high_fidelity_forward(x, params)
    y = jax.block_until_ready(y)

    y_ref = reference_forward(x, params)
    assert y.shape == (B, OUT_DIM)
    assert bool(jnp.all(jnp.isfinite(y)))
    # bf16 operands with f32 accumulation: allow a modest tolerance for the 8-layer chain.
    assert jnp.allclose(y, y_ref, atol=5e-3, rtol=5e-3), float(jnp.max(jnp.abs(y - y_ref)))

    print("KERNEL_OK")
</pallas_src>

<mosaic_0001>
module attributes {stable_mosaic.version = 11 : i64} {
  func.func @mfnn_kernel(%arg0: i32, %arg1: memref<128x1xf32, #tpu.memory_space<vmem>>, %arg2: memref<1x256xf32, #tpu.memory_space<vmem>>, %arg3: memref<1x256xf32, #tpu.memory_space<vmem>>, %arg4: memref<256x256xbf16, #tpu.memory_space<vmem>>, %arg5: memref<1x256xf32, #tpu.memory_space<vmem>>, %arg6: memref<256x256xbf16, #tpu.memory_space<vmem>>, %arg7: memref<1x256xf32, #tpu.memory_space<vmem>>, %arg8: memref<256x256xbf16, #tpu.memory_space<vmem>>, %arg9: memref<1x256xf32, #tpu.memory_space<vmem>>, %arg10: memref<256x256xbf16, #tpu.memory_space<vmem>>, %arg11: memref<1x256xf32, #tpu.memory_space<vmem>>, %arg12: memref<256x256xbf16, #tpu.memory_space<vmem>>, %arg13: memref<1x256xf32, #tpu.memory_space<vmem>>, %arg14: memref<256x256xbf16, #tpu.memory_space<vmem>>, %arg15: memref<1x256xf32, #tpu.memory_space<vmem>>, %arg16: memref<1x256xf32, #tpu.memory_space<vmem>>, %arg17: memref<1x1xf32, #tpu.memory_space<vmem>>, %arg18: memref<128x1xf32, #tpu.memory_space<vmem>>) attributes {dimension_semantics = [#tpu.dimension_semantics<parallel>], iteration_bounds = array<i64: 2>, scalar_prefetch = 0 : i64, scratch_operands = 0 : i64, tpu.core_type = #tpu.core_type<tc>, window_params = [{transform_indices = @transform_0, window_bounds = array<i64: 128, 1>}, {pipeline_mode = #tpu.pipeline_mode<synchronous>, transform_indices = @transform_1, window_bounds = array<i64: 1, 256>}, {pipeline_mode = #tpu.pipeline_mode<synchronous>, transform_indices = @transform_2, window_bounds = array<i64: 1, 256>}, {pipeline_mode = #tpu.pipeline_mode<synchronous>, transform_indices = @transform_3, window_bounds = array<i64: 256, 256>}, {pipeline_mode = #tpu.pipeline_mode<synchronous>, transform_indices = @transform_4, window_bounds = array<i64: 1, 256>}, {pipeline_mode = #tpu.pipeline_mode<synchronous>, transform_indices = @transform_5, window_bounds = array<i64: 256, 256>}, {pipeline_mode = #tpu.pipeline_mode<synchronous>, transform_indices = @transform_6, window_bounds = array<i64: 1, 256>}, {pipeline_mode = #tpu.pipeline_mode<synchronous>, transform_indices = @transform_7, window_bounds = array<i64: 256, 256>}, {pipeline_mode = #tpu.pipeline_mode<synchronous>, transform_indices = @transform_8, window_bounds = array<i64: 1, 256>}, {pipeline_mode = #tpu.pipeline_mode<synchronous>, transform_indices = @transform_9, window_bounds = array<i64: 256, 256>}, {pipeline_mode = #tpu.pipeline_mode<synchronous>, transform_indices = @transform_10, window_bounds = array<i64: 1, 256>}, {pipeline_mode = #tpu.pipeline_mode<synchronous>, transform_indices = @transform_11, window_bounds = array<i64: 256, 256>}, {pipeline_mode = #tpu.pipeline_mode<synchronous>, transform_indices = @transform_12, window_bounds = array<i64: 1, 256>}, {pipeline_mode = #tpu.pipeline_mode<synchronous>, transform_indices = @transform_13, window_bounds = array<i64: 256, 256>}, {pipeline_mode = #tpu.pipeline_mode<synchronous>, transform_indices = @transform_14, window_bounds = array<i64: 1, 256>}, {pipeline_mode = #tpu.pipeline_mode<synchronous>, transform_indices = @transform_15, window_bounds = array<i64: 1, 256>}, {pipeline_mode = #tpu.pipeline_mode<synchronous>, transform_indices = @transform_16, window_bounds = array<i64: 1, 1>}, {transform_indices = @transform_17, window_bounds = array<i64: 128, 1>}]} {
    %c0 = arith.constant 0 : index
    %c0_0 = arith.constant 0 : index
    %0 = vector.load %arg1[%c0, %c0_0] : memref<128x1xf32, #tpu.memory_space<vmem>>, vector<128x1xf32>
    %c0_1 = arith.constant 0 : index
    %c0_2 = arith.constant 0 : index
    %1 = vector.load %arg2[%c0_1, %c0_2] : memref<1x256xf32, #tpu.memory_space<vmem>>, vector<1x256xf32>
    %2 = vector.broadcast %0 : vector<128x1xf32> to vector<128x256xf32>
    %3 = vector.broadcast %1 : vector<1x256xf32> to vector<128x256xf32>
    %4 = arith.mulf %2, %3 : vector<128x256xf32>
    %c0_3 = arith.constant 0 : index
    %c0_4 = arith.constant 0 : index
    %5 = vector.load %arg3[%c0_3, %c0_4] : memref<1x256xf32, #tpu.memory_space<vmem>>, vector<1x256xf32>
    %6 = vector.broadcast %5 : vector<1x256xf32> to vector<128x256xf32>
    %7 = arith.addf %4, %6 : vector<128x256xf32>
    %cst = arith.constant 0.000000e+00 : f32
    %8 = vector.broadcast %cst : f32 to vector<128x256xf32>
    %9 = arith.maximumf %7, %8 : vector<128x256xf32>
    %10 = arith.truncf %9 : vector<128x256xf32> to vector<128x256xbf16>
    %c0_5 = arith.constant 0 : index
    %c0_6 = arith.constant 0 : index
    %11 = vector.load %arg4[%c0_5, %c0_6] : memref<256x256xbf16, #tpu.memory_space<vmem>>, vector<256x256xbf16>
    %cst_7 = arith.constant dense<0.000000e+00> : vector<128x256xf32>
    %12 = tpu.matmul %10, %11, %cst_7 {dimension_numbers = #tpu.dot_dimension_numbers<[1], [0], [0], [1], [0, 0, 1, 1], [], []>} : vector<128x256xbf16>, vector<256x256xbf16>, vector<128x256xf32> -> vector<128x256xf32>
    %c0_8 = arith.constant 0 : index
    %c0_9 = arith.constant 0 : index
    %13 = vector.load %arg5[%c0_8, %c0_9] : memref<1x256xf32, #tpu.memory_space<vmem>>, vector<1x256xf32>
    %14 = vector.broadcast %13 : vector<1x256xf32> to vector<128x256xf32>
    %15 = arith.addf %12, %14 : vector<128x256xf32>
    %cst_10 = arith.constant 0.000000e+00 : f32
    %16 = vector.broadcast %cst_10 : f32 to vector<128x256xf32>
    %17 = arith.maximumf %15, %16 : vector<128x256xf32>
    %18 = arith.truncf %17 : vector<128x256xf32> to vector<128x256xbf16>
    %c0_11 = arith.constant 0 : index
    %c0_12 = arith.constant 0 : index
    %19 = vector.load %arg6[%c0_11, %c0_12] : memref<256x256xbf16, #tpu.memory_space<vmem>>, vector<256x256xbf16>
    %cst_13 = arith.constant dense<0.000000e+00> : vector<128x256xf32>
    %20 = tpu.matmul %18, %19, %cst_13 {dimension_numbers = #tpu.dot_dimension_numbers<[1], [0], [0], [1], [0, 0, 1, 1], [], []>} : vector<128x256xbf16>, vector<256x256xbf16>, vector<128x256xf32> -> vector<128x256xf32>
    %c0_14 = arith.constant 0 : index
    %c0_15 = arith.constant 0 : index
    %21 = vector.load %arg7[%c0_14, %c0_15] : memref<1x256xf32, #tpu.memory_space<vmem>>, vector<1x256xf32>
    %22 = vector.broadcast %21 : vector<1x256xf32> to vector<128x256xf32>
    %23 = arith.addf %20, %22 : vector<128x256xf32>
    %cst_16 = arith.constant 0.000000e+00 : f32
    %24 = vector.broadcast %cst_16 : f32 to vector<128x256xf32>
    %25 = arith.maximumf %23, %24 : vector<128x256xf32>
    %26 = arith.truncf %25 : vector<128x256xf32> to vector<128x256xbf16>
    %c0_17 = arith.constant 0 : index
    %c0_18 = arith.constant 0 : index
    %27 = vector.load %arg8[%c0_17, %c0_18] : memref<256x256xbf16, #tpu.memory_space<vmem>>, vector<256x256xbf16>
    %cst_19 = arith.constant dense<0.000000e+00> : vector<128x256xf32>
    %28 = tpu.matmul %26, %27, %cst_19 {dimension_numbers = #tpu.dot_dimension_numbers<[1], [0], [0], [1], [0, 0, 1, 1], [], []>} : vector<128x256xbf16>, vector<256x256xbf16>, vector<128x256xf32> -> vector<128x256xf32>
    %c0_20 = arith.constant 0 : index
    %c0_21 = arith.constant 0 : index
    %29 = vector.load %arg9[%c0_20, %c0_21] : memref<1x256xf32, #tpu.memory_space<vmem>>, vector<1x256xf32>
    %30 = vector.broadcast %29 : vector<1x256xf32> to vector<128x256xf32>
    %31 = arith.addf %28, %30 : vector<128x256xf32>
    %cst_22 = arith.constant 0.000000e+00 : f32
    %32 = vector.broadcast %cst_22 : f32 to vector<128x256xf32>
    %33 = arith.maximumf %31, %32 : vector<128x256xf32>
    %34 = arith.truncf %33 : vector<128x256xf32> to vector<128x256xbf16>
    %c0_23 = arith.constant 0 : index
    %c0_24 = arith.constant 0 : index
    %35 = vector.load %arg10[%c0_23, %c0_24] : memref<256x256xbf16, #tpu.memory_space<vmem>>, vector<256x256xbf16>
    %cst_25 = arith.constant dense<0.000000e+00> : vector<128x256xf32>
    %36 = tpu.matmul %34, %35, %cst_25 {dimension_numbers = #tpu.dot_dimension_numbers<[1], [0], [0], [1], [0, 0, 1, 1], [], []>} : vector<128x256xbf16>, vector<256x256xbf16>, vector<128x256xf32> -> vector<128x256xf32>
    %c0_26 = arith.constant 0 : index
    %c0_27 = arith.constant 0 : index
    %37 = vector.load %arg11[%c0_26, %c0_27] : memref<1x256xf32, #tpu.memory_space<vmem>>, vector<1x256xf32>
    %38 = vector.broadcast %37 : vector<1x256xf32> to vector<128x256xf32>
    %39 = arith.addf %36, %38 : vector<128x256xf32>
    %cst_28 = arith.constant 0.000000e+00 : f32
    %40 = vector.broadcast %cst_28 : f32 to vector<128x256xf32>
    %41 = arith.maximumf %39, %40 : vector<128x256xf32>
    %42 = arith.truncf %41 : vector<128x256xf32> to vector<128x256xbf16>
    %c0_29 = arith.constant 0 : index
    %c0_30 = arith.constant 0 : index
    %43 = vector.load %arg12[%c0_29, %c0_30] : memref<256x256xbf16, #tpu.memory_space<vmem>>, vector<256x256xbf16>
    %cst_31 = arith.constant dense<0.000000e+00> : vector<128x256xf32>
    %44 = tpu.matmul %42, %43, %cst_31 {dimension_numbers = #tpu.dot_dimension_numbers<[1], [0], [0], [1], [0, 0, 1, 1], [], []>} : vector<128x256xbf16>, vector<256x256xbf16>, vector<128x256xf32> -> vector<128x256xf32>
    %c0_32 = arith.constant 0 : index
    %c0_33 = arith.constant 0 : index
    %45 = vector.load %arg13[%c0_32, %c0_33] : memref<1x256xf32, #tpu.memory_space<vmem>>, vector<1x256xf32>
    %46 = vector.broadcast %45 : vector<1x256xf32> to vector<128x256xf32>
    %47 = arith.addf %44, %46 : vector<128x256xf32>
    %cst_34 = arith.constant 0.000000e+00 : f32
    %48 = vector.broadcast %cst_34 : f32 to vector<128x256xf32>
    %49 = arith.maximumf %47, %48 : vector<128x256xf32>
    %50 = arith.truncf %49 : vector<128x256xf32> to vector<128x256xbf16>
    %c0_35 = arith.constant 0 : index
    %c0_36 = arith.constant 0 : index
    %51 = vector.load %arg14[%c0_35, %c0_36] : memref<256x256xbf16, #tpu.memory_space<vmem>>, vector<256x256xbf16>
    %cst_37 = arith.constant dense<0.000000e+00> : vector<128x256xf32>
    %52 = tpu.matmul %50, %51, %cst_37 {dimension_numbers = #tpu.dot_dimension_numbers<[1], [0], [0], [1], [0, 0, 1, 1], [], []>} : vector<128x256xbf16>, vector<256x256xbf16>, vector<128x256xf32> -> vector<128x256xf32>
    %c0_38 = arith.constant 0 : index
    %c0_39 = arith.constant 0 : index
    %53 = vector.load %arg15[%c0_38, %c0_39] : memref<1x256xf32, #tpu.memory_space<vmem>>, vector<1x256xf32>
    %54 = vector.broadcast %53 : vector<1x256xf32> to vector<128x256xf32>
    %55 = arith.addf %52, %54 : vector<128x256xf32>
    %cst_40 = arith.constant 0.000000e+00 : f32
    %56 = vector.broadcast %cst_40 : f32 to vector<128x256xf32>
    %57 = arith.maximumf %55, %56 : vector<128x256xf32>
    %c0_41 = arith.constant 0 : index
    %c0_42 = arith.constant 0 : index
    %58 = vector.load %arg16[%c0_41, %c0_42] : memref<1x256xf32, #tpu.memory_space<vmem>>, vector<1x256xf32>
    %59 = vector.broadcast %58 : vector<1x256xf32> to vector<128x256xf32>
    %60 = arith.mulf %57, %59 : vector<128x256xf32>
    %cst_43 = arith.constant dense<0.000000e+00> : vector<128xf32>
    %61 = vector.multi_reduction <add>, %60, %cst_43 [1] : vector<128x256xf32> to vector<128xf32>
    %62 = vector.shape_cast %61 : vector<128xf32> to vector<128x1xf32>
    %c0_44 = arith.constant 0 : index
    %c0_45 = arith.constant 0 : index
    %63 = vector.load %arg17[%c0_44, %c0_45] : memref<1x1xf32, #tpu.memory_space<vmem>>, vector<1x1xf32>
    %64 = vector.broadcast %63 : vector<1x1xf32> to vector<128x1xf32>
    %65 = arith.addf %62, %64 : vector<128x1xf32>
    %c0_46 = arith.constant 0 : index
    %c0_47 = arith.constant 0 : index
    %66 = vector.load %arg18[%c0_46, %c0_47] : memref<128x1xf32, #tpu.memory_space<vmem>>, vector<128x1xf32>
    tpu.vector_store %arg18[%c0_46, %c0_47], %65 {strides = array<i32>} : memref<128x1xf32, #tpu.memory_space<vmem>>, vector<128x1xf32>,
    return
  }
  func.func @transform_0(%arg0: i32) -> (i32, i32) {
    %c0_i32 = arith.constant 0 : i32
    %c0_i32_0 = arith.constant 0 : i32
    return %arg0, %c0_i32 : i32, i32
  }
  func.func @transform_1(%arg0: i32) -> (i32, i32) {
    %c0_i32 = arith.constant 0 : i32
    %c0_i32_0 = arith.constant 0 : i32
    %c0_i32_1 = arith.constant 0 : i32
    return %c0_i32, %c0_i32_0 : i32, i32
  }
  func.func @transform_2(%arg0: i32) -> (i32, i32) {
    %c0_i32 = arith.constant 0 : i32
    %c0_i32_0 = arith.constant 0 : i32
    %c0_i32_1 = arith.constant 0 : i32
    return %c0_i32, %c0_i32_0 : i32, i32
  }
  func.func @transform_3(%arg0: i32) -> (i32, i32) {
    %c0_i32 = arith.constant 0 : i32
    %c0_i32_0 = arith.constant 0 : i32
    %c0_i32_1 = arith.constant 0 : i32
    return %c0_i32, %c0_i32_0 : i32, i32
  }
  func.func @transform_4(%arg0: i32) -> (i32, i32) {
    %c0_i32 = arith.constant 0 : i32
    %c0_i32_0 = arith.constant 0 : i32
    %c0_i32_1 = arith.constant 0 : i32
    return %c0_i32, %c0_i32_0 : i32, i32
  }
  func.func @transform_5(%arg0: i32) -> (i32, i32) {
    %c0_i32 = arith.constant 0 : i32
    %c0_i32_0 = arith.constant 0 : i32
    %c0_i32_1 = arith.constant 0 : i32
    return %c0_i32, %c0_i32_0 : i32, i32
  }
  func.func @transform_6(%arg0: i32) -> (i32, i32) {
    %c0_i32 = arith.constant 0 : i32
    %c0_i32_0 = arith.constant 0 : i32
    %c0_i32_1 = arith.constant 0 : i32
    return %c0_i32, %c0_i32_0 : i32, i32
  }
  func.func @transform_7(%arg0: i32) -> (i32, i32) {
    %c0_i32 = arith.constant 0 : i32
    %c0_i32_0 = arith.constant 0 : i32
    %c0_i32_1 = arith.constant 0 : i32
    return %c0_i32, %c0_i32_0 : i32, i32
  }
  func.func @transform_8(%arg0: i32) -> (i32, i32) {
    %c0_i32 = arith.constant 0 : i32
    %c0_i32_0 = arith.constant 0 : i32
    %c0_i32_1 = arith.constant 0 : i32
    return %c0_i32, %c0_i32_0 : i32, i32
  }
  func.func @transform_9(%arg0: i32) -> (i32, i32) {
    %c0_i32 = arith.constant 0 : i32
    %c0_i32_0 = arith.constant 0 : i32
    %c0_i32_1 = arith.constant 0 : i32
    return %c0_i32, %c0_i32_0 : i32, i32
  }
  func.func @transform_10(%arg0: i32) -> (i32, i32) {
    %c0_i32 = arith.constant 0 : i32
    %c0_i32_0 = arith.constant 0 : i32
    %c0_i32_1 = arith.constant 0 : i32
    return %c0_i32, %c0_i32_0 : i32, i32
  }
  func.func @transform_11(%arg0: i32) -> (i32, i32) {
    %c0_i32 = arith.constant 0 : i32
    %c0_i32_0 = arith.constant 0 : i32
    %c0_i32_1 = arith.constant 0 : i32
    return %c0_i32, %c0_i32_0 : i32, i32
  }
  func.func @transform_12(%arg0: i32) -> (i32, i32) {
    %c0_i32 = arith.constant 0 : i32
    %c0_i32_0 = arith.constant 0 : i32
    %c0_i32_1 = arith.constant 0 : i32
    return %c0_i32, %c0_i32_0 : i32, i32
  }
  func.func @transform_13(%arg0: i32) -> (i32, i32) {
    %c0_i32 = arith.constant 0 : i32
    %c0_i32_0 = arith.constant 0 : i32
    %c0_i32_1 = arith.constant 0 : i32
    return %c0_i32, %c0_i32_0 : i32, i32
  }
  func.func @transform_14(%arg0: i32) -> (i32, i32) {
    %c0_i32 = arith.constant 0 : i32
    %c0_i32_0 = arith.constant 0 : i32
    %c0_i32_1 = arith.constant 0 : i32
    return %c0_i32, %c0_i32_0 : i32, i32
  }
  func.func @transform_15(%arg0: i32) -> (i32, i32) {
    %c0_i32 = arith.constant 0 : i32
    %c0_i32_0 = arith.constant 0 : i32
    %c0_i32_1 = arith.constant 0 : i32
    return %c0_i32, %c0_i32_0 : i32, i32
  }
  func.func @transform_16(%arg0: i32) -> (i32, i32) {
    %c0_i32 = arith.constant 0 : i32
    %c0_i32_0 = arith.constant 0 : i32
    %c0_i32_1 = arith.constant 0 : i32
    return %c0_i32, %c0_i32_0 : i32, i32
  }
  func.func @transform_17(%arg0: i32) -> (i32, i32) {
    %c0_i32 = arith.constant 0 : i32
    %c0_i32_0 = arith.constant 0 : i32
    return %arg0, %c0_i32 : i32, i32
  }
}

module attributes {stable_mosaic.version = 11 : i64} {
  func.func @mfnn_kernel(%arg0: i32, %arg1: memref<128x1xf32, #tpu.memory_space<vmem>>, %arg2: memref<1x256xf32, #tpu.memory_space<vmem>>, %arg3: memref<1x256xf32, #tpu.memory_space<vmem>>, %arg4: memref<256x256xbf16, #tpu.memory_space<vmem>>, %arg5: memref<1x256xf32, #tpu.memory_space<vmem>>, %arg6: memref<256x256xbf16, #tpu.memory_space<vmem>>, %arg7: memref<1x256xf32, #tpu.memory_space<vmem>>, %arg8: memref<256x256xbf16, #tpu.memory_space<vmem>>, %arg9: memref<1x256xf32, #tpu.memory_space<vmem>>, %arg10: memref<256x256xbf16, #tpu.memory_space<vmem>>, %arg11: memref<1x256xf32, #tpu.memory_space<vmem>>, %arg12: memref<256x256xbf16, #tpu.memory_space<vmem>>, %arg13: memref<1x256xf32, #tpu.memory_space<vmem>>, %arg14: memref<256x256xbf16, #tpu.memory_space<vmem>>, %arg15: memref<1x256xf32, #tpu.memory_space<vmem>>, %arg16: memref<1x256xf32, #tpu.memory_space<vmem>>, %arg17: memref<1x1xf32, #tpu.memory_space<vmem>>, %arg18: memref<128x1xf32, #tpu.memory_space<vmem>>) attributes {dimension_semantics = [#tpu.dimension_semantics<parallel>], iteration_bounds = array<i64: 2>, scalar_prefetch = 0 : i64, scratch_operands = 0 : i64, tpu.core_type = #tpu.core_type<tc>, window_params = [{transform_indices = @transform_0, window_bounds = array<i64: 128, 1>}, {pipeline_mode = #tpu.pipeline_mode<synchronous>, transform_indices = @transform_1, window_bounds = array<i64: 1, 256>}, {pipeline_mode = #tpu.pipeline_mode<synchronous>, transform_indices = @transform_2, window_bounds = array<i64: 1, 256>}, {pipeline_mode = #tpu.pipeline_mode<synchronous>, transform_indices = @transform_3, window_bounds = array<i64: 256, 256>}, {pipeline_mode = #tpu.pipeline_mode<synchronous>, transform_indices = @transform_4, window_bounds = array<i64: 1, 256>}, {pipeline_mode = #tpu.pipeline_mode<synchronous>, transform_indices = @transform_5, window_bounds = array<i64: 256, 256>}, {pipeline_mode = #tpu.pipeline_mode<synchronous>, transform_indices = @transform_6, window_bounds = array<i64: 1, 256>}, {pipeline_mode = #tpu.pipeline_mode<synchronous>, transform_indices = @transform_7, window_bounds = array<i64: 256, 256>}, {pipeline_mode = #tpu.pipeline_mode<synchronous>, transform_indices = @transform_8, window_bounds = array<i64: 1, 256>}, {pipeline_mode = #tpu.pipeline_mode<synchronous>, transform_indices = @transform_9, window_bounds = array<i64: 256, 256>}, {pipeline_mode = #tpu.pipeline_mode<synchronous>, transform_indices = @transform_10, window_bounds = array<i64: 1, 256>}, {pipeline_mode = #tpu.pipeline_mode<synchronous>, transform_indices = @transform_11, window_bounds = array<i64: 256, 256>}, {pipeline_mode = #tpu.pipeline_mode<synchronous>, transform_indices = @transform_12, window_bounds = array<i64: 1, 256>}, {pipeline_mode = #tpu.pipeline_mode<synchronous>, transform_indices = @transform_13, window_bounds = array<i64: 256, 256>}, {pipeline_mode = #tpu.pipeline_mode<synchronous>, transform_indices = @transform_14, window_bounds = array<i64: 1, 256>}, {pipeline_mode = #tpu.pipeline_mode<synchronous>, transform_indices = @transform_15, window_bounds = array<i64: 1, 256>}, {pipeline_mode = #tpu.pipeline_mode<synchronous>, transform_indices = @transform_16, window_bounds = array<i64: 1, 1>}, {transform_indices = @transform_17, window_bounds = array<i64: 128, 1>}]} {
    %c0 = arith.constant 0 : index
    %c0_0 = arith.constant 0 : index
    %0 = vector.load %arg1[%c0, %c0_0] : memref<128x1xf32, #tpu.memory_space<vmem>>, vector<128x1xf32>
    %c0_1 = arith.constant 0 : index
    %c0_2 = arith.constant 0 : index
    %1 = vector.load %arg2[%c0_1, %c0_2] : memref<1x256xf32, #tpu.memory_space<vmem>>, vector<1x256xf32>
    %2 = vector.broadcast %0 : vector<128x1xf32> to vector<128x256xf32>
    %3 = vector.broadcast %1 : vector<1x256xf32> to vector<128x256xf32>
    %4 = arith.mulf %2, %3 : vector<128x256xf32>
    %c0_3 = arith.constant 0 : index
    %c0_4 = arith.constant 0 : index
    %5 = vector.load %arg3[%c0_3, %c0_4] : memref<1x256xf32, #tpu.memory_space<vmem>>, vector<1x256xf32>
    %6 = vector.broadcast %5 : vector<1x256xf32> to vector<128x256xf32>
    %7 = arith.addf %4, %6 : vector<128x256xf32>
    %cst = arith.constant 0.000000e+00 : f32
    %8 = vector.broadcast %cst : f32 to vector<128x256xf32>
    %9 = arith.maximumf %7, %8 : vector<128x256xf32>
    %10 = arith.truncf %9 : vector<128x256xf32> to vector<128x256xbf16>
    %c0_5 = arith.constant 0 : index
    %c0_6 = arith.constant 0 : index
    %11 = vector.load %arg4[%c0_5, %c0_6] : memref<256x256xbf16, #tpu.memory_space<vmem>>, vector<256x256xbf16>
    %cst_7 = arith.constant dense<0.000000e+00> : vector<128x256xf32>
    %12 = tpu.matmul %10, %11, %cst_7 {dimension_numbers = #tpu.dot_dimension_numbers<[1], [0], [0], [1], [0, 0, 1, 1], [], []>} : vector<128x256xbf16>, vector<256x256xbf16>, vector<128x256xf32> -> vector<128x256xf32>
    %c0_8 = arith.constant 0 : index
    %c0_9 = arith.constant 0 : index
    %13 = vector.load %arg5[%c0_8, %c0_9] : memref<1x256xf32, #tpu.memory_space<vmem>>, vector<1x256xf32>
    %14 = vector.broadcast %13 : vector<1x256xf32> to vector<128x256xf32>
    %15 = arith.addf %12, %14 : vector<128x256xf32>
    %cst_10 = arith.constant 0.000000e+00 : f32
    %16 = vector.broadcast %cst_10 : f32 to vector<128x256xf32>
    %17 = arith.maximumf %15, %16 : vector<128x256xf32>
    %18 = arith.truncf %17 : vector<128x256xf32> to vector<128x256xbf16>
    %c0_11 = arith.constant 0 : index
    %c0_12 = arith.constant 0 : index
    %19 = vector.load %arg6[%c0_11, %c0_12] : memref<256x256xbf16, #tpu.memory_space<vmem>>, vector<256x256xbf16>
    %cst_13 = arith.constant dense<0.000000e+00> : vector<128x256xf32>
    %20 = tpu.matmul %18, %19, %cst_13 {dimension_numbers = #tpu.dot_dimension_numbers<[1], [0], [0], [1], [0, 0, 1, 1], [], []>} : vector<128x256xbf16>, vector<256x256xbf16>, vector<128x256xf32> -> vector<128x256xf32>
    %c0_14 = arith.constant 0 : index
    %c0_15 = arith.constant 0 : index
    %21 = vector.load %arg7[%c0_14, %c0_15] : memref<1x256xf32, #tpu.memory_space<vmem>>, vector<1x256xf32>
    %22 = vector.broadcast %21 : vector<1x256xf32> to vector<128x256xf32>
    %23 = arith.addf %20, %22 : vector<128x256xf32>
    %cst_16 = arith.constant 0.000000e+00 : f32
    %24 = vector.broadcast %cst_16 : f32 to vector<128x256xf32>
    %25 = arith.maximumf %23, %24 : vector<128x256xf32>
    %26 = arith.truncf %25 : vector<128x256xf32> to vector<128x256xbf16>
    %c0_17 = arith.constant 0 : index
    %c0_18 = arith.constant 0 : index
    %27 = vector.load %arg8[%c0_17, %c0_18] : memref<256x256xbf16, #tpu.memory_space<vmem>>, vector<256x256xbf16>
    %cst_19 = arith.constant dense<0.000000e+00> : vector<128x256xf32>
    %28 = tpu.matmul %26, %27, %cst_19 {dimension_numbers = #tpu.dot_dimension_numbers<[1], [0], [0], [1], [0, 0, 1, 1], [], []>} : vector<128x256xbf16>, vector<256x256xbf16>, vector<128x256xf32> -> vector<128x256xf32>
    %c0_20 = arith.constant 0 : index
    %c0_21 = arith.constant 0 : index
    %29 = vector.load %arg9[%c0_20, %c0_21] : memref<1x256xf32, #tpu.memory_space<vmem>>, vector<1x256xf32>
    %30 = vector.broadcast %29 : vector<1x256xf32> to vector<128x256xf32>
    %31 = arith.addf %28, %30 : vector<128x256xf32>
    %cst_22 = arith.constant 0.000000e+00 : f32
    %32 = vector.broadcast %cst_22 : f32 to vector<128x256xf32>
    %33 = arith.maximumf %31, %32 : vector<128x256xf32>
    %34 = arith.truncf %33 : vector<128x256xf32> to vector<128x256xbf16>
    %c0_23 = arith.constant 0 : index
    %c0_24 = arith.constant 0 : index
    %35 = vector.load %arg10[%c0_23, %c0_24] : memref<256x256xbf16, #tpu.memory_space<vmem>>, vector<256x256xbf16>
    %cst_25 = arith.constant dense<0.000000e+00> : vector<128x256xf32>
    %36 = tpu.matmul %34, %35, %cst_25 {dimension_numbers = #tpu.dot_dimension_numbers<[1], [0], [0], [1], [0, 0, 1, 1], [], []>} : vector<128x256xbf16>, vector<256x256xbf16>, vector<128x256xf32> -> vector<128x256xf32>
    %c0_26 = arith.constant 0 : index
    %c0_27 = arith.constant 0 : index
    %37 = vector.load %arg11[%c0_26, %c0_27] : memref<1x256xf32, #tpu.memory_space<vmem>>, vector<1x256xf32>
    %38 = vector.broadcast %37 : vector<1x256xf32> to vector<128x256xf32>
    %39 = arith.addf %36, %38 : vector<128x256xf32>
    %cst_28 = arith.constant 0.000000e+00 : f32
    %40 = vector.broadcast %cst_28 : f32 to vector<128x256xf32>
    %41 = arith.maximumf %39, %40 : vector<128x256xf32>
    %42 = arith.truncf %41 : vector<128x256xf32> to vector<128x256xbf16>
    %c0_29 = arith.constant 0 : index
    %c0_30 = arith.constant 0 : index
    %43 = vector.load %arg12[%c0_29, %c0_30] : memref<256x256xbf16, #tpu.memory_space<vmem>>, vector<256x256xbf16>
    %cst_31 = arith.constant dense<0.000000e+00> : vector<128x256xf32>
    %44 = tpu.matmul %42, %43, %cst_31 {dimension_numbers = #tpu.dot_dimension_numbers<[1], [0], [0], [1], [0, 0, 1, 1], [], []>} : vector<128x256xbf16>, vector<256x256xbf16>, vector<128x256xf32> -> vector<128x256xf32>
    %c0_32 = arith.constant 0 : index
    %c0_33 = arith.constant 0 : index
    %45 = vector.load %arg13[%c0_32, %c0_33] : memref<1x256xf32, #tpu.memory_space<vmem>>, vector<1x256xf32>
    %46 = vector.broadcast %45 : vector<1x256xf32> to vector<128x256xf32>
    %47 = arith.addf %44, %46 : vector<128x256xf32>
    %cst_34 = arith.constant 0.000000e+00 : f32
    %48 = vector.broadcast %cst_34 : f32 to vector<128x256xf32>
    %49 = arith.maximumf %47, %48 : vector<128x256xf32>
    %50 = arith.truncf %49 : vector<128x256xf32> to vector<128x256xbf16>
    %c0_35 = arith.constant 0 : index
    %c0_36 = arith.constant 0 : index
    %51 = vector.load %arg14[%c0_35, %c0_36] : memref<256x256xbf16, #tpu.memory_space<vmem>>, vector<256x256xbf16>
    %cst_37 = arith.constant dense<0.000000e+00> : vector<128x256xf32>
    %52 = tpu.matmul %50, %51, %cst_37 {dimension_numbers = #tpu.dot_dimension_numbers<[1], [0], [0], [1], [0, 0, 1, 1], [], []>} : vector<128x256xbf16>, vector<256x256xbf16>, vector<128x256xf32> -> vector<128x256xf32>
    %c0_38 = arith.constant 0 : index
    %c0_39 = arith.constant 0 : index
    %53 = vector.load %arg15[%c0_38, %c0_39] : memref<1x256xf32, #tpu.memory_space<vmem>>, vector<1x256xf32>
    %54 = vector.broadcast %53 : vector<1x256xf32> to vector<128x256xf32>
    %55 = arith.addf %52, %54 : vector<128x256xf32>
    %cst_40 = arith.constant 0.000000e+00 : f32
    %56 = vector.broadcast %cst_40 : f32 to vector<128x256xf32>
    %57 = arith.maximumf %55, %56 : vector<128x256xf32>
    %c0_41 = arith.constant 0 : index
    %c0_42 = arith.constant 0 : index
    %58 = vector.load %arg16[%c0_41, %c0_42] : memref<1x256xf32, #tpu.memory_space<vmem>>, vector<1x256xf32>
    %59 = vector.broadcast %58 : vector<1x256xf32> to vector<128x256xf32>
    %60 = arith.mulf %57, %59 : vector<128x256xf32>
    %cst_43 = arith.constant dense<0.000000e+00> : vector<128xf32>
    %61 = vector.multi_reduction <add>, %60, %cst_43 [1] : vector<128x256xf32> to vector<128xf32>
    %62 = vector.shape_cast %61 : vector<128xf32> to vector<128x1xf32>
    %c0_44 = arith.constant 0 : index
    %c0_45 = arith.constant 0 : index
    %63 = vector.load %arg17[%c0_44, %c0_45] : memref<1x1xf32, #tpu.memory_space<vmem>>, vector<1x1xf32>
    %64 = vector.broadcast %63 : vector<1x1xf32> to vector<128x1xf32>
    %65 = arith.addf %62, %64 : vector<128x1xf32>
    %c0_46 = arith.constant 0 : index
    %c0_47 = arith.constant 0 : index
    %66 = vector.load %arg18[%c0_46, %c0_47] : memref<128x1xf32, #tpu.memory_space<vmem>>, vector<128x1xf32>
    tpu.vector_store %arg18[%c0_46, %c0_47], %65 {strides = array<i32>} : memref<128x1xf32, #tpu.memory_space<vmem>>, vector<128x1xf32>,
    return
  }
  func.func @transform_0(%arg0: i32) -> (i32, i32) {
    %c0_i32 = arith.constant 0 : i32
    %c0_i32_0 = arith.constant 0 : i32
    return %arg0, %c0_i32 : i32, i32
  }
  func.func @transform_1(%arg0: i32) -> (i32, i32) {
    %c0_i32 = arith.constant 0 : i32
    %c0_i32_0 = arith.constant 0 : i32
    %c0_i32_1 = arith.constant 0 : i32
    return %c0_i32, %c0_i32_0 : i32, i32
  }
  func.func @transform_2(%arg0: i32) -> (i32, i32) {
    %c0_i32 = arith.constant 0 : i32
    %c0_i32_0 = arith.constant 0 : i32
    %c0_i32_1 = arith.constant 0 : i32
    return %c0_i32, %c0_i32_0 : i32, i32
  }
  func.func @transform_3(%arg0: i32) -> (i32, i32) {
    %c0_i32 = arith.constant 0 : i32
    %c0_i32_0 = arith.constant 0 : i32
    %c0_i32_1 = arith.constant 0 : i32
    return %c0_i32, %c0_i32_0 : i32, i32
  }
  func.func @transform_4(%arg0: i32) -> (i32, i32) {
    %c0_i32 = arith.constant 0 : i32
    %c0_i32_0 = arith.constant 0 : i32
    %c0_i32_1 = arith.constant 0 : i32
    return %c0_i32, %c0_i32_0 : i32, i32
  }
  func.func @transform_5(%arg0: i32) -> (i32, i32) {
    %c0_i32 = arith.constant 0 : i32
    %c0_i32_0 = arith.constant 0 : i32
    %c0_i32_1 = arith.constant 0 : i32
    return %c0_i32, %c0_i32_0 : i32, i32
  }
  func.func @transform_6(%arg0: i32) -> (i32, i32) {
    %c0_i32 = arith.constant 0 : i32
    %c0_i32_0 = arith.constant 0 : i32
    %c0_i32_1 = arith.constant 0 : i32
    return %c0_i32, %c0_i32_0 : i32, i32
  }
  func.func @transform_7(%arg0: i32) -> (i32, i32) {
    %c0_i32 = arith.constant 0 : i32
    %c0_i32_0 = arith.constant 0 : i32
    %c0_i32_1 = arith.constant 0 : i32
    return %c0_i32, %c0_i32_0 : i32, i32
  }
  func.func @transform_8(%arg0: i32) -> (i32, i32) {
    %c0_i32 = arith.constant 0 : i32
    %c0_i32_0 = arith.constant 0 : i32
    %c0_i32_1 = arith.constant 0 : i32
    return %c0_i32, %c0_i32_0 : i32, i32
  }
  func.func @transform_9(%arg0: i32) -> (i32, i32) {
    %c0_i32 = arith.constant 0 : i32
    %c0_i32_0 = arith.constant 0 : i32
    %c0_i32_1 = arith.constant 0 : i32
    return %c0_i32, %c0_i32_0 : i32, i32
  }
  func.func @transform_10(%arg0: i32) -> (i32, i32) {
    %c0_i32 = arith.constant 0 : i32
    %c0_i32_0 = arith.constant 0 : i32
    %c0_i32_1 = arith.constant 0 : i32
    return %c0_i32, %c0_i32_0 : i32, i32
  }
  func.func @transform_11(%arg0: i32) -> (i32, i32) {
    %c0_i32 = arith.constant 0 : i32
    %c0_i32_0 = arith.constant 0 : i32
    %c0_i32_1 = arith.constant 0 : i32
    return %c0_i32, %c0_i32_0 : i32, i32
  }
  func.func @transform_12(%arg0: i32) -> (i32, i32) {
    %c0_i32 = arith.constant 0 : i32
    %c0_i32_0 = arith.constant 0 : i32
    %c0_i32_1 = arith.constant 0 : i32
    return %c0_i32, %c0_i32_0 : i32, i32
  }
  func.func @transform_13(%arg0: i32) -> (i32, i32) {
    %c0_i32 = arith.constant 0 : i32
    %c0_i32_0 = arith.constant 0 : i32
    %c0_i32_1 = arith.constant 0 : i32
    return %c0_i32, %c0_i32_0 : i32, i32
  }
  func.func @transform_14(%arg0: i32) -> (i32, i32) {
    %c0_i32 = arith.constant 0 : i32
    %c0_i32_0 = arith.constant 0 : i32
    %c0_i32_1 = arith.constant 0 : i32
    return %c0_i32, %c0_i32_0 : i32, i32
  }
  func.func @transform_15(%arg0: i32) -> (i32, i32) {
    %c0_i32 = arith.constant 0 : i32
    %c0_i32_0 = arith.constant 0 : i32
    %c0_i32_1 = arith.constant 0 : i32
    return %c0_i32, %c0_i32_0 : i32, i32
  }
  func.func @transform_16(%arg0: i32) -> (i32, i32) {
    %c0_i32 = arith.constant 0 : i32
    %c0_i32_0 = arith.constant 0 : i32
    %c0_i32_1 = arith.constant 0 : i32
    return %c0_i32, %c0_i32_0 : i32, i32
  }
  func.func @transform_17(%arg0: i32) -> (i32, i32) {
    %c0_i32 = arith.constant 0 : i32
    %c0_i32_0 = arith.constant 0 : i32
    return %arg0, %c0_i32 : i32, i32
  }
}

</mosaic_0001>

<llo_original>
// kernel: tpu_custom_call.1
$region0: #{tpu_custom_call.1}
  #allocation0 [shape = 'u32[]', space=smem, size = 0x4, offset = 0x4, fixed_abs, tag = 'smem constant byte address 0x4 - core index']
  #allocation1 [shape = 'u32[144,128]{1,0:T(1,128)}', space=vmem, size = 0x12000, scoped, tag = 'internal scratch']
  #allocation2 [shape = 'f32[1,1]{1,0:T(1,128)S(1)}', space=vmem, size = 0x200, scoped, tag = 'scoped memory for tpu_custom_call.1']
  %s0 = inlined_call_operand.vmem [shape: f32[256,1], index: 0, kind: input, shape index: {}]
  %s1 = inlined_call_operand.vmem [shape: f32[1,256], index: 1, kind: input, shape index: {}]
  %s2 = inlined_call_operand.vmem [shape: f32[1,256], index: 2, kind: input, shape index: {}]
  %s3 = inlined_call_operand.vmem [shape: bf16[256,256], index: 3, kind: input, shape index: {}]
  %s4 = inlined_call_operand.vmem [shape: f32[1,256], index: 4, kind: input, shape index: {}]
  %s5 = inlined_call_operand.hbm [shape: bf16[256,256], index: 5, kind: input, shape index: {}]
  %s6 = inlined_call_operand.vmem [shape: f32[1,256], index: 6, kind: input, shape index: {}]
  %s7 = inlined_call_operand.hbm [shape: bf16[256,256], index: 7, kind: input, shape index: {}]
  %s8 = inlined_call_operand.vmem [shape: f32[1,256], index: 8, kind: input, shape index: {}]
  %s9 = inlined_call_operand.hbm [shape: bf16[256,256], index: 9, kind: input, shape index: {}]
  %s10 = inlined_call_operand.vmem [shape: f32[1,256], index: 10, kind: input, shape index: {}]
  %s11 = inlined_call_operand.hbm [shape: bf16[256,256], index: 11, kind: input, shape index: {}]
  %s12 = inlined_call_operand.vmem [shape: f32[1,256], index: 12, kind: input, shape index: {}]
  %s13 = inlined_call_operand.hbm [shape: bf16[256,256], index: 13, kind: input, shape index: {}]
  %s14 = inlined_call_operand.vmem [shape: f32[1,256], index: 14, kind: input, shape index: {}]
  %s15 = inlined_call_operand.vmem [shape: f32[1,256], index: 15, kind: input, shape index: {}]
  %s16 = inlined_call_operand.<no memory space> [shape: f32[1,1], index: 16, kind: input, shape index: {}]
  %s17 = inlined_call_operand.vmem [shape: f32[256,1], index: 17, kind: output, shape index: {}]
  %s18 = sld [smem:[#allocation0]]
  $region121: #{tpu_custom_call.1} parent=0
    _
  %s20 = ssub.s32 1, %s18
  %s21 = scalar_select 0, %s20, %s18
  %v22 = vstv %s16
  %23 = vst [vmem:[#allocation2] sm:$0x1] %v22
  $region1: #{tpu_custom_call.1} parent=0
    #allocation3 [shape = 'u8[131072]{0}', space=vmem, size = 0x20000, scoped, tag = 'input window, operand 5, single buffered']
    #allocation4 [shape = 's32[2]{0}', space=sflag, size = 0x8, scoped, tag = 'scoped memory for tpu_custom_call.1']
    #allocation5 [shape = 'u8[131072]{0}', space=vmem, size = 0x20000, scoped, tag = 'input window, operand 7, single buffered']
    #allocation6 [shape = 's32[1]{0}', space=sflag, size = 0x4, scoped, tag = 'scoped memory for tpu_custom_call.1']
    #allocation7 [shape = 'u8[131072]{0}', space=vmem, size = 0x20000, scoped, tag = 'input window, operand 9, single buffered']
    #allocation8 [shape = 'u8[131072]{0}', space=vmem, size = 0x20000, scoped, tag = 'input window, operand 11, single buffered']
    #allocation9 [shape = 's32[1]{0}', space=sflag, size = 0x4, scoped, tag = 'scoped memory for tpu_custom_call.1']
    #allocation10 [shape = 'u8[131072]{0}', space=vmem, size = 0x20000, scoped, tag = 'input window, operand 13, single buffered']
    %24 = vsyncpa [#allocation4], 0
    %25 = vsyncpa [#allocation6], 0
    %26 = vsyncpa [#allocation9], 0
    loop: start=0, step=1, limit=4
    $region2: #{tpu_custom_call.1} parent=1 // loop_pre_header
      _
    $region3: #{tpu_custom_call.1} parent=1 // loop_header
      %s28 = sphi 0, %s32
      %p29 = scmp.ge.s32.totalorder %s28, 4
      %s38 = sphi 0, %s40
      %s41 = sphi 0, %s38
      %s42 = sphi 0, %s41
      %s58 = sphi 0, %s42
      %s62 = sphi 0, %s62
      %s64 = sphi 0, %s62
      %s65 = sphi 0, %s64
      %s79 = sphi 0, %s65
      %s83 = sphi 0, %s83
      %s85 = sphi 0, %s83
      %s86 = sphi 0, %s85
      %s100 = sphi 0, %s86
      %s104 = sphi 0, %s104
      %s106 = sphi 0, %s104
      %s107 = sphi 0, %s106
      %s121 = sphi 0, %s107
      %s125 = sphi 0, %s125
      %s127 = sphi 0, %s125
      %s128 = sphi 0, %s127
      %s142 = sphi 0, %s128
      %s146 = sphi 0, %s146
      %s148 = sphi 0, %s146
      %s149 = sphi 0, %s148
      %s163 = sphi 0, %s149
      %s167 = sphi 0, %s167
      %s169 = sphi 0, %s167
      %s170 = sphi 0, %s169
      %s184 = sphi 0, %s170
      %s188 = sphi 0, %s188
      %s190 = sphi 0, %s188
      %s191 = sphi 0, %s190
      %s205 = sphi 0, %s191
      %s209 = sphi 0, %s209
      %s211 = sphi 0, %s209
      %s212 = sphi 0, %s211
      %s226 = sphi 0, %s212
      %s230 = sphi 0, %s230
      %s232 = sphi 0, %s230
      %s233 = sphi 0, %s232
      %s247 = sphi 0, %s233
      %s251 = sphi 0, %s251
      %s253 = sphi 0, %s251
      %s254 = sphi 0, %s253
      %s268 = sphi 0, %s254
      %s272 = sphi 0, %s272
      %s274 = sphi 0, %s272
      %s275 = sphi 0, %s274
      %s289 = sphi 0, %s275
      %s293 = sphi 0, %s293
      %s295 = sphi 0, %s293
      %s296 = sphi 0, %s295
      %s310 = sphi 0, %s296
      %s314 = sphi 0, %s314
      %s316 = sphi 0, %s314
      %s317 = sphi 0, %s316
      %s331 = sphi 0, %s317
      %s335 = sphi 0, %s335
      %s337 = sphi 0, %s335
      %s338 = sphi 0, %s337
      %s352 = sphi 0, %s338
      %s356 = sphi 0, %s356
      %s358 = sphi 0, %s356
      %s359 = sphi 0, %s358
      %s373 = sphi 0, %s359
      %s377 = sphi 0, %s377
      %s379 = sphi 0, %s377
      %s380 = sphi 0, %s379
      %s394 = sphi 0, %s380
      %s400 = sphi 0, %s402
      %s403 = sphi 0, %s400
      %s404 = sphi 0, %s403
      %s420 = sphi 0, %s404
    $region4: #{tpu_custom_call.1} parent=1 // loop_header_branch
      %31 = sbr.rel (%p29) target = $region8
    $region5: #{tpu_custom_call.1} parent=1 // loop_body
      %s33 = ssub.s32 %s28, 1
      %s34 = ssub.s32 %s28, 2
      %s35 = sadd.s32 %s28, 1
      %s36 = ssub.s32 %s28, %s35
      %p37 = scmp.eq.s32.totalorder %s36, 0
      %s39 = sadd.s32 %s38, 1
      %s40 = scalar_select %p37, %s38, %s39
      %p43 = pneg %p37
      %p44 = scmp.eq.s32.totalorder %s28, 1
      %p45 = por %p43, %p44
      %p46 = scmp.ne.s32.totalorder %s38, %s41
      %p47 = scmp.eq.s32.totalorder %s28, 0
      %p48 = por %p46, %p47
      %p49 = scmp.ne.s32.totalorder %s38, %s41
      %p50 = scmp.eq.s32.totalorder %s33, 1
      %p51 = por %p49, %p50
      %p52 = scmp.ne.s32.totalorder %s41, %s42
      %p53 = scmp.eq.s32.totalorder %s33, 0
      %p54 = por %p52, %p53
      %p55 = scmp.ne.s32.totalorder %s41, %s42
      %p56 = scmp.eq.s32.totalorder %s34, 1
      %p57 = por %p55, %p56
      %p59 = scmp.ne.s32.totalorder %s42, %s58
      %p60 = scmp.eq.s32.totalorder %s34, 0
      %p61 = por %p59, %p60
      %s63 = sadd.s32 %s62, 1
      %p66 = scmp.eq.s32.totalorder %s28, 1
      %p67 = scmp.ne.s32.totalorder %s62, %s64
      %p68 = scmp.eq.s32.totalorder %s28, 0
      %p69 = por %p67, %p68
      %p70 = scmp.ne.s32.totalorder %s62, %s64
      %p71 = scmp.eq.s32.totalorder %s33, 1
      %p72 = por %p70, %p71
      %p73 = scmp.ne.s32.totalorder %s64, %s65
      %p74 = scmp.eq.s32.totalorder %s33, 0
      %p75 = por %p73, %p74
      %p76 = scmp.ne.s32.totalorder %s64, %s65
      %p77 = scmp.eq.s32.totalorder %s34, 1
      %p78 = por %p76, %p77
      %p80 = scmp.ne.s32.totalorder %s65, %s79
      %p81 = scmp.eq.s32.totalorder %s34, 0
      %p82 = por %p80, %p81
      %s84 = sadd.s32 %s83, 1
      %p87 = scmp.eq.s32.totalorder %s28, 1
      %p88 = scmp.ne.s32.totalorder %s83, %s85
      %p89 = scmp.eq.s32.totalorder %s28, 0
      %p90 = por %p88, %p89
      %p91 = scmp.ne.s32.totalorder %s83, %s85
      %p92 = scmp.eq.s32.totalorder %s33, 1
      %p93 = por %p91, %p92
      %p94 = scmp.ne.s32.totalorder %s85, %s86
      %p95 = scmp.eq.s32.totalorder %s33, 0
      %p96 = por %p94, %p95
      %p97 = scmp.ne.s32.totalorder %s85, %s86
      %p98 = scmp.eq.s32.totalorder %s34, 1
      %p99 = por %p97, %p98
      %p101 = scmp.ne.s32.totalorder %s86, %s100
      %p102 = scmp.eq.s32.totalorder %s34, 0
      %p103 = por %p101, %p102
      %s105 = sadd.s32 %s104, 1
      %p108 = scmp.eq.s32.totalorder %s28, 1
      %p109 = scmp.ne.s32.totalorder %s104, %s106
      %p110 = scmp.eq.s32.totalorder %s28, 0
      %p111 = por %p109, %p110
      %p112 = scmp.ne.s32.totalorder %s104, %s106
      %p113 = scmp.eq.s32.totalorder %s33, 1
      %p114 = por %p112, %p113
      %p115 = scmp.ne.s32.totalorder %s106, %s107
      %p116 = scmp.eq.s32.totalorder %s33, 0
      %p117 = por %p115, %p116
      %p118 = scmp.ne.s32.totalorder %s106, %s107
      %p119 = scmp.eq.s32.totalorder %s34, 1
      %p120 = por %p118, %p119
      %p122 = scmp.ne.s32.totalorder %s107, %s121
      %p123 = scmp.eq.s32.totalorder %s34, 0
      %p124 = por %p122, %p123
      %s126 = sadd.s32 %s125, 1
      %p129 = scmp.eq.s32.totalorder %s28, 1
      %p130 = scmp.ne.s32.totalorder %s125, %s127
      %p131 = scmp.eq.s32.totalorder %s28, 0
      %p132 = por %p130, %p131
      %p133 = scmp.ne.s32.totalorder %s125, %s127
      %p134 = scmp.eq.s32.totalorder %s33, 1
      %p135 = por %p133, %p134
      %p136 = scmp.ne.s32.totalorder %s127, %s128
      %p137 = scmp.eq.s32.totalorder %s33, 0
      %p138 = por %p136, %p137
      %p139 = scmp.ne.s32.totalorder %s127, %s128
      %p140 = scmp.eq.s32.totalorder %s34, 1
      %p141 = por %p139, %p140
      %p143 = scmp.ne.s32.totalorder %s128, %s142
      %p144 = scmp.eq.s32.totalorder %s34, 0
      %p145 = por %p143, %p144
      %s147 = sadd.s32 %s146, 1
      %p150 = scmp.eq.s32.totalorder %s28, 1
      %p151 = scmp.ne.s32.totalorder %s146, %s148
      %p152 = scmp.eq.s32.totalorder %s28, 0
      %p153 = por %p151, %p152
      %p154 = scmp.ne.s32.totalorder %s146, %s148
      %p155 = scmp.eq.s32.totalorder %s33, 1
      %p156 = por %p154, %p155
      %p157 = scmp.ne.s32.totalorder %s148, %s149
      %p158 = scmp.eq.s32.totalorder %s33, 0
      %p159 = por %p157, %p158
      %p160 = scmp.ne.s32.totalorder %s148, %s149
      %p161 = scmp.eq.s32.totalorder %s34, 1
      %p162 = por %p160, %p161
      %p164 = scmp.ne.s32.totalorder %s149, %s163
      %p165 = scmp.eq.s32.totalorder %s34, 0
      %p166 = por %p164, %p165
      %s168 = sadd.s32 %s167, 1
      %p171 = scmp.eq.s32.totalorder %s28, 1
      %p172 = scmp.ne.s32.totalorder %s167, %s169
      %p173 = scmp.eq.s32.totalorder %s28, 0
      %p174 = por %p172, %p173
      %p175 = scmp.ne.s32.totalorder %s167, %s169
      %p176 = scmp.eq.s32.totalorder %s33, 1
      %p177 = por %p175, %p176
      %p178 = scmp.ne.s32.totalorder %s169, %s170
      %p179 = scmp.eq.s32.totalorder %s33, 0
      %p180 = por %p178, %p179
      %p181 = scmp.ne.s32.totalorder %s169, %s170
      %p182 = scmp.eq.s32.totalorder %s34, 1
      %p183 = por %p181, %p182
      %p185 = scmp.ne.s32.totalorder %s170, %s184
      %p186 = scmp.eq.s32.totalorder %s34, 0
      %p187 = por %p185, %p186
      %s189 = sadd.s32 %s188, 1
      %p192 = scmp.eq.s32.totalorder %s28, 1
      %p193 = scmp.ne.s32.totalorder %s188, %s190
      %p194 = scmp.eq.s32.totalorder %s28, 0
      %p195 = por %p193, %p194
      %p196 = scmp.ne.s32.totalorder %s188, %s190
      %p197 = scmp.eq.s32.totalorder %s33, 1
      %p198 = por %p196, %p197
      %p199 = scmp.ne.s32.totalorder %s190, %s191
      %p200 = scmp.eq.s32.totalorder %s33, 0
      %p201 = por %p199, %p200
      %p202 = scmp.ne.s32.totalorder %s190, %s191
      %p203 = scmp.eq.s32.totalorder %s34, 1
      %p204 = por %p202, %p203
      %p206 = scmp.ne.s32.totalorder %s191, %s205
      %p207 = scmp.eq.s32.totalorder %s34, 0
      %p208 = por %p206, %p207
      %s210 = sadd.s32 %s209, 1
      %p213 = scmp.eq.s32.totalorder %s28, 1
      %p214 = scmp.ne.s32.totalorder %s209, %s211
      %p215 = scmp.eq.s32.totalorder %s28, 0
      %p216 = por %p214, %p215
      %p217 = scmp.ne.s32.totalorder %s209, %s211
      %p218 = scmp.eq.s32.totalorder %s33, 1
      %p219 = por %p217, %p218
      %p220 = scmp.ne.s32.totalorder %s211, %s212
      %p221 = scmp.eq.s32.totalorder %s33, 0
      %p222 = por %p220, %p221
      %p223 = scmp.ne.s32.totalorder %s211, %s212
      %p224 = scmp.eq.s32.totalorder %s34, 1
      %p225 = por %p223, %p224
      %p227 = scmp.ne.s32.totalorder %s212, %s226
      %p228 = scmp.eq.s32.totalorder %s34, 0
      %p229 = por %p227, %p228
      %s231 = sadd.s32 %s230, 1
      %p234 = scmp.eq.s32.totalorder %s28, 1
      %p235 = scmp.ne.s32.totalorder %s230, %s232
      %p236 = scmp.eq.s32.totalorder %s28, 0
      %p237 = por %p235, %p236
      %p238 = scmp.ne.s32.totalorder %s230, %s232
      %p239 = scmp.eq.s32.totalorder %s33, 1
      %p240 = por %p238, %p239
      %p241 = scmp.ne.s32.totalorder %s232, %s233
      %p242 = scmp.eq.s32.totalorder %s33, 0
      %p243 = por %p241, %p242
      %p244 = scmp.ne.s32.totalorder %s232, %s233
      %p245 = scmp.eq.s32.totalorder %s34, 1
      %p246 = por %p244, %p245
      %p248 = scmp.ne.s32.totalorder %s233, %s247
      %p249 = scmp.eq.s32.totalorder %s34, 0
      %p250 = por %p248, %p249
      %s252 = sadd.s32 %s251, 1
      %p255 = scmp.eq.s32.totalorder %s28, 1
      %p256 = scmp.ne.s32.totalorder %s251, %s253
      %p257 = scmp.eq.s32.totalorder %s28, 0
      %p258 = por %p256, %p257
      %p259 = scmp.ne.s32.totalorder %s251, %s253
      %p260 = scmp.eq.s32.totalorder %s33, 1
      %p261 = por %p259, %p260
      %p262 = scmp.ne.s32.totalorder %s253, %s254
      %p263 = scmp.eq.s32.totalorder %s33, 0
      %p264 = por %p262, %p263
      %p265 = scmp.ne.s32.totalorder %s253, %s254
      %p266 = scmp.eq.s32.totalorder %s34, 1
      %p267 = por %p265, %p266
      %p269 = scmp.ne.s32.totalorder %s254, %s268
      %p270 = scmp.eq.s32.totalorder %s34, 0
      %p271 = por %p269, %p270
      %s273 = sadd.s32 %s272, 1
      %p276 = scmp.eq.s32.totalorder %s28, 1
      %p277 = scmp.ne.s32.totalorder %s272, %s274
      %p278 = scmp.eq.s32.totalorder %s28, 0
      %p279 = por %p277, %p278
      %p280 = scmp.ne.s32.totalorder %s272, %s274
      %p281 = scmp.eq.s32.totalorder %s33, 1
      %p282 = por %p280, %p281
      %p283 = scmp.ne.s32.totalorder %s274, %s275
      %p284 = scmp.eq.s32.totalorder %s33, 0
      %p285 = por %p283, %p284
      %p286 = scmp.ne.s32.totalorder %s274, %s275
      %p287 = scmp.eq.s32.totalorder %s34, 1
      %p288 = por %p286, %p287
      %p290 = scmp.ne.s32.totalorder %s275, %s289
      %p291 = scmp.eq.s32.totalorder %s34, 0
      %p292 = por %p290, %p291
      %s294 = sadd.s32 %s293, 1
      %p297 = scmp.eq.s32.totalorder %s28, 1
      %p298 = scmp.ne.s32.totalorder %s293, %s295
      %p299 = scmp.eq.s32.totalorder %s28, 0
      %p300 = por %p298, %p299
      %p301 = scmp.ne.s32.totalorder %s293, %s295
      %p302 = scmp.eq.s32.totalorder %s33, 1
      %p303 = por %p301, %p302
      %p304 = scmp.ne.s32.totalorder %s295, %s296
      %p305 = scmp.eq.s32.totalorder %s33, 0
      %p306 = por %p304, %p305
      %p307 = scmp.ne.s32.totalorder %s295, %s296
      %p308 = scmp.eq.s32.totalorder %s34, 1
      %p309 = por %p307, %p308
      %p311 = scmp.ne.s32.totalorder %s296, %s310
      %p312 = scmp.eq.s32.totalorder %s34, 0
      %p313 = por %p311, %p312
      %s315 = sadd.s32 %s314, 1
      %p318 = scmp.eq.s32.totalorder %s28, 1
      %p319 = scmp.ne.s32.totalorder %s314, %s316
      %p320 = scmp.eq.s32.totalorder %s28, 0
      %p321 = por %p319, %p320
      %p322 = scmp.ne.s32.totalorder %s314, %s316
      %p323 = scmp.eq.s32.totalorder %s33, 1
      %p324 = por %p322, %p323
      %p325 = scmp.ne.s32.totalorder %s316, %s317
      %p326 = scmp.eq.s32.totalorder %s33, 0
      %p327 = por %p325, %p326
      %p328 = scmp.ne.s32.totalorder %s316, %s317
      %p329 = scmp.eq.s32.totalorder %s34, 1
      %p330 = por %p328, %p329
      %p332 = scmp.ne.s32.totalorder %s317, %s331
      %p333 = scmp.eq.s32.totalorder %s34, 0
      %p334 = por %p332, %p333
      %s336 = sadd.s32 %s335, 1
      %p339 = scmp.eq.s32.totalorder %s28, 1
      %p340 = scmp.ne.s32.totalorder %s335, %s337
      %p341 = scmp.eq.s32.totalorder %s28, 0
      %p342 = por %p340, %p341
      %p343 = scmp.ne.s32.totalorder %s335, %s337
      %p344 = scmp.eq.s32.totalorder %s33, 1
      %p345 = por %p343, %p344
      %p346 = scmp.ne.s32.totalorder %s337, %s338
      %p347 = scmp.eq.s32.totalorder %s33, 0
      %p348 = por %p346, %p347
      %p349 = scmp.ne.s32.totalorder %s337, %s338
      %p350 = scmp.eq.s32.totalorder %s34, 1
      %p351 = por %p349, %p350
      %p353 = scmp.ne.s32.totalorder %s338, %s352
      %p354 = scmp.eq.s32.totalorder %s34, 0
      %p355 = por %p353, %p354
      %s357 = sadd.s32 %s356, 1
      %p360 = scmp.eq.s32.totalorder %s28, 1
      %p361 = scmp.ne.s32.totalorder %s356, %s358
      %p362 = scmp.eq.s32.totalorder %s28, 0
      %p363 = por %p361, %p362
      %p364 = scmp.ne.s32.totalorder %s356, %s358
      %p365 = scmp.eq.s32.totalorder %s33, 1
      %p366 = por %p364, %p365
      %p367 = scmp.ne.s32.totalorder %s358, %s359
      %p368 = scmp.eq.s32.totalorder %s33, 0
      %p369 = por %p367, %p368
      %p370 = scmp.ne.s32.totalorder %s358, %s359
      %p371 = scmp.eq.s32.totalorder %s34, 1
      %p372 = por %p370, %p371
      %p374 = scmp.ne.s32.totalorder %s359, %s373
      %p375 = scmp.eq.s32.totalorder %s34, 0
      %p376 = por %p374, %p375
      %s378 = sadd.s32 %s377, 1
      %p381 = scmp.eq.s32.totalorder %s28, 1
      %p382 = scmp.ne.s32.totalorder %s377, %s379
      %p383 = scmp.eq.s32.totalorder %s28, 0
      %p384 = por %p382, %p383
      %p385 = scmp.ne.s32.totalorder %s377, %s379
      %p386 = scmp.eq.s32.totalorder %s33, 1
      %p387 = por %p385, %p386
      %p388 = scmp.ne.s32.totalorder %s379, %s380
      %p389 = scmp.eq.s32.totalorder %s33, 0
      %p390 = por %p388, %p389
      %p391 = scmp.ne.s32.totalorder %s379, %s380
      %p392 = scmp.eq.s32.totalorder %s34, 1
      %p393 = por %p391, %p392
      %p395 = scmp.ne.s32.totalorder %s380, %s394
      %p396 = scmp.eq.s32.totalorder %s34, 0
      %p397 = por %p395, %p396
      %s398 = ssub.s32 %s28, %s35
      %p399 = scmp.eq.s32.totalorder %s398, 0
      %s401 = sadd.s32 %s400, 1
      %s402 = scalar_select %p399, %s400, %s401
      %p405 = pneg %p399
      %p406 = scmp.eq.s32.totalorder %s28, 1
      %p407 = por %p405, %p406
      %p408 = scmp.ne.s32.totalorder %s400, %s403
      %p409 = scmp.eq.s32.totalorder %s28, 0
      %p410 = por %p408, %p409
      %p411 = scmp.ne.s32.totalorder %s400, %s403
      %p412 = scmp.eq.s32.totalorder %s33, 1
      %p413 = por %p411, %p412
      %p414 = scmp.ne.s32.totalorder %s403, %s404
      %p415 = scmp.eq.s32.totalorder %s33, 0
      %p416 = por %p414, %p415
      %p417 = scmp.ne.s32.totalorder %s403, %s404
      %p418 = scmp.eq.s32.totalorder %s34, 1
      %p419 = por %p417, %p418
      %p421 = scmp.ne.s32.totalorder %s404, %s420
      %p422 = scmp.eq.s32.totalorder %s34, 0
      %p423 = por %p421, %p422
      %p424 = scmp.le.s32.totalorder 1, %s28
      %p425 = scmp.lt.s32.totalorder %s28, 3
      %p426 = pnand %p424, %p425
      %p427 = pneg %p426
      // Predicated region
      $region9: #{tpu_custom_call.1} parent=5 // pred_check
        _
      $region10: #{tpu_custom_call.1} parent=5 // pred_check_branch
        %429 = sbr.rel (%p426) target = $region12
      $region11: #{tpu_custom_call.1} parent=5 // pred_region
        %s430 = ssub.s32 %s28, 1
        // Predicated region
        $region13: #{tpu_custom_call.1} parent=11 // pred_check
          %p431 = pneg %p75
        $region14: #{tpu_custom_call.1} parent=11 // pred_check_branch
          %433 = sbr.rel (%p431) target = $region16
        $region15: #{tpu_custom_call.1} parent=11 // pred_region
          _
        $region16: #{tpu_custom_call.1} parent=11 // pred_fallthru
          _
        // Predicated region
        $region17: #{tpu_custom_call.1} parent=11 // pred_check
          %p434 = pneg %p96
        $region18: #{tpu_custom_call.1} parent=11 // pred_check_branch
          %436 = sbr.rel (%p434) target = $region20
        $region19: #{tpu_custom_call.1} parent=11 // pred_region
          _
        $region20: #{tpu_custom_call.1} parent=11 // pred_fallthru
          _
        // Predicated region
        $region21: #{tpu_custom_call.1} parent=11 // pred_check
          %p437 = pneg %p117
        $region22: #{tpu_custom_call.1} parent=11 // pred_check_branch
          %439 = sbr.rel (%p437) target = $region24
        $region23: #{tpu_custom_call.1} parent=11 // pred_region
          _
        $region24: #{tpu_custom_call.1} parent=11 // pred_fallthru
          _
        // Predicated region
        $region25: #{tpu_custom_call.1} parent=11 // pred_check
          %p440 = pneg %p138
        $region26: #{tpu_custom_call.1} parent=11 // pred_check_branch
          %442 = sbr.rel (%p440) target = $region28
        $region27: #{tpu_custom_call.1} parent=11 // pred_region
          _
        $region28: #{tpu_custom_call.1} parent=11 // pred_fallthru
          _
        // Predicated region
        $region29: #{tpu_custom_call.1} parent=11 // pred_check
          %p443 = pneg %p159
        $region30: #{tpu_custom_call.1} parent=11 // pred_check_branch
          %445 = sbr.rel (%p443) target = $region32
        $region31: #{tpu_custom_call.1} parent=11 // pred_region
          %s447 = ssub.s32 4096, 4096
          %448 = vsyncadd [#allocation4], %s447
          %s449 = sshll.u32 [#allocation3], 4
          %s450 = int_to_ptr.vmem [resolvable:$true] %s449
          %455 = dma.hbm_to_vmem [thread:$0]  %s5, 4096, %s450, [#allocation4], 128, 128, 8
        $region32: #{tpu_custom_call.1} parent=11 // pred_fallthru
          _
        // Predicated region
        $region33: #{tpu_custom_call.1} parent=11 // pred_check
          %p456 = pneg %p180
        $region34: #{tpu_custom_call.1} parent=11 // pred_check_branch
          %458 = sbr.rel (%p456) target = $region36
        $region35: #{tpu_custom_call.1} parent=11 // pred_region
          _
        $region36: #{tpu_custom_call.1} parent=11 // pred_fallthru
          _
        // Predicated region
        $region37: #{tpu_custom_call.1} parent=11 // pred_check
          %p459 = pneg %p201
        $region38: #{tpu_custom_call.1} parent=11 // pred_check_branch
          %461 = sbr.rel (%p459) target = $region40
        $region39: #{tpu_custom_call.1} parent=11 // pred_region
          %s463 = ssub.s32 4096, 4096
          %464 = vsyncadd [#allocation6], %s463
          %s465 = sshll.u32 [#allocation5], 4
          %s466 = int_to_ptr.vmem [resolvable:$true] %s465
          %471 = dma.hbm_to_vmem [thread:$0]  %s7, 4096, %s466, [#allocation6], 128, 128, 8
        $region40: #{tpu_custom_call.1} parent=11 // pred_fallthru
          _
        // Predicated region
        $region41: #{tpu_custom_call.1} parent=11 // pred_check
          %p472 = pneg %p222
        $region42: #{tpu_custom_call.1} parent=11 // pred_check_branch
          %474 = sbr.rel (%p472) target = $region44
        $region43: #{tpu_custom_call.1} parent=11 // pred_region
          _
        $region44: #{tpu_custom_call.1} parent=11 // pred_fallthru
          _
        // Predicated region
        $region45: #{tpu_custom_call.1} parent=11 // pred_check
          %p475 = pneg %p243
        $region46: #{tpu_custom_call.1} parent=11 // pred_check_branch
          %477 = sbr.rel (%p475) target = $region48
        $region47: #{tpu_custom_call.1} parent=11 // pred_region
          %s479 = ssub.s32 4096, 4096
          %480 = vsyncadd [#allocation6], %s479
          %s481 = sshll.u32 [#allocation7], 4
          %s482 = int_to_ptr.vmem [resolvable:$true] %s481
          %487 = dma.hbm_to_vmem [thread:$0]  %s9, 4096, %s482, [#allocation6], 128, 128, 8
        $region48: #{tpu_custom_call.1} parent=11 // pred_fallthru
          _
        // Predicated region
        $region49: #{tpu_custom_call.1} parent=11 // pred_check
          %p488 = pneg %p264
        $region50: #{tpu_custom_call.1} parent=11 // pred_check_branch
          %490 = sbr.rel (%p488) target = $region52
        $region51: #{tpu_custom_call.1} parent=11 // pred_region
          _
        $region52: #{tpu_custom_call.1} parent=11 // pred_fallthru
          _
        // Predicated region
        $region53: #{tpu_custom_call.1} parent=11 // pred_check
          %p491 = pneg %p285
        $region54: #{tpu_custom_call.1} parent=11 // pred_check_branch
          %493 = sbr.rel (%p491) target = $region56
        $region55: #{tpu_custom_call.1} parent=11 // pred_region
          %s495 = ssub.s32 4096, 4096
          %496 = vsyncadd [#allocation9], %s495
          %s497 = sshll.u32 [#allocation8], 4
          %s498 = int_to_ptr.vmem [resolvable:$true] %s497
          %503 = dma.hbm_to_vmem [thread:$0]  %s11, 4096, %s498, [#allocation9], 128, 128, 8
        $region56: #{tpu_custom_call.1} parent=11 // pred_fallthru
          _
        // Predicated region
        $region57: #{tpu_custom_call.1} parent=11 // pred_check
          %p504 = pneg %p306
        $region58: #{tpu_custom_call.1} parent=11 // pred_check_branch
          %506 = sbr.rel (%p504) target = $region60
        $region59: #{tpu_custom_call.1} parent=11 // pred_region
          _
        $region60: #{tpu_custom_call.1} parent=11 // pred_fallthru
          _
        // Predicated region
        $region61: #{tpu_custom_call.1} parent=11 // pred_check
          %p507 = pneg %p327
        $region62: #{tpu_custom_call.1} parent=11 // pred_check_branch
          %509 = sbr.rel (%p507) target = $region64
        $region63: #{tpu_custom_call.1} parent=11 // pred_region
          %s511 = ssub.s32 4096, 4096
          %512 = vsyncadd [#allocation9], %s511
          %s513 = sshll.u32 [#allocation10], 4
          %s514 = int_to_ptr.vmem [resolvable:$true] %s513
          %519 = dma.hbm_to_vmem [thread:$0]  %s13, 4096, %s514, [#allocation9], 128, 128, 8
        $region64: #{tpu_custom_call.1} parent=11 // pred_fallthru
          _
        // Predicated region
        $region65: #{tpu_custom_call.1} parent=11 // pred_check
          %p520 = pneg %p348
        $region66: #{tpu_custom_call.1} parent=11 // pred_check_branch
          %522 = sbr.rel (%p520) target = $region68
        $region67: #{tpu_custom_call.1} parent=11 // pred_region
          _
        $region68: #{tpu_custom_call.1} parent=11 // pred_fallthru
          _
        // Predicated region
        $region69: #{tpu_custom_call.1} parent=11 // pred_check
          %p523 = pneg %p369
        $region70: #{tpu_custom_call.1} parent=11 // pred_check_branch
          %525 = sbr.rel (%p523) target = $region72
        $region71: #{tpu_custom_call.1} parent=11 // pred_region
          _
        $region72: #{tpu_custom_call.1} parent=11 // pred_fallthru
          _
        // Predicated region
        $region73: #{tpu_custom_call.1} parent=11 // pred_check
          %p526 = pneg %p390
        $region74: #{tpu_custom_call.1} parent=11 // pred_check_branch
          %528 = sbr.rel (%p526) target = $region76
        $region75: #{tpu_custom_call.1} parent=11 // pred_region
          _
        $region76: #{tpu_custom_call.1} parent=11 // pred_fallthru
          _
      $region12: #{tpu_custom_call.1} parent=5 // pred_fallthru
        _
      %p529 = scmp.lt.s32.totalorder %s28, 2
      // Predicated region
      $region77: #{tpu_custom_call.1} parent=5 // pred_check
        %p530 = pneg %p529
      $region78: #{tpu_custom_call.1} parent=5 // pred_check_branch
        %532 = sbr.rel (%p530) target = $region80
      $region79: #{tpu_custom_call.1} parent=5 // pred_region
        // Predicated region
        $region81: #{tpu_custom_call.1} parent=79 // pred_check
          %p533 = pneg %p48
        $region82: #{tpu_custom_call.1} parent=79 // pred_check_branch
          %535 = sbr.rel (%p533) target = $region84
        $region83: #{tpu_custom_call.1} parent=79 // pred_region
          %s536 = smul.u32 16, %s28
          %p537 = scmp.lt.s32.totalorder %s536, 31
          %s538 = scalar_select %p537, %s536, 31
          %s539 = smul.addr %s538, 8
          %s540 = scalar_lea.vmem %s0, %s539
          %s541 = smul.u32 16, %s28
        $region84: #{tpu_custom_call.1} parent=79 // pred_fallthru
          _
      $region80: #{tpu_custom_call.1} parent=5 // pred_fallthru
        _
      %p542 = scmp.le.s32.totalorder 1, %s28
      %p543 = scmp.lt.s32.totalorder %s28, 3
      %p544 = pnand %p542, %p543
      %p545 = pneg %p544
      // Predicated region
      $region85: #{tpu_custom_call.1} parent=5 // pred_check
        _
      $region86: #{tpu_custom_call.1} parent=5 // pred_check_branch
        %547 = sbr.rel (%p544) target = $region88
      $region87: #{tpu_custom_call.1} parent=5 // pred_region
        %s548 = ssub.s32 %s28, 1
        // Predicated region
        $region89: #{tpu_custom_call.1} parent=87 // pred_check
          %p549 = pneg %p159
        $region90: #{tpu_custom_call.1} parent=87 // pred_check_branch
          %551 = sbr.rel (%p549) target = $region92
        $region91: #{tpu_custom_call.1} parent=87 // pred_region
          %552 = dma.done [#allocation4], 4096
        $region92: #{tpu_custom_call.1} parent=87 // pred_fallthru
          _
        // Predicated region
        $region93: #{tpu_custom_call.1} parent=87 // pred_check
          %p553 = pneg %p201
        $region94: #{tpu_custom_call.1} parent=87 // pred_check_branch
          %555 = sbr.rel (%p553) target = $region96
        $region95: #{tpu_custom_call.1} parent=87 // pred_region
          %556 = dma.done [#allocation6], 4096
        $region96: #{tpu_custom_call.1} parent=87 // pred_fallthru
          _
        // Predicated region
        $region97: #{tpu_custom_call.1} parent=87 // pred_check
          %p557 = pneg %p243
        $region98: #{tpu_custom_call.1} parent=87 // pred_check_branch
          %559 = sbr.rel (%p557) target = $region100
        $region99: #{tpu_custom_call.1} parent=87 // pred_region
          %560 = dma.done [#allocation6], 4096
        $region100: #{tpu_custom_call.1} parent=87 // pred_fallthru
          _
        // Predicated region
        $region101: #{tpu_custom_call.1} parent=87 // pred_check
          %p561 = pneg %p285
        $region102: #{tpu_custom_call.1} parent=87 // pred_check_branch
          %563 = sbr.rel (%p561) target = $region104
        $region103: #{tpu_custom_call.1} parent=87 // pred_region
          %564 = dma.done [#allocation9], 4096
        $region104: #{tpu_custom_call.1} parent=87 // pred_fallthru
          _
        // Predicated region
        $region105: #{tpu_custom_call.1} parent=87 // pred_check
          %p565 = pneg %p327
        $region106: #{tpu_custom_call.1} parent=87 // pred_check_branch
          %567 = sbr.rel (%p565) target = $region108
        $region107: #{tpu_custom_call.1} parent=87 // pred_region
          %568 = dma.done [#allocation9], 4096
        $region108: #{tpu_custom_call.1} parent=87 // pred_fallthru
          _
        %s569 = smul.u32 16, %s33
        %p570 = scmp.lt.s32.totalorder %s569, 31
        %s571 = scalar_select %p570, %s569, 31
        %s572 = smul.addr %s571, 8
        %s573 = scalar_lea.vmem %s0, %s572
        %p574 = pneg %p54
        %p575 = pneg %p51
        %p576 = pneg %p75
        %p577 = pneg %p72
        %p578 = pneg %p96
        %p579 = pneg %p93
        %p580 = pneg %p117
        %p581 = pneg %p114
        %p582 = pneg %p138
        %p583 = pneg %p135
        %p584 = pneg %p159
        %p585 = pneg %p156
        %p586 = pneg %p180
        %p587 = pneg %p177
        %p588 = pneg %p201
        %p589 = pneg %p198
        %p590 = pneg %p222
        %p591 = pneg %p219
        %p592 = pneg %p243
        %p593 = pneg %p240
        %p594 = pneg %p264
        %p595 = pneg %p261
        %p596 = pneg %p285
        %p597 = pneg %p282
        %p598 = pneg %p306
        %p599 = pneg %p303
        %p600 = pneg %p327
        %p601 = pneg %p324
        %p602 = pneg %p348
        %p603 = pneg %p345
        %p604 = pneg %p369
        %p605 = pneg %p366
        %p606 = pneg %p390
        %p607 = pneg %p387
        %p608 = pneg %p416
        %p609 = pneg %p413
        %s610 = smul.u32 16, %s33
        %p611 = scmp.lt.s32.totalorder %s610, 31
        %s612 = scalar_select %p611, %s610, 31
        %s613 = smul.addr %s612, 8
        %s614 = scalar_lea.vmem %s17, %s613
        %s615 = smul.u32 16, %s33
        %p616 = scmp.lt.s32.totalorder %s615, 31
        %s617 = scalar_select %p616, %s615, 31
        %s618 = smul.addr %s617, 8
        %s619 = scalar_lea.vmem %s0, %s618
        %s620 = smul.u32 16, %s33
        %s621 = smul.u32 16, %s33
        %p622 = scmp.lt.s32.totalorder %s621, 31
        %s623 = scalar_select %p622, %s621, 31
        %s624 = smul.addr %s623, 8
        %s625 = scalar_lea.vmem %s17, %s624
        %s626 = smul.u32 16, %s33
        %v627 = vld [vmem:[%s619] sm:$0xff]
        %v628 = vld [vmem:[%s619 + $0x8] sm:$0xff]
        %v629 = vld [vmem:[%s619 + $0x10] sm:$0xff]
        %v630 = vld [vmem:[%s619 + $0x18] sm:$0xff]
        %v631 = vld [vmem:[%s619 + $0x20] sm:$0xff]
        %v632 = vld [vmem:[%s619 + $0x28] sm:$0xff]
        %v633 = vld [vmem:[%s619 + $0x30] sm:$0xff]
        %v634 = vld [vmem:[%s619 + $0x38] sm:$0xff]
        %v635 = vld [vmem:[%s619 + $0x40] sm:$0xff]
        %v636 = vld [vmem:[%s619 + $0x48] sm:$0xff]
        %v637 = vld [vmem:[%s619 + $0x50] sm:$0xff]
        %v638 = vld [vmem:[%s619 + $0x58] sm:$0xff]
        %v639 = vld [vmem:[%s619 + $0x60] sm:$0xff]
        %v640 = vld [vmem:[%s619 + $0x68] sm:$0xff]
        %v641 = vld [vmem:[%s619 + $0x70] sm:$0xff]
        %v642 = vld [vmem:[%s619 + $0x78] sm:$0xff]
        %v643 = vld [vmem:[%s1] sm:$0x3]
        %645 = vset.pattern.permute.xlu0 0
        %646 = vperm.xlu0 %645, %v627
        %v647 = vpop.permute.xlu0 %646
        %650 = vset.pattern.permute.xlu0 0
        %651 = vperm.xlu0 %650, %v628
        %v652 = vpop.permute.xlu0 %651
        %655 = vset.pattern.permute.xlu0 0
        %656 = vperm.xlu0 %655, %v629
        %v657 = vpop.permute.xlu0 %656
        %660 = vset.pattern.permute.xlu0 0
        %661 = vperm.xlu0 %660, %v630
        %v662 = vpop.permute.xlu0 %661
        %665 = vset.pattern.permute.xlu0 0
        %666 = vperm.xlu0 %665, %v631
        %v667 = vpop.permute.xlu0 %666
        %670 = vset.pattern.permute.xlu0 0
        %671 = vperm.xlu0 %670, %v632
        %v672 = vpop.permute.xlu0 %671
        %675 = vset.pattern.permute.xlu0 0
        %676 = vperm.xlu0 %675, %v633
        %v677 = vpop.permute.xlu0 %676
        %680 = vset.pattern.permute.xlu0 0
        %681 = vperm.xlu0 %680, %v634
        %v682 = vpop.permute.xlu0 %681
        %685 = vset.pattern.permute.xlu0 0
        %686 = vperm.xlu0 %685, %v635
        %v687 = vpop.permute.xlu0 %686
        %690 = vset.pattern.permute.xlu0 0
        %691 = vperm.xlu0 %690, %v636
        %v692 = vpop.permute.xlu0 %691
        %695 = vset.pattern.permute.xlu0 0
        %696 = vperm.xlu0 %695, %v637
        %v697 = vpop.permute.xlu0 %696
        %700 = vset.pattern.permute.xlu0 0
        %701 = vperm.xlu0 %700, %v638
        %v702 = vpop.permute.xlu0 %701
        %705 = vset.pattern.permute.xlu0 0
        %706 = vperm.xlu0 %705, %v639
        %v707 = vpop.permute.xlu0 %706
        %710 = vset.pattern.permute.xlu0 0
        %711 = vperm.xlu0 %710, %v640
        %v712 = vpop.permute.xlu0 %711
        %715 = vset.pattern.permute.xlu0 0
        %716 = vperm.xlu0 %715, %v641
        %v717 = vpop.permute.xlu0 %716
        %720 = vset.pattern.permute.xlu0 0
        %721 = vperm.xlu0 %720, %v642
        %v722 = vpop.permute.xlu0 %721
        %v725 = vlaneseq
        %v726 = vshrl.u32 %v725, 7
        %v727 = vsub.s32 0, %v726
        %v728 = vrot.slane %v643, %v727
        %v729 = vlaneseq
        %v730 = vshrl.u32 %v729, 7
        %v731 = vsub.s32 1, %v730
        %v732 = vrot.slane %v643, %v731
        %v735 = vmul.f32 %v647, %v728
        %v736 = vmul.f32 %v647, %v732
        %v737 = vmul.f32 %v652, %v728
        %v738 = vmul.f32 %v652, %v732
        %v739 = vmul.f32 %v657, %v728
        %v740 = vmul.f32 %v657, %v732
        %v741 = vmul.f32 %v662, %v728
        %v742 = vmul.f32 %v662, %v732
        %v743 = vmul.f32 %v667, %v728
        %v744 = vmul.f32 %v667, %v732
        %v745 = vmul.f32 %v672, %v728
        %v746 = vmul.f32 %v672, %v732
        %v747 = vmul.f32 %v677, %v728
        %v748 = vmul.f32 %v677, %v732
        %v749 = vmul.f32 %v682, %v728
        %v750 = vmul.f32 %v682, %v732
        %v751 = vmul.f32 %v687, %v728
        %v752 = vmul.f32 %v687, %v732
        %v753 = vmul.f32 %v692, %v728
        %v754 = vmul.f32 %v692, %v732
        %v755 = vmul.f32 %v697, %v728
        %v756 = vmul.f32 %v697, %v732
        %v757 = vmul.f32 %v702, %v728
        %v758 = vmul.f32 %v702, %v732
        %v759 = vmul.f32 %v707, %v728
        %v760 = vmul.f32 %v707, %v732
        %v761 = vmul.f32 %v712, %v728
        %v762 = vmul.f32 %v712, %v732
        %v763 = vmul.f32 %v717, %v728
        %v764 = vmul.f32 %v717, %v732
        %v765 = vmul.f32 %v722, %v728
        %v766 = vmul.f32 %v722, %v732
        %v767 = vld [vmem:[%s2] sm:$0x3]
        %v769 = vlaneseq
        %v770 = vshrl.u32 %v769, 7
        %v771 = vsub.s32 0, %v770
        %v772 = vrot.slane %v767, %v771
        %v773 = vlaneseq
        %v774 = vshrl.u32 %v773, 7
        %v775 = vsub.s32 1, %v774
        %v776 = vrot.slane %v767, %v775
        %v779 = vadd.f32 %v735, %v772
        %v780 = vadd.f32 %v736, %v776
        %v781 = vadd.f32 %v737, %v772
        %v782 = vadd.f32 %v738, %v776
        %v783 = vadd.f32 %v739, %v772
        %v784 = vadd.f32 %v740, %v776
        %v785 = vadd.f32 %v741, %v772
        %v786 = vadd.f32 %v742, %v776
        %v787 = vadd.f32 %v743, %v772
        %v788 = vadd.f32 %v744, %v776
        %v789 = vadd.f32 %v745, %v772
        %v790 = vadd.f32 %v746, %v776
        %v791 = vadd.f32 %v747, %v772
        %v792 = vadd.f32 %v748, %v776
        %v793 = vadd.f32 %v749, %v772
        %v794 = vadd.f32 %v750, %v776
        %v795 = vadd.f32 %v751, %v772
        %v796 = vadd.f32 %v752, %v776
        %v797 = vadd.f32 %v753, %v772
        %v798 = vadd.f32 %v754, %v776
        %v799 = vadd.f32 %v755, %v772
        %v800 = vadd.f32 %v756, %v776
        %v801 = vadd.f32 %v757, %v772
        %v802 = vadd.f32 %v758, %v776
        %v803 = vadd.f32 %v759, %v772
        %v804 = vadd.f32 %v760, %v776
        %v805 = vadd.f32 %v761, %v772
        %v806 = vadd.f32 %v762, %v776
        %v807 = vadd.f32 %v763, %v772
        %v808 = vadd.f32 %v764, %v776
        %v809 = vadd.f32 %v765, %v772
        %v810 = vadd.f32 %v766, %v776
        %v811 = vmax.f32 %v779, 0.0
        %v812 = vmax.f32 %v780, 0.0
        %v813 = vmax.f32 %v781, 0.0
        %v814 = vmax.f32 %v782, 0.0
        %v815 = vmax.f32 %v783, 0.0
        %v816 = vmax.f32 %v784, 0.0
        %v817 = vmax.f32 %v785, 0.0
        %v818 = vmax.f32 %v786, 0.0
        %v819 = vmax.f32 %v787, 0.0
        %v820 = vmax.f32 %v788, 0.0
        %v821 = vmax.f32 %v789, 0.0
        %v822 = vmax.f32 %v790, 0.0
        %v823 = vmax.f32 %v791, 0.0
        %v824 = vmax.f32 %v792, 0.0
        %v825 = vmax.f32 %v793, 0.0
        %v826 = vmax.f32 %v794, 0.0
        %v827 = vmax.f32 %v795, 0.0
        %v828 = vmax.f32 %v796, 0.0
        %v829 = vmax.f32 %v797, 0.0
        %v830 = vmax.f32 %v798, 0.0
        %v831 = vmax.f32 %v799, 0.0
        %v832 = vmax.f32 %v800, 0.0
        %v833 = vmax.f32 %v801, 0.0
        %v834 = vmax.f32 %v802, 0.0
        %v835 = vmax.f32 %v803, 0.0
        %v836 = vmax.f32 %v804, 0.0
        %v837 = vmax.f32 %v805, 0.0
        %v838 = vmax.f32 %v806, 0.0
        %v839 = vmax.f32 %v807, 0.0
        %v840 = vmax.f32 %v808, 0.0
        %v841 = vmax.f32 %v809, 0.0
        %v842 = vmax.f32 %v810, 0.0
        %v843 = vpack.c.bf16 %v813, %v811
        %v844 = vpack.c.bf16 %v814, %v812
        %v845 = vpack.c.bf16 %v817, %v815
        %v846 = vpack.c.bf16 %v818, %v816
        %v847 = vpack.c.bf16 %v821, %v819
        %v848 = vpack.c.bf16 %v822, %v820
        %v849 = vpack.c.bf16 %v825, %v823
        %v850 = vpack.c.bf16 %v826, %v824
        %v851 = vpack.c.bf16 %v829, %v827
        %v852 = vpack.c.bf16 %v830, %v828
        %v853 = vpack.c.bf16 %v833, %v831
        %v854 = vpack.c.bf16 %v834, %v832
        %v855 = vpack.c.bf16 %v837, %v835
        %v856 = vpack.c.bf16 %v838, %v836
        %v857 = vpack.c.bf16 %v841, %v839
        %v858 = vpack.c.bf16 %v842, %v840
        %v859 = vld [vmem:[%s3] sm:$0xff]
        %v860 = vld [vmem:[%s3 + $0x8] sm:$0xff]
        %v861 = vld [vmem:[%s3 + $0x10] sm:$0xff]
        %v862 = vld [vmem:[%s3 + $0x18] sm:$0xff]
        %v863 = vld [vmem:[%s3 + $0x20] sm:$0xff]
        %v864 = vld [vmem:[%s3 + $0x28] sm:$0xff]
        %v865 = vld [vmem:[%s3 + $0x30] sm:$0xff]
        %v866 = vld [vmem:[%s3 + $0x38] sm:$0xff]
        %v867 = vld [vmem:[%s3 + $0x40] sm:$0xff]
        %v868 = vld [vmem:[%s3 + $0x48] sm:$0xff]
        %v869 = vld [vmem:[%s3 + $0x50] sm:$0xff]
        %v870 = vld [vmem:[%s3 + $0x58] sm:$0xff]
        %v871 = vld [vmem:[%s3 + $0x60] sm:$0xff]
        %v872 = vld [vmem:[%s3 + $0x68] sm:$0xff]
        %v873 = vld [vmem:[%s3 + $0x70] sm:$0xff]
        %v874 = vld [vmem:[%s3 + $0x78] sm:$0xff]
        %v875 = vld [vmem:[%s3 + $0x80] sm:$0xff]
        %v876 = vld [vmem:[%s3 + $0x88] sm:$0xff]
        %v877 = vld [vmem:[%s3 + $0x90] sm:$0xff]
        %v878 = vld [vmem:[%s3 + $0x98] sm:$0xff]
        %v879 = vld [vmem:[%s3 + $0xa0] sm:$0xff]
        %v880 = vld [vmem:[%s3 + $0xa8] sm:$0xff]
        %v881 = vld [vmem:[%s3 + $0xb0] sm:$0xff]
        %v882 = vld [vmem:[%s3 + $0xb8] sm:$0xff]
        %v883 = vld [vmem:[%s3 + $0xc0] sm:$0xff]
        %v884 = vld [vmem:[%s3 + $0xc8] sm:$0xff]
        %v885 = vld [vmem:[%s3 + $0xd0] sm:$0xff]
        %v886 = vld [vmem:[%s3 + $0xd8] sm:$0xff]
        %v887 = vld [vmem:[%s3 + $0xe0] sm:$0xff]
        %v888 = vld [vmem:[%s3 + $0xe8] sm:$0xff]
        %v889 = vld [vmem:[%s3 + $0xf0] sm:$0xff]
        %v890 = vld [vmem:[%s3 + $0xf8] sm:$0xff]
        %v891 = vld [vmem:[%s4] sm:$0x3]
        %v893 = vlaneseq
        %v894 = vshrl.u32 %v893, 7
        %v895 = vsub.s32 0, %v894
        %v896 = vrot.slane %v891, %v895
        %v897 = vlaneseq
        %v898 = vshrl.u32 %v897, 7
        %v899 = vsub.s32 1, %v898
        %v900 = vrot.slane %v891, %v899
        %v935 = vunpack.c.l.b16 %v859
        %v936 = vunpack.c.h.b16 %v859
        %v937 = vunpack.c.l.b16 %v860
        %v938 = vunpack.c.h.b16 %v860
        %v939 = vunpack.c.l.b16 %v861
        %v940 = vunpack.c.h.b16 %v861
        %v941 = vunpack.c.l.b16 %v862
        %v942 = vunpack.c.h.b16 %v862
        %v943 = vunpack.c.l.b16 %v863
        %v944 = vunpack.c.h.b16 %v863
        %v945 = vunpack.c.l.b16 %v864
        %v946 = vunpack.c.h.b16 %v864
        %v947 = vunpack.c.l.b16 %v865
        %v948 = vunpack.c.h.b16 %v865
        %v949 = vunpack.c.l.b16 %v866
        %v950 = vunpack.c.h.b16 %v866
        %v951 = vunpack.c.l.b16 %v867
        %v952 = vunpack.c.h.b16 %v867
        %v953 = vunpack.c.l.b16 %v868
        %v954 = vunpack.c.h.b16 %v868
        %v955 = vunpack.c.l.b16 %v869
        %v956 = vunpack.c.h.b16 %v869
        %v957 = vunpack.c.l.b16 %v870
        %v958 = vunpack.c.h.b16 %v870
        %v959 = vunpack.c.l.b16 %v871
        %v960 = vunpack.c.h.b16 %v871
        %v961 = vunpack.c.l.b16 %v872
        %v962 = vunpack.c.h.b16 %v872
        %v963 = vunpack.c.l.b16 %v873
        %v964 = vunpack.c.h.b16 %v873
        %v965 = vunpack.c.l.b16 %v874
        %v966 = vunpack.c.h.b16 %v874
        %v967 = vunpack.c.l.b16 %v875
        %v968 = vunpack.c.h.b16 %v875
        %v969 = vunpack.c.l.b16 %v876
        %v970 = vunpack.c.h.b16 %v876
        %v971 = vunpack.c.l.b16 %v877
        %v972 = vunpack.c.h.b16 %v877
        %v973 = vunpack.c.l.b16 %v878
        %v974 = vunpack.c.h.b16 %v878
        %v975 = vunpack.c.l.b16 %v879
        %v976 = vunpack.c.h.b16 %v879
        %v977 = vunpack.c.l.b16 %v880
        %v978 = vunpack.c.h.b16 %v880
        %v979 = vunpack.c.l.b16 %v881
        %v980 = vunpack.c.h.b16 %v881
        %v981 = vunpack.c.l.b16 %v882
        %v982 = vunpack.c.h.b16 %v882
        %v983 = vunpack.c.l.b16 %v883
        %v984 = vunpack.c.h.b16 %v883
        %v985 = vunpack.c.l.b16 %v884
        %v986 = vunpack.c.h.b16 %v884
        %v987 = vunpack.c.l.b16 %v885
        %v988 = vunpack.c.h.b16 %v885
        %v989 = vunpack.c.l.b16 %v886
        %v990 = vunpack.c.h.b16 %v886
        %v991 = vunpack.c.l.b16 %v887
        %v992 = vunpack.c.h.b16 %v887
        %v993 = vunpack.c.l.b16 %v888
        %v994 = vunpack.c.h.b16 %v888
        %v995 = vunpack.c.l.b16 %v889
        %v996 = vunpack.c.h.b16 %v889
        %v997 = vunpack.c.l.b16 %v890
        %v998 = vunpack.c.h.b16 %v890
        %v999 = vpack.c.b16 %v937, %v935
        %v1000 = vpack.c.b16 %v938, %v936
        %v1001 = vpack.c.b16 %v941, %v939
        %v1002 = vpack.c.b16 %v942, %v940
        %v1003 = vpack.c.b16 %v945, %v943
        %v1004 = vpack.c.b16 %v946, %v944
        %v1005 = vpack.c.b16 %v949, %v947
        %v1006 = vpack.c.b16 %v950, %v948
        %v1007 = vpack.c.b16 %v953, %v951
        %v1008 = vpack.c.b16 %v954, %v952
        %v1009 = vpack.c.b16 %v957, %v955
        %v1010 = vpack.c.b16 %v958, %v956
        %v1011 = vpack.c.b16 %v961, %v959
        %v1012 = vpack.c.b16 %v962, %v960
        %v1013 = vpack.c.b16 %v965, %v963
        %v1014 = vpack.c.b16 %v966, %v964
        %v1015 = vpack.c.b16 %v969, %v967
        %v1016 = vpack.c.b16 %v970, %v968
        %v1017 = vpack.c.b16 %v973, %v971
        %v1018 = vpack.c.b16 %v974, %v972
        %v1019 = vpack.c.b16 %v977, %v975
        %v1020 = vpack.c.b16 %v978, %v976
        %v1021 = vpack.c.b16 %v981, %v979
        %v1022 = vpack.c.b16 %v982, %v980
        %v1023 = vpack.c.b16 %v985, %v983
        %v1024 = vpack.c.b16 %v986, %v984
        %v1025 = vpack.c.b16 %v989, %v987
        %v1026 = vpack.c.b16 %v990, %v988
        %v1027 = vpack.c.b16 %v993, %v991
        %v1028 = vpack.c.b16 %v994, %v992
        %v1029 = vpack.c.b16 %v997, %v995
        %v1030 = vpack.c.b16 %v998, %v996
        %1063 = vmatprep.subr.bf16.mxu0 %v1000
        %1064 = vmatpush1.bf16.msra.mxu0 %v999
        %1065 = vmatprep.subr.bf16.mxu0 %v1002
        %1066 = vmatpush1.bf16.msra.mxu0 %v1001
        %1067 = vmatprep.subr.bf16.mxu0 %v1004
        %1068 = vmatpush1.bf16.msra.mxu0 %v1003
        %1069 = vmatprep.subr.bf16.mxu0 %v1006
        %1070 = vmatpush1.bf16.msra.mxu0 %v1005
        %1071 = vmatprep.subr.bf16.mxu0 %v1008
        %1072 = vmatpush1.bf16.msra.mxu0 %v1007
        %1073 = vmatprep.subr.bf16.mxu0 %v1010
        %1074 = vmatpush1.bf16.msra.mxu0 %v1009
        %1075 = vmatprep.subr.bf16.mxu0 %v1012
        %1076 = vmatpush1.bf16.msra.mxu0 %v1011
        %1077 = vmatprep.subr.bf16.mxu0 %v1014
        %1078 = vmatpush1.bf16.msra.mxu0 %v1013
        %1079 = vmatprep.subr.bf16.mxu0 %v1016
        %1080 = vmatpush1.bf16.msra.mxu0 %v1015
        %1081 = vmatprep.subr.bf16.mxu0 %v1018
        %1082 = vmatpush1.bf16.msra.mxu0 %v1017
        %1083 = vmatprep.subr.bf16.mxu0 %v1020
        %1084 = vmatpush1.bf16.msra.mxu0 %v1019
        %1085 = vmatprep.subr.bf16.mxu0 %v1022
        %1086 = vmatpush1.bf16.msra.mxu0 %v1021
        %1087 = vmatprep.subr.bf16.mxu0 %v1024
        %1088 = vmatpush1.bf16.msra.mxu0 %v1023
        %1089 = vmatprep.subr.bf16.mxu0 %v1026
        %1090 = vmatpush1.bf16.msra.mxu0 %v1025
        %1091 = vmatprep.subr.bf16.mxu0 %v1028
        %1092 = vmatpush1.bf16.msra.mxu0 %v1027
        %1093 = vmatprep.subr.bf16.mxu0 %v1030
        %1094 = vmatpush1.bf16.msra.mxu0 %v1029
        %1095 = vmatprep.mubr.bf16.mxu0 %v844
        %1096 = vmatmul.mubr.bf16.gmra.mrb[0].mxu0 %v843
        %v1097 = vpop.f32.mrb[0].mxu0
        %v1098 = vadd.f32 %v896, %v1097
        %v1099 = vpop.f32.mrb[0].mxu0
        %v1100 = vadd.f32 %v900, %v1099
        %v1101 = vpop.f32.mrb[0].mxu0
        %v1102 = vadd.f32 %v896, %v1101
        %v1103 = vpop.f32.mrb[0].mxu0
        %v1104 = vadd.f32 %v900, %v1103
        %1105 = vmatprep.mubr.bf16.mxu0 %v846
        %1106 = vmatmul.mubr.bf16.gmra.mrb[0].mxu0 %v845
        %v1107 = vpop.f32.mrb[0].mxu0
        %v1108 = vadd.f32 %v896, %v1107
        %v1109 = vpop.f32.mrb[0].mxu0
        %v1110 = vadd.f32 %v900, %v1109
        %v1111 = vpop.f32.mrb[0].mxu0
        %v1112 = vadd.f32 %v896, %v1111
        %v1113 = vpop.f32.mrb[0].mxu0
        %v1114 = vadd.f32 %v900, %v1113
        %1115 = vmatprep.mubr.bf16.mxu0 %v848
        %1116 = vmatmul.mubr.bf16.gmra.mrb[0].mxu0 %v847
        %v1117 = vpop.f32.mrb[0].mxu0
        %v1118 = vadd.f32 %v896, %v1117
        %v1119 = vpop.f32.mrb[0].mxu0
        %v1120 = vadd.f32 %v900, %v1119
        %v1121 = vpop.f32.mrb[0].mxu0
        %v1122 = vadd.f32 %v896, %v1121
        %v1123 = vpop.f32.mrb[0].mxu0
        %v1124 = vadd.f32 %v900, %v1123
        %1125 = vmatprep.mubr.bf16.mxu0 %v850
        %1126 = vmatmul.mubr.bf16.gmra.mrb[0].mxu0 %v849
        %v1127 = vpop.f32.mrb[0].mxu0
        %v1128 = vadd.f32 %v896, %v1127
        %v1129 = vpop.f32.mrb[0].mxu0
        %v1130 = vadd.f32 %v900, %v1129
        %v1131 = vpop.f32.mrb[0].mxu0
        %v1132 = vadd.f32 %v896, %v1131
        %v1133 = vpop.f32.mrb[0].mxu0
        %v1134 = vadd.f32 %v900, %v1133
        %1135 = vmatprep.mubr.bf16.mxu0 %v852
        %1136 = vmatmul.mubr.bf16.gmra.mrb[0].mxu0 %v851
        %v1137 = vpop.f32.mrb[0].mxu0
        %v1138 = vadd.f32 %v896, %v1137
        %v1139 = vpop.f32.mrb[0].mxu0
        %v1140 = vadd.f32 %v900, %v1139
        %v1141 = vpop.f32.mrb[0].mxu0
        %v1142 = vadd.f32 %v896, %v1141
        %v1143 = vpop.f32.mrb[0].mxu0
        %v1144 = vadd.f32 %v900, %v1143
        %1145 = vmatprep.mubr.bf16.mxu0 %v854
        %1146 = vmatmul.mubr.bf16.gmra.mrb[0].mxu0 %v853
        %v1147 = vpop.f32.mrb[0].mxu0
        %v1148 = vadd.f32 %v896, %v1147
        %v1149 = vpop.f32.mrb[0].mxu0
        %v1150 = vadd.f32 %v900, %v1149
        %v1151 = vpop.f32.mrb[0].mxu0
        %v1152 = vadd.f32 %v896, %v1151
        %v1153 = vpop.f32.mrb[0].mxu0
        %v1154 = vadd.f32 %v900, %v1153
        %1155 = vmatprep.mubr.bf16.mxu0 %v856
        %1156 = vmatmul.mubr.bf16.gmra.mrb[0].mxu0 %v855
        %v1157 = vpop.f32.mrb[0].mxu0
        %v1158 = vadd.f32 %v896, %v1157
        %v1159 = vpop.f32.mrb[0].mxu0
        %v1160 = vadd.f32 %v900, %v1159
        %v1161 = vpop.f32.mrb[0].mxu0
        %v1162 = vadd.f32 %v896, %v1161
        %v1163 = vpop.f32.mrb[0].mxu0
        %v1164 = vadd.f32 %v900, %v1163
        %1165 = vmatprep.mubr.bf16.mxu0 %v858
        %1166 = vmatmul.mubr.bf16.gmra.mrb[0].mxu0 %v857
        %v1167 = vpop.f32.mrb[0].mxu0
        %v1168 = vadd.f32 %v896, %v1167
        %v1169 = vpop.f32.mrb[0].mxu0
        %v1170 = vadd.f32 %v900, %v1169
        %v1171 = vpop.f32.mrb[0].mxu0
        %v1172 = vadd.f32 %v896, %v1171
        %v1173 = vpop.f32.mrb[0].mxu0
        %v1174 = vadd.f32 %v900, %v1173
        %1175 = vdwg.mxu0
        %v1176 = vmax.f32 %v1098, 0.0
        %v1177 = vmax.f32 %v1100, 0.0
        %v1178 = vmax.f32 %v1102, 0.0
        %v1179 = vmax.f32 %v1104, 0.0
        %v1180 = vmax.f32 %v1108, 0.0
        %v1181 = vmax.f32 %v1110, 0.0
        %v1182 = vmax.f32 %v1112, 0.0
        %v1183 = vmax.f32 %v1114, 0.0
        %v1184 = vmax.f32 %v1118, 0.0
        %v1185 = vmax.f32 %v1120, 0.0
        %v1186 = vmax.f32 %v1122, 0.0
        %v1187 = vmax.f32 %v1124, 0.0
        %v1188 = vmax.f32 %v1128, 0.0
        %v1189 = vmax.f32 %v1130, 0.0
        %v1190 = vmax.f32 %v1132, 0.0
        %v1191 = vmax.f32 %v1134, 0.0
        %v1192 = vmax.f32 %v1138, 0.0
        %v1193 = vmax.f32 %v1140, 0.0
        %v1194 = vmax.f32 %v1142, 0.0
        %v1195 = vmax.f32 %v1144, 0.0
        %v1196 = vmax.f32 %v1148, 0.0
        %v1197 = vmax.f32 %v1150, 0.0
        %v1198 = vmax.f32 %v1152, 0.0
        %v1199 = vmax.f32 %v1154, 0.0
        %v1200 = vmax.f32 %v1158, 0.0
        %v1201 = vmax.f32 %v1160, 0.0
        %v1202 = vmax.f32 %v1162, 0.0
        %v1203 = vmax.f32 %v1164, 0.0
        %v1204 = vmax.f32 %v1168, 0.0
        %v1205 = vmax.f32 %v1170, 0.0
        %v1206 = vmax.f32 %v1172, 0.0
        %v1207 = vmax.f32 %v1174, 0.0
        %v1208 = vpack.c.bf16 %v1178, %v1176
        %v1209 = vpack.c.bf16 %v1179, %v1177
        %v1210 = vpack.c.bf16 %v1182, %v1180
        %v1211 = vpack.c.bf16 %v1183, %v1181
        %v1212 = vpack.c.bf16 %v1186, %v1184
        %v1213 = vpack.c.bf16 %v1187, %v1185
        %v1214 = vpack.c.bf16 %v1190, %v1188
        %v1215 = vpack.c.bf16 %v1191, %v1189
        %v1216 = vpack.c.bf16 %v1194, %v1192
        %v1217 = vpack.c.bf16 %v1195, %v1193
        %v1218 = vpack.c.bf16 %v1198, %v1196
        %v1219 = vpack.c.bf16 %v1199, %v1197
        %v1220 = vpack.c.bf16 %v1202, %v1200
        %v1221 = vpack.c.bf16 %v1203, %v1201
        %v1222 = vpack.c.bf16 %v1206, %v1204
        %v1223 = vpack.c.bf16 %v1207, %v1205
        %v1224 = vld [vmem:[#allocation3] sm:$0xff]
        %v1225 = vld [vmem:[#allocation3 + $0x8] sm:$0xff]
        %v1226 = vld [vmem:[#allocation3 + $0x10] sm:$0xff]
        %v1227 = vld [vmem:[#allocation3 + $0x18] sm:$0xff]
        %v1228 = vld [vmem:[#allocation3 + $0x20] sm:$0xff]
        %v1229 = vld [vmem:[#allocation3 + $0x28] sm:$0xff]
        %v1230 = vld [vmem:[#allocation3 + $0x30] sm:$0xff]
        %v1231 = vld [vmem:[#allocation3 + $0x38] sm:$0xff]
        %v1232 = vld [vmem:[#allocation3 + $0x40] sm:$0xff]
        %v1233 = vld [vmem:[#allocation3 + $0x48] sm:$0xff]
        %v1234 = vld [vmem:[#allocation3 + $0x50] sm:$0xff]
        %v1235 = vld [vmem:[#allocation3 + $0x58] sm:$0xff]
        %v1236 = vld [vmem:[#allocation3 + $0x60] sm:$0xff]
        %v1237 = vld [vmem:[#allocation3 + $0x68] sm:$0xff]
        %v1238 = vld [vmem:[#allocation3 + $0x70] sm:$0xff]
        %v1239 = vld [vmem:[#allocation3 + $0x78] sm:$0xff]
        %v1240 = vld [vmem:[#allocation3 + $0x80] sm:$0xff]
        %v1241 = vld [vmem:[#allocation3 + $0x88] sm:$0xff]
        %v1242 = vld [vmem:[#allocation3 + $0x90] sm:$0xff]
        %v1243 = vld [vmem:[#allocation3 + $0x98] sm:$0xff]
        %v1244 = vld [vmem:[#allocation3 + $0xa0] sm:$0xff]
        %v1245 = vld [vmem:[#allocation3 + $0xa8] sm:$0xff]
        %v1246 = vld [vmem:[#allocation3 + $0xb0] sm:$0xff]
        %v1247 = vld [vmem:[#allocation3 + $0xb8] sm:$0xff]
        %v1248 = vld [vmem:[#allocation3 + $0xc0] sm:$0xff]
        %v1249 = vld [vmem:[#allocation3 + $0xc8] sm:$0xff]
        %v1250 = vld [vmem:[#allocation3 + $0xd0] sm:$0xff]
        %v1251 = vld [vmem:[#allocation3 + $0xd8] sm:$0xff]
        %v1252 = vld [vmem:[#allocation3 + $0xe0] sm:$0xff]
        %v1253 = vld [vmem:[#allocation3 + $0xe8] sm:$0xff]
        %v1254 = vld [vmem:[#allocation3 + $0xf0] sm:$0xff]
        %v1255 = vld [vmem:[#allocation3 + $0xf8] sm:$0xff]
        %v1256 = vld [vmem:[%s6] sm:$0x3]
        %v1258 = vlaneseq
        %v1259 = vshrl.u32 %v1258, 7
        %v1260 = vsub.s32 0, %v1259
        %v1261 = vrot.slane %v1256, %v1260
        %v1262 = vlaneseq
        %v1263 = vshrl.u32 %v1262, 7
        %v1264 = vsub.s32 1, %v1263
        %v1265 = vrot.slane %v1256, %v1264
        %v1300 = vunpack.c.l.b16 %v1224
        %v1301 = vunpack.c.h.b16 %v1224
        %v1302 = vunpack.c.l.b16 %v1225
        %v1303 = vunpack.c.h.b16 %v1225
        %v1304 = vunpack.c.l.b16 %v1226
        %v1305 = vunpack.c.h.b16 %v1226
        %v1306 = vunpack.c.l.b16 %v1227
        %v1307 = vunpack.c.h.b16 %v1227
        %v1308 = vunpack.c.l.b16 %v1228
        %v1309 = vunpack.c.h.b16 %v1228
        %v1310 = vunpack.c.l.b16 %v1229
        %v1311 = vunpack.c.h.b16 %v1229
        %v1312 = vunpack.c.l.b16 %v1230
        %v1313 = vunpack.c.h.b16 %v1230
        %v1314 = vunpack.c.l.b16 %v1231
        %v1315 = vunpack.c.h.b16 %v1231
        %v1316 = vunpack.c.l.b16 %v1232
        %v1317 = vunpack.c.h.b16 %v1232
        %v1318 = vunpack.c.l.b16 %v1233
        %v1319 = vunpack.c.h.b16 %v1233
        %v1320 = vunpack.c.l.b16 %v1234
        %v1321 = vunpack.c.h.b16 %v1234
        %v1322 = vunpack.c.l.b16 %v1235
        %v1323 = vunpack.c.h.b16 %v1235
        %v1324 = vunpack.c.l.b16 %v1236
        %v1325 = vunpack.c.h.b16 %v1236
        %v1326 = vunpack.c.l.b16 %v1237
        %v1327 = vunpack.c.h.b16 %v1237
        %v1328 = vunpack.c.l.b16 %v1238
        %v1329 = vunpack.c.h.b16 %v1238
        %v1330 = vunpack.c.l.b16 %v1239
        %v1331 = vunpack.c.h.b16 %v1239
        %v1332 = vunpack.c.l.b16 %v1240
        %v1333 = vunpack.c.h.b16 %v1240
        %v1334 = vunpack.c.l.b16 %v1241
        %v1335 = vunpack.c.h.b16 %v1241
        %v1336 = vunpack.c.l.b16 %v1242
        %v1337 = vunpack.c.h.b16 %v1242
        %v1338 = vunpack.c.l.b16 %v1243
        %v1339 = vunpack.c.h.b16 %v1243
        %v1340 = vunpack.c.l.b16 %v1244
        %v1341 = vunpack.c.h.b16 %v1244
        %v1342 = vunpack.c.l.b16 %v1245
        %v1343 = vunpack.c.h.b16 %v1245
        %v1344 = vunpack.c.l.b16 %v1246
        %v1345 = vunpack.c.h.b16 %v1246
        %v1346 = vunpack.c.l.b16 %v1247
        %v1347 = vunpack.c.h.b16 %v1247
        %v1348 = vunpack.c.l.b16 %v1248
        %v1349 = vunpack.c.h.b16 %v1248
        %v1350 = vunpack.c.l.b16 %v1249
        %v1351 = vunpack.c.h.b16 %v1249
        %v1352 = vunpack.c.l.b16 %v1250
        %v1353 = vunpack.c.h.b16 %v1250
        %v1354 = vunpack.c.l.b16 %v1251
        %v1355 = vunpack.c.h.b16 %v1251
        %v1356 = vunpack.c.l.b16 %v1252
        %v1357 = vunpack.c.h.b16 %v1252
        %v1358 = vunpack.c.l.b16 %v1253
        %v1359 = vunpack.c.h.b16 %v1253
        %v1360 = vunpack.c.l.b16 %v1254
        %v1361 = vunpack.c.h.b16 %v1254
        %v1362 = vunpack.c.l.b16 %v1255
        %v1363 = vunpack.c.h.b16 %v1255
        %v1364 = vpack.c.b16 %v1302, %v1300
        %v1365 = vpack.c.b16 %v1303, %v1301
        %v1366 = vpack.c.b16 %v1306, %v1304
        %v1367 = vpack.c.b16 %v1307, %v1305
        %v1368 = vpack.c.b16 %v1310, %v1308
        %v1369 = vpack.c.b16 %v1311, %v1309
        %v1370 = vpack.c.b16 %v1314, %v1312
        %v1371 = vpack.c.b16 %v1315, %v1313
        %v1372 = vpack.c.b16 %v1318, %v1316
        %v1373 = vpack.c.b16 %v1319, %v1317
        %v1374 = vpack.c.b16 %v1322, %v1320
        %v1375 = vpack.c.b16 %v1323, %v1321
        %v1376 = vpack.c.b16 %v1326, %v1324
        %v1377 = vpack.c.b16 %v1327, %v1325
        %v1378 = vpack.c.b16 %v1330, %v1328
        %v1379 = vpack.c.b16 %v1331, %v1329
        %v1380 = vpack.c.b16 %v1334, %v1332
        %v1381 = vpack.c.b16 %v1335, %v1333
        %v1382 = vpack.c.b16 %v1338, %v1336
        %v1383 = vpack.c.b16 %v1339, %v1337
        %v1384 = vpack.c.b16 %v1342, %v1340
        %v1385 = vpack.c.b16 %v1343, %v1341
        %v1386 = vpack.c.b16 %v1346, %v1344
        %v1387 = vpack.c.b16 %v1347, %v1345
        %v1388 = vpack.c.b16 %v1350, %v1348
        %v1389 = vpack.c.b16 %v1351, %v1349
        %v1390 = vpack.c.b16 %v1354, %v1352
        %v1391 = vpack.c.b16 %v1355, %v1353
        %v1392 = vpack.c.b16 %v1358, %v1356
        %v1393 = vpack.c.b16 %v1359, %v1357
        %v1394 = vpack.c.b16 %v1362, %v1360
        %v1395 = vpack.c.b16 %v1363, %v1361
        %1428 = vmatprep.subr.bf16.mxu0 %v1365
        %1429 = vmatpush1.bf16.msra.mxu0 %v1364
        %1430 = vmatprep.subr.bf16.mxu0 %v1367
        %1431 = vmatpush1.bf16.msra.mxu0 %v1366
        %1432 = vmatprep.subr.bf16.mxu0 %v1369
        %1433 = vmatpush1.bf16.msra.mxu0 %v1368
        %1434 = vmatprep.subr.bf16.mxu0 %v1371
        %1435 = vmatpush1.bf16.msra.mxu0 %v1370
        %1436 = vmatprep.subr.bf16.mxu0 %v1373
        %1437 = vmatpush1.bf16.msra.mxu0 %v1372
        %1438 = vmatprep.subr.bf16.mxu0 %v1375
        %1439 = vmatpush1.bf16.msra.mxu0 %v1374
        %1440 = vmatprep.subr.bf16.mxu0 %v1377
        %1441 = vmatpush1.bf16.msra.mxu0 %v1376
        %1442 = vmatprep.subr.bf16.mxu0 %v1379
        %1443 = vmatpush1.bf16.msra.mxu0 %v1378
        %1444 = vmatprep.subr.bf16.mxu0 %v1381
        %1445 = vmatpush1.bf16.msra.mxu0 %v1380
        %1446 = vmatprep.subr.bf16.mxu0 %v1383
        %1447 = vmatpush1.bf16.msra.mxu0 %v1382
        %1448 = vmatprep.subr.bf16.mxu0 %v1385
        %1449 = vmatpush1.bf16.msra.mxu0 %v1384
        %1450 = vmatprep.subr.bf16.mxu0 %v1387
        %1451 = vmatpush1.bf16.msra.mxu0 %v1386
        %1452 = vmatprep.subr.bf16.mxu0 %v1389
        %1453 = vmatpush1.bf16.msra.mxu0 %v1388
        %1454 = vmatprep.subr.bf16.mxu0 %v1391
        %1455 = vmatpush1.bf16.msra.mxu0 %v1390
        %1456 = vmatprep.subr.bf16.mxu0 %v1393
        %1457 = vmatpush1.bf16.msra.mxu0 %v1392
        %1458 = vmatprep.subr.bf16.mxu0 %v1395
        %1459 = vmatpush1.bf16.msra.mxu0 %v1394
        %1460 = vmatprep.mubr.bf16.mxu0 %v1209
        %1461 = vmatmul.mubr.bf16.gmra.mrb[0].mxu0 %v1208
        %v1462 = vpop.f32.mrb[0].mxu0
        %v1463 = vadd.f32 %v1261, %v1462
        %v1464 = vpop.f32.mrb[0].mxu0
        %v1465 = vadd.f32 %v1265, %v1464
        %v1466 = vpop.f32.mrb[0].mxu0
        %v1467 = vadd.f32 %v1261, %v1466
        %v1468 = vpop.f32.mrb[0].mxu0
        %v1469 = vadd.f32 %v1265, %v1468
        %1470 = vmatprep.mubr.bf16.mxu0 %v1211
        %1471 = vmatmul.mubr.bf16.gmra.mrb[0].mxu0 %v1210
        %v1472 = vpop.f32.mrb[0].mxu0
        %v1473 = vadd.f32 %v1261, %v1472
        %v1474 = vpop.f32.mrb[0].mxu0
        %v1475 = vadd.f32 %v1265, %v1474
        %v1476 = vpop.f32.mrb[0].mxu0
        %v1477 = vadd.f32 %v1261, %v1476
        %v1478 = vpop.f32.mrb[0].mxu0
        %v1479 = vadd.f32 %v1265, %v1478
        %1480 = vmatprep.mubr.bf16.mxu0 %v1213
        %1481 = vmatmul.mubr.bf16.gmra.mrb[0].mxu0 %v1212
        %v1482 = vpop.f32.mrb[0].mxu0
        %v1483 = vadd.f32 %v1261, %v1482
        %v1484 = vpop.f32.mrb[0].mxu0
        %v1485 = vadd.f32 %v1265, %v1484
        %v1486 = vpop.f32.mrb[0].mxu0
        %v1487 = vadd.f32 %v1261, %v1486
        %v1488 = vpop.f32.mrb[0].mxu0
        %v1489 = vadd.f32 %v1265, %v1488
        %1490 = vmatprep.mubr.bf16.mxu0 %v1215
        %1491 = vmatmul.mubr.bf16.gmra.mrb[0].mxu0 %v1214
        %v1492 = vpop.f32.mrb[0].mxu0
        %v1493 = vadd.f32 %v1261, %v1492
        %v1494 = vpop.f32.mrb[0].mxu0
        %v1495 = vadd.f32 %v1265, %v1494
        %v1496 = vpop.f32.mrb[0].mxu0
        %v1497 = vadd.f32 %v1261, %v1496
        %v1498 = vpop.f32.mrb[0].mxu0
        %v1499 = vadd.f32 %v1265, %v1498
        %1500 = vmatprep.mubr.bf16.mxu0 %v1217
        %1501 = vmatmul.mubr.bf16.gmra.mrb[0].mxu0 %v1216
        %v1502 = vpop.f32.mrb[0].mxu0
        %v1503 = vadd.f32 %v1261, %v1502
        %v1504 = vpop.f32.mrb[0].mxu0
        %v1505 = vadd.f32 %v1265, %v1504
        %v1506 = vpop.f32.mrb[0].mxu0
        %v1507 = vadd.f32 %v1261, %v1506
        %v1508 = vpop.f32.mrb[0].mxu0
        %v1509 = vadd.f32 %v1265, %v1508
        %1510 = vmatprep.mubr.bf16.mxu0 %v1219
        %1511 = vmatmul.mubr.bf16.gmra.mrb[0].mxu0 %v1218
        %v1512 = vpop.f32.mrb[0].mxu0
        %v1513 = vadd.f32 %v1261, %v1512
        %v1514 = vpop.f32.mrb[0].mxu0
        %v1515 = vadd.f32 %v1265, %v1514
        %v1516 = vpop.f32.mrb[0].mxu0
        %v1517 = vadd.f32 %v1261, %v1516
        %v1518 = vpop.f32.mrb[0].mxu0
        %v1519 = vadd.f32 %v1265, %v1518
        %1520 = vmatprep.mubr.bf16.mxu0 %v1221
        %1521 = vmatmul.mubr.bf16.gmra.mrb[0].mxu0 %v1220
        %v1522 = vpop.f32.mrb[0].mxu0
        %v1523 = vadd.f32 %v1261, %v1522
        %v1524 = vpop.f32.mrb[0].mxu0
        %v1525 = vadd.f32 %v1265, %v1524
        %v1526 = vpop.f32.mrb[0].mxu0
        %v1527 = vadd.f32 %v1261, %v1526
        %v1528 = vpop.f32.mrb[0].mxu0
        %v1529 = vadd.f32 %v1265, %v1528
        %1530 = vmatprep.mubr.bf16.mxu0 %v1223
        %1531 = vmatmul.mubr.bf16.gmra.mrb[0].mxu0 %v1222
        %v1532 = vpop.f32.mrb[0].mxu0
        %v1533 = vadd.f32 %v1261, %v1532
        %v1534 = vpop.f32.mrb[0].mxu0
        %v1535 = vadd.f32 %v1265, %v1534
        %v1536 = vpop.f32.mrb[0].mxu0
        %v1537 = vadd.f32 %v1261, %v1536
        %v1538 = vpop.f32.mrb[0].mxu0
        %v1539 = vadd.f32 %v1265, %v1538
        %1540 = vdwg.mxu0
        %v1541 = vmax.f32 %v1463, 0.0
        %v1542 = vmax.f32 %v1465, 0.0
        %v1543 = vmax.f32 %v1467, 0.0
        %v1544 = vmax.f32 %v1469, 0.0
        %v1545 = vmax.f32 %v1473, 0.0
        %v1546 = vmax.f32 %v1475, 0.0
        %v1547 = vmax.f32 %v1477, 0.0
        %v1548 = vmax.f32 %v1479, 0.0
        %v1549 = vmax.f32 %v1483, 0.0
        %v1550 = vmax.f32 %v1485, 0.0
        %v1551 = vmax.f32 %v1487, 0.0
        %v1552 = vmax.f32 %v1489, 0.0
        %v1553 = vmax.f32 %v1493, 0.0
        %v1554 = vmax.f32 %v1495, 0.0
        %v1555 = vmax.f32 %v1497, 0.0
        %v1556 = vmax.f32 %v1499, 0.0
        %v1557 = vmax.f32 %v1503, 0.0
        %v1558 = vmax.f32 %v1505, 0.0
        %v1559 = vmax.f32 %v1507, 0.0
        %v1560 = vmax.f32 %v1509, 0.0
        %v1561 = vmax.f32 %v1513, 0.0
        %v1562 = vmax.f32 %v1515, 0.0
        %v1563 = vmax.f32 %v1517, 0.0
        %v1564 = vmax.f32 %v1519, 0.0
        %v1565 = vmax.f32 %v1523, 0.0
        %v1566 = vmax.f32 %v1525, 0.0
        %v1567 = vmax.f32 %v1527, 0.0
        %v1568 = vmax.f32 %v1529, 0.0
        %v1569 = vmax.f32 %v1533, 0.0
        %v1570 = vmax.f32 %v1535, 0.0
        %v1571 = vmax.f32 %v1537, 0.0
        %v1572 = vmax.f32 %v1539, 0.0
        %v1573 = vpack.c.bf16 %v1543, %v1541
        %v1574 = vpack.c.bf16 %v1544, %v1542
        %v1575 = vpack.c.bf16 %v1547, %v1545
        %v1576 = vpack.c.bf16 %v1548, %v1546
        %v1577 = vpack.c.bf16 %v1551, %v1549
        %v1578 = vpack.c.bf16 %v1552, %v1550
        %v1579 = vpack.c.bf16 %v1555, %v1553
        %v1580 = vpack.c.bf16 %v1556, %v1554
        %v1581 = vpack.c.bf16 %v1559, %v1557
        %v1582 = vpack.c.bf16 %v1560, %v1558
        %v1583 = vpack.c.bf16 %v1563, %v1561
        %v1584 = vpack.c.bf16 %v1564, %v1562
        %v1585 = vpack.c.bf16 %v1567, %v1565
        %v1586 = vpack.c.bf16 %v1568, %v1566
        %v1587 = vpack.c.bf16 %v1571, %v1569
        %v1588 = vpack.c.bf16 %v1572, %v1570
        %v1589 = vld [vmem:[#allocation5] sm:$0xff]
        %v1590 = vld [vmem:[#allocation5 + $0x8] sm:$0xff]
        %v1591 = vld [vmem:[#allocation5 + $0x10] sm:$0xff]
        %v1592 = vld [vmem:[#allocation5 + $0x18] sm:$0xff]
        %v1593 = vld [vmem:[#allocation5 + $0x20] sm:$0xff]
        %v1594 = vld [vmem:[#allocation5 + $0x28] sm:$0xff]
        %v1595 = vld [vmem:[#allocation5 + $0x30] sm:$0xff]
        %v1596 = vld [vmem:[#allocation5 + $0x38] sm:$0xff]
        %v1597 = vld [vmem:[#allocation5 + $0x40] sm:$0xff]
        %v1598 = vld [vmem:[#allocation5 + $0x48] sm:$0xff]
        %v1599 = vld [vmem:[#allocation5 + $0x50] sm:$0xff]
        %v1600 = vld [vmem:[#allocation5 + $0x58] sm:$0xff]
        %v1601 = vld [vmem:[#allocation5 + $0x60] sm:$0xff]
        %v1602 = vld [vmem:[#allocation5 + $0x68] sm:$0xff]
        %v1603 = vld [vmem:[#allocation5 + $0x70] sm:$0xff]
        %v1604 = vld [vmem:[#allocation5 + $0x78] sm:$0xff]
        %v1605 = vld [vmem:[#allocation5 + $0x80] sm:$0xff]
        %v1606 = vld [vmem:[#allocation5 + $0x88] sm:$0xff]
        %v1607 = vld [vmem:[#allocation5 + $0x90] sm:$0xff]
        %v1608 = vld [vmem:[#allocation5 + $0x98] sm:$0xff]
        %v1609 = vld [vmem:[#allocation5 + $0xa0] sm:$0xff]
        %v1610 = vld [vmem:[#allocation5 + $0xa8] sm:$0xff]
        %v1611 = vld [vmem:[#allocation5 + $0xb0] sm:$0xff]
        %v1612 = vld [vmem:[#allocation5 + $0xb8] sm:$0xff]
        %v1613 = vld [vmem:[#allocation5 + $0xc0] sm:$0xff]
        %v1614 = vld [vmem:[#allocation5 + $0xc8] sm:$0xff]
        %v1615 = vld [vmem:[#allocation5 + $0xd0] sm:$0xff]
        %v1616 = vld [vmem:[#allocation5 + $0xd8] sm:$0xff]
        %v1617 = vld [vmem:[#allocation5 + $0xe0] sm:$0xff]
        %v1618 = vld [vmem:[#allocation5 + $0xe8] sm:$0xff]
        %v1619 = vld [vmem:[#allocation5 + $0xf0] sm:$0xff]
        %v1620 = vld [vmem:[#allocation5 + $0xf8] sm:$0xff]
        %v1621 = vld [vmem:[%s8] sm:$0x3]
        %v1623 = vlaneseq
        %v1624 = vshrl.u32 %v1623, 7
        %v1625 = vsub.s32 0, %v1624
        %v1626 = vrot.slane %v1621, %v1625
        %v1627 = vlaneseq
        %v1628 = vshrl.u32 %v1627, 7
        %v1629 = vsub.s32 1, %v1628
        %v1630 = vrot.slane %v1621, %v1629
        %v1665 = vunpack.c.l.b16 %v1589
        %v1666 = vunpack.c.h.b16 %v1589
        %v1667 = vunpack.c.l.b16 %v1590
        %v1668 = vunpack.c.h.b16 %v1590
        %v1669 = vunpack.c.l.b16 %v1591
        %v1670 = vunpack.c.h.b16 %v1591
        %v1671 = vunpack.c.l.b16 %v1592
        %v1672 = vunpack.c.h.b16 %v1592
        %v1673 = vunpack.c.l.b16 %v1593
        %v1674 = vunpack.c.h.b16 %v1593
        %v1675 = vunpack.c.l.b16 %v1594
        %v1676 = vunpack.c.h.b16 %v1594
        %v1677 = vunpack.c.l.b16 %v1595
        %v1678 = vunpack.c.h.b16 %v1595
        %v1679 = vunpack.c.l.b16 %v1596
        %v1680 = vunpack.c.h.b16 %v1596
        %v1681 = vunpack.c.l.b16 %v1597
        %v1682 = vunpack.c.h.b16 %v1597
        %v1683 = vunpack.c.l.b16 %v1598
        %v1684 = vunpack.c.h.b16 %v1598
        %v1685 = vunpack.c.l.b16 %v1599
        %v1686 = vunpack.c.h.b16 %v1599
        %v1687 = vunpack.c.l.b16 %v1600
        %v1688 = vunpack.c.h.b16 %v1600
        %v1689 = vunpack.c.l.b16 %v1601
        %v1690 = vunpack.c.h.b16 %v1601
        %v1691 = vunpack.c.l.b16 %v1602
        %v1692 = vunpack.c.h.b16 %v1602
        %v1693 = vunpack.c.l.b16 %v1603
        %v1694 = vunpack.c.h.b16 %v1603
        %v1695 = vunpack.c.l.b16 %v1604
        %v1696 = vunpack.c.h.b16 %v1604
        %v1697 = vunpack.c.l.b16 %v1605
        %v1698 = vunpack.c.h.b16 %v1605
        %v1699 = vunpack.c.l.b16 %v1606
        %v1700 = vunpack.c.h.b16 %v1606
        %v1701 = vunpack.c.l.b16 %v1607
        %v1702 = vunpack.c.h.b16 %v1607
        %v1703 = vunpack.c.l.b16 %v1608
        %v1704 = vunpack.c.h.b16 %v1608
        %v1705 = vunpack.c.l.b16 %v1609
        %v1706 = vunpack.c.h.b16 %v1609
        %v1707 = vunpack.c.l.b16 %v1610
        %v1708 = vunpack.c.h.b16 %v1610
        %v1709 = vunpack.c.l.b16 %v1611
        %v1710 = vunpack.c.h.b16 %v1611
        %v1711 = vunpack.c.l.b16 %v1612
        %v1712 = vunpack.c.h.b16 %v1612
        %v1713 = vunpack.c.l.b16 %v1613
        %v1714 = vunpack.c.h.b16 %v1613
        %v1715 = vunpack.c.l.b16 %v1614
        %v1716 = vunpack.c.h.b16 %v1614
        %v1717 = vunpack.c.l.b16 %v1615
        %v1718 = vunpack.c.h.b16 %v1615
        %v1719 = vunpack.c.l.b16 %v1616
        %v1720 = vunpack.c.h.b16 %v1616
        %v1721 = vunpack.c.l.b16 %v1617
        %v1722 = vunpack.c.h.b16 %v1617
        %v1723 = vunpack.c.l.b16 %v1618
        %v1724 = vunpack.c.h.b16 %v1618
        %v1725 = vunpack.c.l.b16 %v1619
        %v1726 = vunpack.c.h.b16 %v1619
        %v1727 = vunpack.c.l.b16 %v1620
        %v1728 = vunpack.c.h.b16 %v1620
        %v1729 = vpack.c.b16 %v1667, %v1665
        %v1730 = vpack.c.b16 %v1668, %v1666
        %v1731 = vpack.c.b16 %v1671, %v1669
        %v1732 = vpack.c.b16 %v1672, %v1670
        %v1733 = vpack.c.b16 %v1675, %v1673
        %v1734 = vpack.c.b16 %v1676, %v1674
        %v1735 = vpack.c.b16 %v1679, %v1677
        %v1736 = vpack.c.b16 %v1680, %v1678
        %v1737 = vpack.c.b16 %v1683, %v1681
        %v1738 = vpack.c.b16 %v1684, %v1682
        %v1739 = vpack.c.b16 %v1687, %v1685
        %v1740 = vpack.c.b16 %v1688, %v1686
        %v1741 = vpack.c.b16 %v1691, %v1689
        %v1742 = vpack.c.b16 %v1692, %v1690
        %v1743 = vpack.c.b16 %v1695, %v1693
        %v1744 = vpack.c.b16 %v1696, %v1694
        %v1745 = vpack.c.b16 %v1699, %v1697
        %v1746 = vpack.c.b16 %v1700, %v1698
        %v1747 = vpack.c.b16 %v1703, %v1701
        %v1748 = vpack.c.b16 %v1704, %v1702
        %v1749 = vpack.c.b16 %v1707, %v1705
        %v1750 = vpack.c.b16 %v1708, %v1706
        %v1751 = vpack.c.b16 %v1711, %v1709
        %v1752 = vpack.c.b16 %v1712, %v1710
        %v1753 = vpack.c.b16 %v1715, %v1713
        %v1754 = vpack.c.b16 %v1716, %v1714
        %v1755 = vpack.c.b16 %v1719, %v1717
        %v1756 = vpack.c.b16 %v1720, %v1718
        %v1757 = vpack.c.b16 %v1723, %v1721
        %v1758 = vpack.c.b16 %v1724, %v1722
        %v1759 = vpack.c.b16 %v1727, %v1725
        %v1760 = vpack.c.b16 %v1728, %v1726
        %1793 = vmatprep.subr.bf16.mxu0 %v1730
        %1794 = vmatpush1.bf16.msra.mxu0 %v1729
        %1795 = vmatprep.subr.bf16.mxu0 %v1732
        %1796 = vmatpush1.bf16.msra.mxu0 %v1731
        %1797 = vmatprep.subr.bf16.mxu0 %v1734
        %1798 = vmatpush1.bf16.msra.mxu0 %v1733
        %1799 = vmatprep.subr.bf16.mxu0 %v1736
        %1800 = vmatpush1.bf16.msra.mxu0 %v1735
        %1801 = vmatprep.subr.bf16.mxu0 %v1738
        %1802 = vmatpush1.bf16.msra.mxu0 %v1737
        %1803 = vmatprep.subr.bf16.mxu0 %v1740
        %1804 = vmatpush1.bf16.msra.mxu0 %v1739
        %1805 = vmatprep.subr.bf16.mxu0 %v1742
        %1806 = vmatpush1.bf16.msra.mxu0 %v1741
        %1807 = vmatprep.subr.bf16.mxu0 %v1744
        %1808 = vmatpush1.bf16.msra.mxu0 %v1743
        %1809 = vmatprep.subr.bf16.mxu0 %v1746
        %1810 = vmatpush1.bf16.msra.mxu0 %v1745
        %1811 = vmatprep.subr.bf16.mxu0 %v1748
        %1812 = vmatpush1.bf16.msra.mxu0 %v1747
        %1813 = vmatprep.subr.bf16.mxu0 %v1750
        %1814 = vmatpush1.bf16.msra.mxu0 %v1749
        %1815 = vmatprep.subr.bf16.mxu0 %v1752
        %1816 = vmatpush1.bf16.msra.mxu0 %v1751
        %1817 = vmatprep.subr.bf16.mxu0 %v1754
        %1818 = vmatpush1.bf16.msra.mxu0 %v1753
        %1819 = vmatprep.subr.bf16.mxu0 %v1756
        %1820 = vmatpush1.bf16.msra.mxu0 %v1755
        %1821 = vmatprep.subr.bf16.mxu0 %v1758
        %1822 = vmatpush1.bf16.msra.mxu0 %v1757
        %1823 = vmatprep.subr.bf16.mxu0 %v1760
        %1824 = vmatpush1.bf16.msra.mxu0 %v1759
        %1825 = vmatprep.mubr.bf16.mxu0 %v1574
        %1826 = vmatmul.mubr.bf16.gmra.mrb[0].mxu0 %v1573
        %v1827 = vpop.f32.mrb[0].mxu0
        %v1828 = vadd.f32 %v1626, %v1827
        %v1829 = vpop.f32.mrb[0].mxu0
        %v1830 = vadd.f32 %v1630, %v1829
        %v1831 = vpop.f32.mrb[0].mxu0
        %v1832 = vadd.f32 %v1626, %v1831
        %v1833 = vpop.f32.mrb[0].mxu0
        %v1834 = vadd.f32 %v1630, %v1833
        %1835 = vmatprep.mubr.bf16.mxu0 %v1576
        %1836 = vmatmul.mubr.bf16.gmra.mrb[0].mxu0 %v1575
        %v1837 = vpop.f32.mrb[0].mxu0
        %v1838 = vadd.f32 %v1626, %v1837
        %v1839 = vpop.f32.mrb[0].mxu0
        %v1840 = vadd.f32 %v1630, %v1839
        %v1841 = vpop.f32.mrb[0].mxu0
        %v1842 = vadd.f32 %v1626, %v1841
        %v1843 = vpop.f32.mrb[0].mxu0
        %v1844 = vadd.f32 %v1630, %v1843
        %1845 = vmatprep.mubr.bf16.mxu0 %v1578
        %1846 = vmatmul.mubr.bf16.gmra.mrb[0].mxu0 %v1577
        %v1847 = vpop.f32.mrb[0].mxu0
        %v1848 = vadd.f32 %v1626, %v1847
        %v1849 = vpop.f32.mrb[0].mxu0
        %v1850 = vadd.f32 %v1630, %v1849
        %v1851 = vpop.f32.mrb[0].mxu0
        %v1852 = vadd.f32 %v1626, %v1851
        %v1853 = vpop.f32.mrb[0].mxu0
        %v1854 = vadd.f32 %v1630, %v1853
        %1855 = vmatprep.mubr.bf16.mxu0 %v1580
        %1856 = vmatmul.mubr.bf16.gmra.mrb[0].mxu0 %v1579
        %v1857 = vpop.f32.mrb[0].mxu0
        %v1858 = vadd.f32 %v1626, %v1857
        %v1859 = vpop.f32.mrb[0].mxu0
        %v1860 = vadd.f32 %v1630, %v1859
        %v1861 = vpop.f32.mrb[0].mxu0
        %v1862 = vadd.f32 %v1626, %v1861
        %v1863 = vpop.f32.mrb[0].mxu0
        %v1864 = vadd.f32 %v1630, %v1863
        %1865 = vmatprep.mubr.bf16.mxu0 %v1582
        %1866 = vmatmul.mubr.bf16.gmra.mrb[0].mxu0 %v1581
        %v1867 = vpop.f32.mrb[0].mxu0
        %v1868 = vadd.f32 %v1626, %v1867
        %v1869 = vpop.f32.mrb[0].mxu0
        %v1870 = vadd.f32 %v1630, %v1869
        %v1871 = vpop.f32.mrb[0].mxu0
        %v1872 = vadd.f32 %v1626, %v1871
        %v1873 = vpop.f32.mrb[0].mxu0
        %v1874 = vadd.f32 %v1630, %v1873
        %1875 = vmatprep.mubr.bf16.mxu0 %v1584
        %1876 = vmatmul.mubr.bf16.gmra.mrb[0].mxu0 %v1583
        %v1877 = vpop.f32.mrb[0].mxu0
        %v1878 = vadd.f32 %v1626, %v1877
        %v1879 = vpop.f32.mrb[0].mxu0
        %v1880 = vadd.f32 %v1630, %v1879
        %v1881 = vpop.f32.mrb[0].mxu0
        %v1882 = vadd.f32 %v1626, %v1881
        %v1883 = vpop.f32.mrb[0].mxu0
        %v1884 = vadd.f32 %v1630, %v1883
        %1885 = vmatprep.mubr.bf16.mxu0 %v1586
        %1886 = vmatmul.mubr.bf16.gmra.mrb[0].mxu0 %v1585
        %v1887 = vpop.f32.mrb[0].mxu0
        %v1888 = vadd.f32 %v1626, %v1887
        %v1889 = vpop.f32.mrb[0].mxu0
        %v1890 = vadd.f32 %v1630, %v1889
        %v1891 = vpop.f32.mrb[0].mxu0
        %v1892 = vadd.f32 %v1626, %v1891
        %v1893 = vpop.f32.mrb[0].mxu0
        %v1894 = vadd.f32 %v1630, %v1893
        %1895 = vmatprep.mubr.bf16.mxu0 %v1588
        %1896 = vmatmul.mubr.bf16.gmra.mrb[0].mxu0 %v1587
        %v1897 = vpop.f32.mrb[0].mxu0
        %v1898 = vadd.f32 %v1626, %v1897
        %v1899 = vpop.f32.mrb[0].mxu0
        %v1900 = vadd.f32 %v1630, %v1899
        %v1901 = vpop.f32.mrb[0].mxu0
        %v1902 = vadd.f32 %v1626, %v1901
        %v1903 = vpop.f32.mrb[0].mxu0
        %v1904 = vadd.f32 %v1630, %v1903
        %1905 = vdwg.mxu0
        %v1906 = vmax.f32 %v1828, 0.0
        %v1907 = vmax.f32 %v1830, 0.0
        %v1908 = vmax.f32 %v1832, 0.0
        %v1909 = vmax.f32 %v1834, 0.0
        %v1910 = vmax.f32 %v1838, 0.0
        %v1911 = vmax.f32 %v1840, 0.0
        %v1912 = vmax.f32 %v1842, 0.0
        %v1913 = vmax.f32 %v1844, 0.0
        %v1914 = vmax.f32 %v1848, 0.0
        %v1915 = vmax.f32 %v1850, 0.0
        %v1916 = vmax.f32 %v1852, 0.0
        %v1917 = vmax.f32 %v1854, 0.0
        %v1918 = vmax.f32 %v1858, 0.0
        %v1919 = vmax.f32 %v1860, 0.0
        %v1920 = vmax.f32 %v1862, 0.0
        %v1921 = vmax.f32 %v1864, 0.0
        %v1922 = vmax.f32 %v1868, 0.0
        %v1923 = vmax.f32 %v1870, 0.0
        %v1924 = vmax.f32 %v1872, 0.0
        %v1925 = vmax.f32 %v1874, 0.0
        %v1926 = vmax.f32 %v1878, 0.0
        %v1927 = vmax.f32 %v1880, 0.0
        %v1928 = vmax.f32 %v1882, 0.0
        %v1929 = vmax.f32 %v1884, 0.0
        %v1930 = vmax.f32 %v1888, 0.0
        %v1931 = vmax.f32 %v1890, 0.0
        %v1932 = vmax.f32 %v1892, 0.0
        %v1933 = vmax.f32 %v1894, 0.0
        %v1934 = vmax.f32 %v1898, 0.0
        %v1935 = vmax.f32 %v1900, 0.0
        %v1936 = vmax.f32 %v1902, 0.0
        %v1937 = vmax.f32 %v1904, 0.0
        %v1938 = vpack.c.bf16 %v1908, %v1906
        %v1939 = vpack.c.bf16 %v1909, %v1907
        %v1940 = vpack.c.bf16 %v1912, %v1910
        %v1941 = vpack.c.bf16 %v1913, %v1911
        %v1942 = vpack.c.bf16 %v1916, %v1914
        %v1943 = vpack.c.bf16 %v1917, %v1915
        %v1944 = vpack.c.bf16 %v1920, %v1918
        %v1945 = vpack.c.bf16 %v1921, %v1919
        %v1946 = vpack.c.bf16 %v1924, %v1922
        %v1947 = vpack.c.bf16 %v1925, %v1923
        %v1948 = vpack.c.bf16 %v1928, %v1926
        %v1949 = vpack.c.bf16 %v1929, %v1927
        %v1950 = vpack.c.bf16 %v1932, %v1930
        %v1951 = vpack.c.bf16 %v1933, %v1931
        %v1952 = vpack.c.bf16 %v1936, %v1934
        %v1953 = vpack.c.bf16 %v1937, %v1935
        %v1954 = vld [vmem:[#allocation7] sm:$0xff]
        %v1955 = vld [vmem:[#allocation7 + $0x8] sm:$0xff]
        %v1956 = vld [vmem:[#allocation7 + $0x10] sm:$0xff]
        %v1957 = vld [vmem:[#allocation7 + $0x18] sm:$0xff]
        %v1958 = vld [vmem:[#allocation7 + $0x20] sm:$0xff]
        %v1959 = vld [vmem:[#allocation7 + $0x28] sm:$0xff]
        %v1960 = vld [vmem:[#allocation7 + $0x30] sm:$0xff]
        %v1961 = vld [vmem:[#allocation7 + $0x38] sm:$0xff]
        %v1962 = vld [vmem:[#allocation7 + $0x40] sm:$0xff]
        %v1963 = vld [vmem:[#allocation7 + $0x48] sm:$0xff]
        %v1964 = vld [vmem:[#allocation7 + $0x50] sm:$0xff]
        %v1965 = vld [vmem:[#allocation7 + $0x58] sm:$0xff]
        %v1966 = vld [vmem:[#allocation7 + $0x60] sm:$0xff]
        %v1967 = vld [vmem:[#allocation7 + $0x68] sm:$0xff]
        %v1968 = vld [vmem:[#allocation7 + $0x70] sm:$0xff]
        %v1969 = vld [vmem:[#allocation7 + $0x78] sm:$0xff]
        %v1970 = vld [vmem:[#allocation7 + $0x80] sm:$0xff]
        %v1971 = vld [vmem:[#allocation7 + $0x88] sm:$0xff]
        %v1972 = vld [vmem:[#allocation7 + $0x90] sm:$0xff]
        %v1973 = vld [vmem:[#allocation7 + $0x98] sm:$0xff]
        %v1974 = vld [vmem:[#allocation7 + $0xa0] sm:$0xff]
        %v1975 = vld [vmem:[#allocation7 + $0xa8] sm:$0xff]
        %v1976 = vld [vmem:[#allocation7 + $0xb0] sm:$0xff]
        %v1977 = vld [vmem:[#allocation7 + $0xb8] sm:$0xff]
        %v1978 = vld [vmem:[#allocation7 + $0xc0] sm:$0xff]
        %v1979 = vld [vmem:[#allocation7 + $0xc8] sm:$0xff]
        %v1980 = vld [vmem:[#allocation7 + $0xd0] sm:$0xff]
        %v1981 = vld [vmem:[#allocation7 + $0xd8] sm:$0xff]
        %v1982 = vld [vmem:[#allocation7 + $0xe0] sm:$0xff]
        %v1983 = vld [vmem:[#allocation7 + $0xe8] sm:$0xff]
        %v1984 = vld [vmem:[#allocation7 + $0xf0] sm:$0xff]
        %v1985 = vld [vmem:[#allocation7 + $0xf8] sm:$0xff]
        %v1986 = vld [vmem:[%s10] sm:$0x3]
        %v1988 = vlaneseq
        %v1989 = vshrl.u32 %v1988, 7
        %v1990 = vsub.s32 0, %v1989
        %v1991 = vrot.slane %v1986, %v1990
        %v1992 = vlaneseq
        %v1993 = vshrl.u32 %v1992, 7
        %v1994 = vsub.s32 1, %v1993
        %v1995 = vrot.slane %v1986, %v1994
        %v2030 = vunpack.c.l.b16 %v1954
        %v2031 = vunpack.c.h.b16 %v1954
        %v2032 = vunpack.c.l.b16 %v1955
        %v2033 = vunpack.c.h.b16 %v1955
        %v2034 = vunpack.c.l.b16 %v1956
        %v2035 = vunpack.c.h.b16 %v1956
        %v2036 = vunpack.c.l.b16 %v1957
        %v2037 = vunpack.c.h.b16 %v1957
        %v2038 = vunpack.c.l.b16 %v1958
        %v2039 = vunpack.c.h.b16 %v1958
        %v2040 = vunpack.c.l.b16 %v1959
        %v2041 = vunpack.c.h.b16 %v1959
        %v2042 = vunpack.c.l.b16 %v1960
        %v2043 = vunpack.c.h.b16 %v1960
        %v2044 = vunpack.c.l.b16 %v1961
        %v2045 = vunpack.c.h.b16 %v1961
        %v2046 = vunpack.c.l.b16 %v1962
        %v2047 = vunpack.c.h.b16 %v1962
        %v2048 = vunpack.c.l.b16 %v1963
        %v2049 = vunpack.c.h.b16 %v1963
        %v2050 = vunpack.c.l.b16 %v1964
        %v2051 = vunpack.c.h.b16 %v1964
        %v2052 = vunpack.c.l.b16 %v1965
        %v2053 = vunpack.c.h.b16 %v1965
        %v2054 = vunpack.c.l.b16 %v1966
        %v2055 = vunpack.c.h.b16 %v1966
        %v2056 = vunpack.c.l.b16 %v1967
        %v2057 = vunpack.c.h.b16 %v1967
        %v2058 = vunpack.c.l.b16 %v1968
        %v2059 = vunpack.c.h.b16 %v1968
        %v2060 = vunpack.c.l.b16 %v1969
        %v2061 = vunpack.c.h.b16 %v1969
        %v2062 = vunpack.c.l.b16 %v1970
        %v2063 = vunpack.c.h.b16 %v1970
        %v2064 = vunpack.c.l.b16 %v1971
        %v2065 = vunpack.c.h.b16 %v1971
        %v2066 = vunpack.c.l.b16 %v1972
        %v2067 = vunpack.c.h.b16 %v1972
        %v2068 = vunpack.c.l.b16 %v1973
        %v2069 = vunpack.c.h.b16 %v1973
        %v2070 = vunpack.c.l.b16 %v1974
        %v2071 = vunpack.c.h.b16 %v1974
        %v2072 = vunpack.c.l.b16 %v1975
        %v2073 = vunpack.c.h.b16 %v1975
        %v2074 = vunpack.c.l.b16 %v1976
        %v2075 = vunpack.c.h.b16 %v1976
        %v2076 = vunpack.c.l.b16 %v1977
        %v2077 = vunpack.c.h.b16 %v1977
        %v2078 = vunpack.c.l.b16 %v1978
        %v2079 = vunpack.c.h.b16 %v1978
        %v2080 = vunpack.c.l.b16 %v1979
        %v2081 = vunpack.c.h.b16 %v1979
        %v2082 = vunpack.c.l.b16 %v1980
        %v2083 = vunpack.c.h.b16 %v1980
        %v2084 = vunpack.c.l.b16 %v1981
        %v2085 = vunpack.c.h.b16 %v1981
        %v2086 = vunpack.c.l.b16 %v1982
        %v2087 = vunpack.c.h.b16 %v1982
        %v2088 = vunpack.c.l.b16 %v1983
        %v2089 = vunpack.c.h.b16 %v1983
        %v2090 = vunpack.c.l.b16 %v1984
        %v2091 = vunpack.c.h.b16 %v1984
        %v2092 = vunpack.c.l.b16 %v1985
        %v2093 = vunpack.c.h.b16 %v1985
        %v2094 = vpack.c.b16 %v2032, %v2030
        %v2095 = vpack.c.b16 %v2033, %v2031
        %v2096 = vpack.c.b16 %v2036, %v2034
        %v2097 = vpack.c.b16 %v2037, %v2035
        %v2098 = vpack.c.b16 %v2040, %v2038
        %v2099 = vpack.c.b16 %v2041, %v2039
        %v2100 = vpack.c.b16 %v2044, %v2042
        %v2101 = vpack.c.b16 %v2045, %v2043
        %v2102 = vpack.c.b16 %v2048, %v2046
        %v2103 = vpack.c.b16 %v2049, %v2047
        %v2104 = vpack.c.b16 %v2052, %v2050
        %v2105 = vpack.c.b16 %v2053, %v2051
        %v2106 = vpack.c.b16 %v2056, %v2054
        %v2107 = vpack.c.b16 %v2057, %v2055
        %v2108 = vpack.c.b16 %v2060, %v2058
        %v2109 = vpack.c.b16 %v2061, %v2059
        %v2110 = vpack.c.b16 %v2064, %v2062
        %v2111 = vpack.c.b16 %v2065, %v2063
        %v2112 = vpack.c.b16 %v2068, %v2066
        %v2113 = vpack.c.b16 %v2069, %v2067
        %v2114 = vpack.c.b16 %v2072, %v2070
        %v2115 = vpack.c.b16 %v2073, %v2071
        %v2116 = vpack.c.b16 %v2076, %v2074
        %v2117 = vpack.c.b16 %v2077, %v2075
        %v2118 = vpack.c.b16 %v2080, %v2078
        %v2119 = vpack.c.b16 %v2081, %v2079
        %v2120 = vpack.c.b16 %v2084, %v2082
        %v2121 = vpack.c.b16 %v2085, %v2083
        %v2122 = vpack.c.b16 %v2088, %v2086
        %v2123 = vpack.c.b16 %v2089, %v2087
        %v2124 = vpack.c.b16 %v2092, %v2090
        %v2125 = vpack.c.b16 %v2093, %v2091
        %2158 = vmatprep.subr.bf16.mxu0 %v2095
        %2159 = vmatpush1.bf16.msra.mxu0 %v2094
        %2160 = vmatprep.subr.bf16.mxu0 %v2097
        %2161 = vmatpush1.bf16.msra.mxu0 %v2096
        %2162 = vmatprep.subr.bf16.mxu0 %v2099
        %2163 = vmatpush1.bf16.msra.mxu0 %v2098
        %2164 = vmatprep.subr.bf16.mxu0 %v2101
        %2165 = vmatpush1.bf16.msra.mxu0 %v2100
        %2166 = vmatprep.subr.bf16.mxu0 %v2103
        %2167 = vmatpush1.bf16.msra.mxu0 %v2102
        %2168 = vmatprep.subr.bf16.mxu0 %v2105
        %2169 = vmatpush1.bf16.msra.mxu0 %v2104
        %2170 = vmatprep.subr.bf16.mxu0 %v2107
        %2171 = vmatpush1.bf16.msra.mxu0 %v2106
        %2172 = vmatprep.subr.bf16.mxu0 %v2109
        %2173 = vmatpush1.bf16.msra.mxu0 %v2108
        %2174 = vmatprep.subr.bf16.mxu0 %v2111
        %2175 = vmatpush1.bf16.msra.mxu0 %v2110
        %2176 = vmatprep.subr.bf16.mxu0 %v2113
        %2177 = vmatpush1.bf16.msra.mxu0 %v2112
        %2178 = vmatprep.subr.bf16.mxu0 %v2115
        %2179 = vmatpush1.bf16.msra.mxu0 %v2114
        %2180 = vmatprep.subr.bf16.mxu0 %v2117
        %2181 = vmatpush1.bf16.msra.mxu0 %v2116
        %2182 = vmatprep.subr.bf16.mxu0 %v2119
        %2183 = vmatpush1.bf16.msra.mxu0 %v2118
        %2184 = vmatprep.subr.bf16.mxu0 %v2121
        %2185 = vmatpush1.bf16.msra.mxu0 %v2120
        %2186 = vmatprep.subr.bf16.mxu0 %v2123
        %2187 = vmatpush1.bf16.msra.mxu0 %v2122
        %2188 = vmatprep.subr.bf16.mxu0 %v2125
        %2189 = vmatpush1.bf16.msra.mxu0 %v2124
        %2190 = vmatprep.mubr.bf16.mxu0 %v1939
        %2191 = vmatmul.mubr.bf16.gmra.mrb[0].mxu0 %v1938
        %v2192 = vpop.f32.mrb[0].mxu0
        %v2193 = vadd.f32 %v1991, %v2192
        %v2194 = vpop.f32.mrb[0].mxu0
        %v2195 = vadd.f32 %v1995, %v2194
        %v2196 = vpop.f32.mrb[0].mxu0
        %v2197 = vadd.f32 %v1991, %v2196
        %v2198 = vpop.f32.mrb[0].mxu0
        %v2199 = vadd.f32 %v1995, %v2198
        %2200 = vmatprep.mubr.bf16.mxu0 %v1941
        %2201 = vmatmul.mubr.bf16.gmra.mrb[0].mxu0 %v1940
        %v2202 = vpop.f32.mrb[0].mxu0
        %v2203 = vadd.f32 %v1991, %v2202
        %v2204 = vpop.f32.mrb[0].mxu0
        %v2205 = vadd.f32 %v1995, %v2204
        %v2206 = vpop.f32.mrb[0].mxu0
        %v2207 = vadd.f32 %v1991, %v2206
        %v2208 = vpop.f32.mrb[0].mxu0
        %v2209 = vadd.f32 %v1995, %v2208
        %2210 = vmatprep.mubr.bf16.mxu0 %v1943
        %2211 = vmatmul.mubr.bf16.gmra.mrb[0].mxu0 %v1942
        %v2212 = vpop.f32.mrb[0].mxu0
        %v2213 = vadd.f32 %v1991, %v2212
        %v2214 = vpop.f32.mrb[0].mxu0
        %v2215 = vadd.f32 %v1995, %v2214
        %v2216 = vpop.f32.mrb[0].mxu0
        %v2217 = vadd.f32 %v1991, %v2216
        %v2218 = vpop.f32.mrb[0].mxu0
        %v2219 = vadd.f32 %v1995, %v2218
        %2220 = vmatprep.mubr.bf16.mxu0 %v1945
        %2221 = vmatmul.mubr.bf16.gmra.mrb[0].mxu0 %v1944
        %v2222 = vpop.f32.mrb[0].mxu0
        %v2223 = vadd.f32 %v1991, %v2222
        %v2224 = vpop.f32.mrb[0].mxu0
        %v2225 = vadd.f32 %v1995, %v2224
        %v2226 = vpop.f32.mrb[0].mxu0
        %v2227 = vadd.f32 %v1991, %v2226
        %v2228 = vpop.f32.mrb[0].mxu0
        %v2229 = vadd.f32 %v1995, %v2228
        %2230 = vmatprep.mubr.bf16.mxu0 %v1947
        %2231 = vmatmul.mubr.bf16.gmra.mrb[0].mxu0 %v1946
        %v2232 = vpop.f32.mrb[0].mxu0
        %v2233 = vadd.f32 %v1991, %v2232
        %v2234 = vpop.f32.mrb[0].mxu0
        %v2235 = vadd.f32 %v1995, %v2234
        %v2236 = vpop.f32.mrb[0].mxu0
        %v2237 = vadd.f32 %v1991, %v2236
        %v2238 = vpop.f32.mrb[0].mxu0
        %v2239 = vadd.f32 %v1995, %v2238
        %2240 = vmatprep.mubr.bf16.mxu0 %v1949
        %2241 = vmatmul.mubr.bf16.gmra.mrb[0].mxu0 %v1948
        %v2242 = vpop.f32.mrb[0].mxu0
        %v2243 = vadd.f32 %v1991, %v2242
        %v2244 = vpop.f32.mrb[0].mxu0
        %v2245 = vadd.f32 %v1995, %v2244
        %v2246 = vpop.f32.mrb[0].mxu0
        %v2247 = vadd.f32 %v1991, %v2246
        %v2248 = vpop.f32.mrb[0].mxu0
        %v2249 = vadd.f32 %v1995, %v2248
        %2250 = vmatprep.mubr.bf16.mxu0 %v1951
        %2251 = vmatmul.mubr.bf16.gmra.mrb[0].mxu0 %v1950
        %v2252 = vpop.f32.mrb[0].mxu0
        %v2253 = vadd.f32 %v1991, %v2252
        %v2254 = vpop.f32.mrb[0].mxu0
        %v2255 = vadd.f32 %v1995, %v2254
        %v2256 = vpop.f32.mrb[0].mxu0
        %v2257 = vadd.f32 %v1991, %v2256
        %v2258 = vpop.f32.mrb[0].mxu0
        %v2259 = vadd.f32 %v1995, %v2258
        %2260 = vmatprep.mubr.bf16.mxu0 %v1953
        %2261 = vmatmul.mubr.bf16.gmra.mrb[0].mxu0 %v1952
        %v2262 = vpop.f32.mrb[0].mxu0
        %v2263 = vadd.f32 %v1991, %v2262
        %v2264 = vpop.f32.mrb[0].mxu0
        %v2265 = vadd.f32 %v1995, %v2264
        %v2266 = vpop.f32.mrb[0].mxu0
        %v2267 = vadd.f32 %v1991, %v2266
        %v2268 = vpop.f32.mrb[0].mxu0
        %v2269 = vadd.f32 %v1995, %v2268
        %2270 = vdwg.mxu0
        %v2271 = vmax.f32 %v2193, 0.0
        %v2272 = vmax.f32 %v2195, 0.0
        %v2273 = vmax.f32 %v2197, 0.0
        %v2274 = vmax.f32 %v2199, 0.0
        %v2275 = vmax.f32 %v2203, 0.0
        %v2276 = vmax.f32 %v2205, 0.0
        %v2277 = vmax.f32 %v2207, 0.0
        %v2278 = vmax.f32 %v2209, 0.0
        %v2279 = vmax.f32 %v2213, 0.0
        %v2280 = vmax.f32 %v2215, 0.0
        %v2281 = vmax.f32 %v2217, 0.0
        %v2282 = vmax.f32 %v2219, 0.0
        %v2283 = vmax.f32 %v2223, 0.0
        %v2284 = vmax.f32 %v2225, 0.0
        %v2285 = vmax.f32 %v2227, 0.0
        %v2286 = vmax.f32 %v2229, 0.0
        %v2287 = vmax.f32 %v2233, 0.0
        %v2288 = vmax.f32 %v2235, 0.0
        %v2289 = vmax.f32 %v2237, 0.0
        %v2290 = vmax.f32 %v2239, 0.0
        %v2291 = vmax.f32 %v2243, 0.0
        %v2292 = vmax.f32 %v2245, 0.0
        %v2293 = vmax.f32 %v2247, 0.0
        %v2294 = vmax.f32 %v2249, 0.0
        %v2295 = vmax.f32 %v2253, 0.0
        %v2296 = vmax.f32 %v2255, 0.0
        %v2297 = vmax.f32 %v2257, 0.0
        %v2298 = vmax.f32 %v2259, 0.0
        %v2299 = vmax.f32 %v2263, 0.0
        %v2300 = vmax.f32 %v2265, 0.0
        %v2301 = vmax.f32 %v2267, 0.0
        %v2302 = vmax.f32 %v2269, 0.0
        %v2303 = vpack.c.bf16 %v2273, %v2271
        %v2304 = vpack.c.bf16 %v2274, %v2272
        %v2305 = vpack.c.bf16 %v2277, %v2275
        %v2306 = vpack.c.bf16 %v2278, %v2276
        %v2307 = vpack.c.bf16 %v2281, %v2279
        %v2308 = vpack.c.bf16 %v2282, %v2280
        %v2309 = vpack.c.bf16 %v2285, %v2283
        %v2310 = vpack.c.bf16 %v2286, %v2284
        %v2311 = vpack.c.bf16 %v2289, %v2287
        %v2312 = vpack.c.bf16 %v2290, %v2288
        %v2313 = vpack.c.bf16 %v2293, %v2291
        %v2314 = vpack.c.bf16 %v2294, %v2292
        %v2315 = vpack.c.bf16 %v2297, %v2295
        %v2316 = vpack.c.bf16 %v2298, %v2296
        %v2317 = vpack.c.bf16 %v2301, %v2299
        %v2318 = vpack.c.bf16 %v2302, %v2300
        %v2319 = vld [vmem:[#allocation8] sm:$0xff]
        %v2320 = vld [vmem:[#allocation8 + $0x8] sm:$0xff]
        %v2321 = vld [vmem:[#allocation8 + $0x10] sm:$0xff]
        %v2322 = vld [vmem:[#allocation8 + $0x18] sm:$0xff]
        %v2323 = vld [vmem:[#allocation8 + $0x20] sm:$0xff]
        %v2324 = vld [vmem:[#allocation8 + $0x28] sm:$0xff]
        %v2325 = vld [vmem:[#allocation8 + $0x30] sm:$0xff]
        %v2326 = vld [vmem:[#allocation8 + $0x38] sm:$0xff]
        %v2327 = vld [vmem:[#allocation8 + $0x40] sm:$0xff]
        %v2328 = vld [vmem:[#allocation8 + $0x48] sm:$0xff]
        %v2329 = vld [vmem:[#allocation8 + $0x50] sm:$0xff]
        %v2330 = vld [vmem:[#allocation8 + $0x58] sm:$0xff]
        %v2331 = vld [vmem:[#allocation8 + $0x60] sm:$0xff]
        %v2332 = vld [vmem:[#allocation8 + $0x68] sm:$0xff]
        %v2333 = vld [vmem:[#allocation8 + $0x70] sm:$0xff]
        %v2334 = vld [vmem:[#allocation8 + $0x78] sm:$0xff]
        %v2335 = vld [vmem:[#allocation8 + $0x80] sm:$0xff]
        %v2336 = vld [vmem:[#allocation8 + $0x88] sm:$0xff]
        %v2337 = vld [vmem:[#allocation8 + $0x90] sm:$0xff]
        %v2338 = vld [vmem:[#allocation8 + $0x98] sm:$0xff]
        %v2339 = vld [vmem:[#allocation8 + $0xa0] sm:$0xff]
        %v2340 = vld [vmem:[#allocation8 + $0xa8] sm:$0xff]
        %v2341 = vld [vmem:[#allocation8 + $0xb0] sm:$0xff]
        %v2342 = vld [vmem:[#allocation8 + $0xb8] sm:$0xff]
        %v2343 = vld [vmem:[#allocation8 + $0xc0] sm:$0xff]
        %v2344 = vld [vmem:[#allocation8 + $0xc8] sm:$0xff]
        %v2345 = vld [vmem:[#allocation8 + $0xd0] sm:$0xff]
        %v2346 = vld [vmem:[#allocation8 + $0xd8] sm:$0xff]
        %v2347 = vld [vmem:[#allocation8 + $0xe0] sm:$0xff]
        %v2348 = vld [vmem:[#allocation8 + $0xe8] sm:$0xff]
        %v2349 = vld [vmem:[#allocation8 + $0xf0] sm:$0xff]
        %v2350 = vld [vmem:[#allocation8 + $0xf8] sm:$0xff]
        %v2351 = vld [vmem:[%s12] sm:$0x3]
        %v2353 = vlaneseq
        %v2354 = vshrl.u32 %v2353, 7
        %v2355 = vsub.s32 0, %v2354
        %v2356 = vrot.slane %v2351, %v2355
        %v2357 = vlaneseq
        %v2358 = vshrl.u32 %v2357, 7
        %v2359 = vsub.s32 1, %v2358
        %v2360 = vrot.slane %v2351, %v2359
        %v2395 = vunpack.c.l.b16 %v2319
        %v2396 = vunpack.c.h.b16 %v2319
        %v2397 = vunpack.c.l.b16 %v2320
        %v2398 = vunpack.c.h.b16 %v2320
        %v2399 = vunpack.c.l.b16 %v2321
        %v2400 = vunpack.c.h.b16 %v2321
        %v2401 = vunpack.c.l.b16 %v2322
        %v2402 = vunpack.c.h.b16 %v2322
        %v2403 = vunpack.c.l.b16 %v2323
        %v2404 = vunpack.c.h.b16 %v2323
        %v2405 = vunpack.c.l.b16 %v2324
        %v2406 = vunpack.c.h.b16 %v2324
        %v2407 = vunpack.c.l.b16 %v2325
        %v2408 = vunpack.c.h.b16 %v2325
        %v2409 = vunpack.c.l.b16 %v2326
        %v2410 = vunpack.c.h.b16 %v2326
        %v2411 = vunpack.c.l.b16 %v2327
        %v2412 = vunpack.c.h.b16 %v2327
        %v2413 = vunpack.c.l.b16 %v2328
        %v2414 = vunpack.c.h.b16 %v2328
        %v2415 = vunpack.c.l.b16 %v2329
        %v2416 = vunpack.c.h.b16 %v2329
        %v2417 = vunpack.c.l.b16 %v2330
        %v2418 = vunpack.c.h.b16 %v2330
        %v2419 = vunpack.c.l.b16 %v2331
        %v2420 = vunpack.c.h.b16 %v2331
        %v2421 = vunpack.c.l.b16 %v2332
        %v2422 = vunpack.c.h.b16 %v2332
        %v2423 = vunpack.c.l.b16 %v2333
        %v2424 = vunpack.c.h.b16 %v2333
        %v2425 = vunpack.c.l.b16 %v2334
        %v2426 = vunpack.c.h.b16 %v2334
        %v2427 = vunpack.c.l.b16 %v2335
        %v2428 = vunpack.c.h.b16 %v2335
        %v2429 = vunpack.c.l.b16 %v2336
        %v2430 = vunpack.c.h.b16 %v2336
        %v2431 = vunpack.c.l.b16 %v2337
        %v2432 = vunpack.c.h.b16 %v2337
        %v2433 = vunpack.c.l.b16 %v2338
        %v2434 = vunpack.c.h.b16 %v2338
        %v2435 = vunpack.c.l.b16 %v2339
        %v2436 = vunpack.c.h.b16 %v2339
        %v2437 = vunpack.c.l.b16 %v2340
        %v2438 = vunpack.c.h.b16 %v2340
        %v2439 = vunpack.c.l.b16 %v2341
        %v2440 = vunpack.c.h.b16 %v2341
        %v2441 = vunpack.c.l.b16 %v2342
        %v2442 = vunpack.c.h.b16 %v2342
        %v2443 = vunpack.c.l.b16 %v2343
        %v2444 = vunpack.c.h.b16 %v2343
        %v2445 = vunpack.c.l.b16 %v2344
        %v2446 = vunpack.c.h.b16 %v2344
        %v2447 = vunpack.c.l.b16 %v2345
        %v2448 = vunpack.c.h.b16 %v2345
        %v2449 = vunpack.c.l.b16 %v2346
        %v2450 = vunpack.c.h.b16 %v2346
        %v2451 = vunpack.c.l.b16 %v2347
        %v2452 = vunpack.c.h.b16 %v2347
        %v2453 = vunpack.c.l.b16 %v2348
        %v2454 = vunpack.c.h.b16 %v2348
        %v2455 = vunpack.c.l.b16 %v2349
        %v2456 = vunpack.c.h.b16 %v2349
        %v2457 = vunpack.c.l.b16 %v2350
        %v2458 = vunpack.c.h.b16 %v2350
        %v2459 = vpack.c.b16 %v2397, %v2395
        %v2460 = vpack.c.b16 %v2398, %v2396
        %v2461 = vpack.c.b16 %v2401, %v2399
        %v2462 = vpack.c.b16 %v2402, %v2400
        %v2463 = vpack.c.b16 %v2405, %v2403
        %v2464 = vpack.c.b16 %v2406, %v2404
        %v2465 = vpack.c.b16 %v2409, %v2407
        %v2466 = vpack.c.b16 %v2410, %v2408
        %v2467 = vpack.c.b16 %v2413, %v2411
        %v2468 = vpack.c.b16 %v2414, %v2412
        %v2469 = vpack.c.b16 %v2417, %v2415
        %v2470 = vpack.c.b16 %v2418, %v2416
        %v2471 = vpack.c.b16 %v2421, %v2419
        %v2472 = vpack.c.b16 %v2422, %v2420
        %v2473 = vpack.c.b16 %v2425, %v2423
        %v2474 = vpack.c.b16 %v2426, %v2424
        %v2475 = vpack.c.b16 %v2429, %v2427
        %v2476 = vpack.c.b16 %v2430, %v2428
        %v2477 = vpack.c.b16 %v2433, %v2431
        %v2478 = vpack.c.b16 %v2434, %v2432
        %v2479 = vpack.c.b16 %v2437, %v2435
        %v2480 = vpack.c.b16 %v2438, %v2436
        %v2481 = vpack.c.b16 %v2441, %v2439
        %v2482 = vpack.c.b16 %v2442, %v2440
        %v2483 = vpack.c.b16 %v2445, %v2443
        %v2484 = vpack.c.b16 %v2446, %v2444
        %v2485 = vpack.c.b16 %v2449, %v2447
        %v2486 = vpack.c.b16 %v2450, %v2448
        %v2487 = vpack.c.b16 %v2453, %v2451
        %v2488 = vpack.c.b16 %v2454, %v2452
        %v2489 = vpack.c.b16 %v2457, %v2455
        %v2490 = vpack.c.b16 %v2458, %v2456
        %2523 = vmatprep.subr.bf16.mxu0 %v2460
        %2524 = vmatpush1.bf16.msra.mxu0 %v2459
        %2525 = vmatprep.subr.bf16.mxu0 %v2462
        %2526 = vmatpush1.bf16.msra.mxu0 %v2461
        %2527 = vmatprep.subr.bf16.mxu0 %v2464
        %2528 = vmatpush1.bf16.msra.mxu0 %v2463
        %2529 = vmatprep.subr.bf16.mxu0 %v2466
        %2530 = vmatpush1.bf16.msra.mxu0 %v2465
        %2531 = vmatprep.subr.bf16.mxu0 %v2468
        %2532 = vmatpush1.bf16.msra.mxu0 %v2467
        %2533 = vmatprep.subr.bf16.mxu0 %v2470
        %2534 = vmatpush1.bf16.msra.mxu0 %v2469
        %2535 = vmatprep.subr.bf16.mxu0 %v2472
        %2536 = vmatpush1.bf16.msra.mxu0 %v2471
        %2537 = vmatprep.subr.bf16.mxu0 %v2474
        %2538 = vmatpush1.bf16.msra.mxu0 %v2473
        %2539 = vmatprep.subr.bf16.mxu0 %v2476
        %2540 = vmatpush1.bf16.msra.mxu0 %v2475
        %2541 = vmatprep.subr.bf16.mxu0 %v2478
        %2542 = vmatpush1.bf16.msra.mxu0 %v2477
        %2543 = vmatprep.subr.bf16.mxu0 %v2480
        %2544 = vmatpush1.bf16.msra.mxu0 %v2479
        %2545 = vmatprep.subr.bf16.mxu0 %v2482
        %2546 = vmatpush1.bf16.msra.mxu0 %v2481
        %2547 = vmatprep.subr.bf16.mxu0 %v2484
        %2548 = vmatpush1.bf16.msra.mxu0 %v2483
        %2549 = vmatprep.subr.bf16.mxu0 %v2486
        %2550 = vmatpush1.bf16.msra.mxu0 %v2485
        %2551 = vmatprep.subr.bf16.mxu0 %v2488
        %2552 = vmatpush1.bf16.msra.mxu0 %v2487
        %2553 = vmatprep.subr.bf16.mxu0 %v2490
        %2554 = vmatpush1.bf16.msra.mxu0 %v2489
        %2555 = vmatprep.mubr.bf16.mxu0 %v2304
        %2556 = vmatmul.mubr.bf16.gmra.mrb[0].mxu0 %v2303
        %v2557 = vpop.f32.mrb[0].mxu0
        %v2558 = vadd.f32 %v2356, %v2557
        %v2559 = vpop.f32.mrb[0].mxu0
        %v2560 = vadd.f32 %v2360, %v2559
        %v2561 = vpop.f32.mrb[0].mxu0
        %v2562 = vadd.f32 %v2356, %v2561
        %v2563 = vpop.f32.mrb[0].mxu0
        %v2564 = vadd.f32 %v2360, %v2563
        %2565 = vmatprep.mubr.bf16.mxu0 %v2306
        %2566 = vmatmul.mubr.bf16.gmra.mrb[0].mxu0 %v2305
        %v2567 = vpop.f32.mrb[0].mxu0
        %v2568 = vadd.f32 %v2356, %v2567
        %v2569 = vpop.f32.mrb[0].mxu0
        %v2570 = vadd.f32 %v2360, %v2569
        %v2571 = vpop.f32.mrb[0].mxu0
        %v2572 = vadd.f32 %v2356, %v2571
        %v2573 = vpop.f32.mrb[0].mxu0
        %v2574 = vadd.f32 %v2360, %v2573
        %2575 = vmatprep.mubr.bf16.mxu0 %v2308
        %2576 = vmatmul.mubr.bf16.gmra.mrb[0].mxu0 %v2307
        %v2577 = vpop.f32.mrb[0].mxu0
        %v2578 = vadd.f32 %v2356, %v2577
        %v2579 = vpop.f32.mrb[0].mxu0
        %v2580 = vadd.f32 %v2360, %v2579
        %v2581 = vpop.f32.mrb[0].mxu0
        %v2582 = vadd.f32 %v2356, %v2581
        %v2583 = vpop.f32.mrb[0].mxu0
        %v2584 = vadd.f32 %v2360, %v2583
        %2585 = vmatprep.mubr.bf16.mxu0 %v2310
        %2586 = vmatmul.mubr.bf16.gmra.mrb[0].mxu0 %v2309
        %v2587 = vpop.f32.mrb[0].mxu0
        %v2588 = vadd.f32 %v2356, %v2587
        %v2589 = vpop.f32.mrb[0].mxu0
        %v2590 = vadd.f32 %v2360, %v2589
        %v2591 = vpop.f32.mrb[0].mxu0
        %v2592 = vadd.f32 %v2356, %v2591
        %v2593 = vpop.f32.mrb[0].mxu0
        %v2594 = vadd.f32 %v2360, %v2593
        %2595 = vmatprep.mubr.bf16.mxu0 %v2312
        %2596 = vmatmul.mubr.bf16.gmra.mrb[0].mxu0 %v2311
        %v2597 = vpop.f32.mrb[0].mxu0
        %v2598 = vadd.f32 %v2356, %v2597
        %v2599 = vpop.f32.mrb[0].mxu0
        %v2600 = vadd.f32 %v2360, %v2599
        %v2601 = vpop.f32.mrb[0].mxu0
        %v2602 = vadd.f32 %v2356, %v2601
        %v2603 = vpop.f32.mrb[0].mxu0
        %v2604 = vadd.f32 %v2360, %v2603
        %2605 = vmatprep.mubr.bf16.mxu0 %v2314
        %2606 = vmatmul.mubr.bf16.gmra.mrb[0].mxu0 %v2313
        %v2607 = vpop.f32.mrb[0].mxu0
        %v2608 = vadd.f32 %v2356, %v2607
        %v2609 = vpop.f32.mrb[0].mxu0
        %v2610 = vadd.f32 %v2360, %v2609
        %v2611 = vpop.f32.mrb[0].mxu0
        %v2612 = vadd.f32 %v2356, %v2611
        %v2613 = vpop.f32.mrb[0].mxu0
        %v2614 = vadd.f32 %v2360, %v2613
        %2615 = vmatprep.mubr.bf16.mxu0 %v2316
        %2616 = vmatmul.mubr.bf16.gmra.mrb[0].mxu0 %v2315
        %v2617 = vpop.f32.mrb[0].mxu0
        %v2618 = vadd.f32 %v2356, %v2617
        %v2619 = vpop.f32.mrb[0].mxu0
        %v2620 = vadd.f32 %v2360, %v2619
        %v2621 = vpop.f32.mrb[0].mxu0
        %v2622 = vadd.f32 %v2356, %v2621
        %v2623 = vpop.f32.mrb[0].mxu0
        %v2624 = vadd.f32 %v2360, %v2623
        %2625 = vmatprep.mubr.bf16.mxu0 %v2318
        %2626 = vmatmul.mubr.bf16.gmra.mrb[0].mxu0 %v2317
        %v2627 = vpop.f32.mrb[0].mxu0
        %v2628 = vadd.f32 %v2356, %v2627
        %v2629 = vpop.f32.mrb[0].mxu0
        %v2630 = vadd.f32 %v2360, %v2629
        %v2631 = vpop.f32.mrb[0].mxu0
        %v2632 = vadd.f32 %v2356, %v2631
        %v2633 = vpop.f32.mrb[0].mxu0
        %v2634 = vadd.f32 %v2360, %v2633
        %2635 = vdwg.mxu0
        %v2636 = vmax.f32 %v2558, 0.0
        %v2637 = vmax.f32 %v2560, 0.0
        %v2638 = vmax.f32 %v2562, 0.0
        %v2639 = vmax.f32 %v2564, 0.0
        %v2640 = vmax.f32 %v2568, 0.0
        %v2641 = vmax.f32 %v2570, 0.0
        %v2642 = vmax.f32 %v2572, 0.0
        %v2643 = vmax.f32 %v2574, 0.0
        %v2644 = vmax.f32 %v2578, 0.0
        %v2645 = vmax.f32 %v2580, 0.0
        %v2646 = vmax.f32 %v2582, 0.0
        %v2647 = vmax.f32 %v2584, 0.0
        %v2648 = vmax.f32 %v2588, 0.0
        %v2649 = vmax.f32 %v2590, 0.0
        %v2650 = vmax.f32 %v2592, 0.0
        %v2651 = vmax.f32 %v2594, 0.0
        %v2652 = vmax.f32 %v2598, 0.0
        %v2653 = vmax.f32 %v2600, 0.0
        %v2654 = vmax.f32 %v2602, 0.0
        %v2655 = vmax.f32 %v2604, 0.0
        %v2656 = vmax.f32 %v2608, 0.0
        %v2657 = vmax.f32 %v2610, 0.0
        %v2658 = vmax.f32 %v2612, 0.0
        %v2659 = vmax.f32 %v2614, 0.0
        %v2660 = vmax.f32 %v2618, 0.0
        %v2661 = vmax.f32 %v2620, 0.0
        %v2662 = vmax.f32 %v2622, 0.0
        %v2663 = vmax.f32 %v2624, 0.0
        %v2664 = vmax.f32 %v2628, 0.0
        %v2665 = vmax.f32 %v2630, 0.0
        %v2666 = vmax.f32 %v2632, 0.0
        %v2667 = vmax.f32 %v2634, 0.0
        %v2668 = vpack.c.bf16 %v2638, %v2636
        %v2669 = vpack.c.bf16 %v2639, %v2637
        %v2670 = vpack.c.bf16 %v2642, %v2640
        %v2671 = vpack.c.bf16 %v2643, %v2641
        %v2672 = vpack.c.bf16 %v2646, %v2644
        %v2673 = vpack.c.bf16 %v2647, %v2645
        %v2674 = vpack.c.bf16 %v2650, %v2648
        %v2675 = vpack.c.bf16 %v2651, %v2649
        %v2676 = vpack.c.bf16 %v2654, %v2652
        %v2677 = vpack.c.bf16 %v2655, %v2653
        %v2678 = vpack.c.bf16 %v2658, %v2656
        %v2679 = vpack.c.bf16 %v2659, %v2657
        %v2680 = vpack.c.bf16 %v2662, %v2660
        %v2681 = vpack.c.bf16 %v2663, %v2661
        %v2682 = vpack.c.bf16 %v2666, %v2664
        %v2683 = vpack.c.bf16 %v2667, %v2665
        %v2684 = vld [vmem:[#allocation10] sm:$0xff]
        %v2685 = vld [vmem:[#allocation10 + $0x8] sm:$0xff]
        %v2686 = vld [vmem:[#allocation10 + $0x10] sm:$0xff]
        %v2687 = vld [vmem:[#allocation10 + $0x18] sm:$0xff]
        %v2688 = vld [vmem:[#allocation10 + $0x20] sm:$0xff]
        %v2689 = vld [vmem:[#allocation10 + $0x28] sm:$0xff]
        %v2690 = vld [vmem:[#allocation10 + $0x30] sm:$0xff]
        %v2691 = vld [vmem:[#allocation10 + $0x38] sm:$0xff]
        %v2692 = vld [vmem:[#allocation10 + $0x40] sm:$0xff]
        %v2693 = vld [vmem:[#allocation10 + $0x48] sm:$0xff]
        %v2694 = vld [vmem:[#allocation10 + $0x50] sm:$0xff]
        %v2695 = vld [vmem:[#allocation10 + $0x58] sm:$0xff]
        %v2696 = vld [vmem:[#allocation10 + $0x60] sm:$0xff]
        %v2697 = vld [vmem:[#allocation10 + $0x68] sm:$0xff]
        %v2698 = vld [vmem:[#allocation10 + $0x70] sm:$0xff]
        %v2699 = vld [vmem:[#allocation10 + $0x78] sm:$0xff]
        %v2700 = vld [vmem:[#allocation10 + $0x80] sm:$0xff]
        %v2701 = vld [vmem:[#allocation10 + $0x88] sm:$0xff]
        %v2702 = vld [vmem:[#allocation10 + $0x90] sm:$0xff]
        %v2703 = vld [vmem:[#allocation10 + $0x98] sm:$0xff]
        %v2704 = vld [vmem:[#allocation10 + $0xa0] sm:$0xff]
        %v2705 = vld [vmem:[#allocation10 + $0xa8] sm:$0xff]
        %v2706 = vld [vmem:[#allocation10 + $0xb0] sm:$0xff]
        %v2707 = vld [vmem:[#allocation10 + $0xb8] sm:$0xff]
        %v2708 = vld [vmem:[#allocation10 + $0xc0] sm:$0xff]
        %v2709 = vld [vmem:[#allocation10 + $0xc8] sm:$0xff]
        %v2710 = vld [vmem:[#allocation10 + $0xd0] sm:$0xff]
        %v2711 = vld [vmem:[#allocation10 + $0xd8] sm:$0xff]
        %v2712 = vld [vmem:[#allocation10 + $0xe0] sm:$0xff]
        %v2713 = vld [vmem:[#allocation10 + $0xe8] sm:$0xff]
        %v2714 = vld [vmem:[#allocation10 + $0xf0] sm:$0xff]
        %v2715 = vld [vmem:[#allocation10 + $0xf8] sm:$0xff]
        %v2716 = vld [vmem:[%s14] sm:$0x3]
        %v2718 = vlaneseq
        %v2719 = vshrl.u32 %v2718, 7
        %v2720 = vsub.s32 0, %v2719
        %v2721 = vrot.slane %v2716, %v2720
        %v2722 = vlaneseq
        %v2723 = vshrl.u32 %v2722, 7
        %v2724 = vsub.s32 1, %v2723
        %v2725 = vrot.slane %v2716, %v2724
        %v2760 = vunpack.c.l.b16 %v2684
        %v2761 = vunpack.c.h.b16 %v2684
        %v2762 = vunpack.c.l.b16 %v2685
        %v2763 = vunpack.c.h.b16 %v2685
        %v2764 = vunpack.c.l.b16 %v2686
        %v2765 = vunpack.c.h.b16 %v2686
        %v2766 = vunpack.c.l.b16 %v2687
        %v2767 = vunpack.c.h.b16 %v2687
        %v2768 = vunpack.c.l.b16 %v2688
        %v2769 = vunpack.c.h.b16 %v2688
        %v2770 = vunpack.c.l.b16 %v2689
        %v2771 = vunpack.c.h.b16 %v2689
        %v2772 = vunpack.c.l.b16 %v2690
        %v2773 = vunpack.c.h.b16 %v2690
        %v2774 = vunpack.c.l.b16 %v2691
        %v2775 = vunpack.c.h.b16 %v2691
        %v2776 = vunpack.c.l.b16 %v2692
        %v2777 = vunpack.c.h.b16 %v2692
        %v2778 = vunpack.c.l.b16 %v2693
        %v2779 = vunpack.c.h.b16 %v2693
        %v2780 = vunpack.c.l.b16 %v2694
        %v2781 = vunpack.c.h.b16 %v2694
        %v2782 = vunpack.c.l.b16 %v2695
        %v2783 = vunpack.c.h.b16 %v2695
        %v2784 = vunpack.c.l.b16 %v2696
        %v2785 = vunpack.c.h.b16 %v2696
        %v2786 = vunpack.c.l.b16 %v2697
        %v2787 = vunpack.c.h.b16 %v2697
        %v2788 = vunpack.c.l.b16 %v2698
        %v2789 = vunpack.c.h.b16 %v2698
        %v2790 = vunpack.c.l.b16 %v2699
        %v2791 = vunpack.c.h.b16 %v2699
        %v2792 = vunpack.c.l.b16 %v2700
        %v2793 = vunpack.c.h.b16 %v2700
        %v2794 = vunpack.c.l.b16 %v2701
        %v2795 = vunpack.c.h.b16 %v2701
        %v2796 = vunpack.c.l.b16 %v2702
        %v2797 = vunpack.c.h.b16 %v2702
        %v2798 = vunpack.c.l.b16 %v2703
        %v2799 = vunpack.c.h.b16 %v2703
        %v2800 = vunpack.c.l.b16 %v2704
        %v2801 = vunpack.c.h.b16 %v2704
        %v2802 = vunpack.c.l.b16 %v2705
        %v2803 = vunpack.c.h.b16 %v2705
        %v2804 = vunpack.c.l.b16 %v2706
        %v2805 = vunpack.c.h.b16 %v2706
        %v2806 = vunpack.c.l.b16 %v2707
        %v2807 = vunpack.c.h.b16 %v2707
        %v2808 = vunpack.c.l.b16 %v2708
        %v2809 = vunpack.c.h.b16 %v2708
        %v2810 = vunpack.c.l.b16 %v2709
        %v2811 = vunpack.c.h.b16 %v2709
        %v2812 = vunpack.c.l.b16 %v2710
        %v2813 = vunpack.c.h.b16 %v2710
        %v2814 = vunpack.c.l.b16 %v2711
        %v2815 = vunpack.c.h.b16 %v2711
        %v2816 = vunpack.c.l.b16 %v2712
        %v2817 = vunpack.c.h.b16 %v2712
        %v2818 = vunpack.c.l.b16 %v2713
        %v2819 = vunpack.c.h.b16 %v2713
        %v2820 = vunpack.c.l.b16 %v2714
        %v2821 = vunpack.c.h.b16 %v2714
        %v2822 = vunpack.c.l.b16 %v2715
        %v2823 = vunpack.c.h.b16 %v2715
        %v2824 = vpack.c.b16 %v2762, %v2760
        %v2825 = vpack.c.b16 %v2763, %v2761
        %v2826 = vpack.c.b16 %v2766, %v2764
        %v2827 = vpack.c.b16 %v2767, %v2765
        %v2828 = vpack.c.b16 %v2770, %v2768
        %v2829 = vpack.c.b16 %v2771, %v2769
        %v2830 = vpack.c.b16 %v2774, %v2772
        %v2831 = vpack.c.b16 %v2775, %v2773
        %v2832 = vpack.c.b16 %v2778, %v2776
        %v2833 = vpack.c.b16 %v2779, %v2777
        %v2834 = vpack.c.b16 %v2782, %v2780
        %v2835 = vpack.c.b16 %v2783, %v2781
        %v2836 = vpack.c.b16 %v2786, %v2784
        %v2837 = vpack.c.b16 %v2787, %v2785
        %v2838 = vpack.c.b16 %v2790, %v2788
        %v2839 = vpack.c.b16 %v2791, %v2789
        %v2840 = vpack.c.b16 %v2794, %v2792
        %v2841 = vpack.c.b16 %v2795, %v2793
        %v2842 = vpack.c.b16 %v2798, %v2796
        %v2843 = vpack.c.b16 %v2799, %v2797
        %v2844 = vpack.c.b16 %v2802, %v2800
        %v2845 = vpack.c.b16 %v2803, %v2801
        %v2846 = vpack.c.b16 %v2806, %v2804
        %v2847 = vpack.c.b16 %v2807, %v2805
        %v2848 = vpack.c.b16 %v2810, %v2808
        %v2849 = vpack.c.b16 %v2811, %v2809
        %v2850 = vpack.c.b16 %v2814, %v2812
        %v2851 = vpack.c.b16 %v2815, %v2813
        %v2852 = vpack.c.b16 %v2818, %v2816
        %v2853 = vpack.c.b16 %v2819, %v2817
        %v2854 = vpack.c.b16 %v2822, %v2820
        %v2855 = vpack.c.b16 %v2823, %v2821
        %2888 = vmatprep.subr.bf16.mxu0 %v2825
        %2889 = vmatpush1.bf16.msra.mxu0 %v2824
        %2890 = vmatprep.subr.bf16.mxu0 %v2827
        %2891 = vmatpush1.bf16.msra.mxu0 %v2826
        %2892 = vmatprep.subr.bf16.mxu0 %v2829
        %2893 = vmatpush1.bf16.msra.mxu0 %v2828
        %2894 = vmatprep.subr.bf16.mxu0 %v2831
        %2895 = vmatpush1.bf16.msra.mxu0 %v2830
        %2896 = vmatprep.subr.bf16.mxu0 %v2833
        %2897 = vmatpush1.bf16.msra.mxu0 %v2832
        %2898 = vmatprep.subr.bf16.mxu0 %v2835
        %2899 = vmatpush1.bf16.msra.mxu0 %v2834
        %2900 = vmatprep.subr.bf16.mxu0 %v2837
        %2901 = vmatpush1.bf16.msra.mxu0 %v2836
        %2902 = vmatprep.subr.bf16.mxu0 %v2839
        %2903 = vmatpush1.bf16.msra.mxu0 %v2838
        %2904 = vmatprep.subr.bf16.mxu0 %v2841
        %2905 = vmatpush1.bf16.msra.mxu0 %v2840
        %2906 = vmatprep.subr.bf16.mxu0 %v2843
        %2907 = vmatpush1.bf16.msra.mxu0 %v2842
        %2908 = vmatprep.subr.bf16.mxu0 %v2845
        %2909 = vmatpush1.bf16.msra.mxu0 %v2844
        %2910 = vmatprep.subr.bf16.mxu0 %v2847
        %2911 = vmatpush1.bf16.msra.mxu0 %v2846
        %2912 = vmatprep.subr.bf16.mxu0 %v2849
        %2913 = vmatpush1.bf16.msra.mxu0 %v2848
        %2914 = vmatprep.subr.bf16.mxu0 %v2851
        %2915 = vmatpush1.bf16.msra.mxu0 %v2850
        %2916 = vmatprep.subr.bf16.mxu0 %v2853
        %2917 = vmatpush1.bf16.msra.mxu0 %v2852
        %2918 = vmatprep.subr.bf16.mxu0 %v2855
        %2919 = vmatpush1.bf16.msra.mxu0 %v2854
        %2920 = vmatprep.mubr.bf16.mxu0 %v2669
        %2921 = vmatmul.mubr.bf16.gmra.mrb[0].mxu0 %v2668
        %v2922 = vpop.f32.mrb[0].mxu0
        %v2923 = vadd.f32 %v2721, %v2922
        %v2924 = vpop.f32.mrb[0].mxu0
        %v2925 = vadd.f32 %v2725, %v2924
        %v2926 = vpop.f32.mrb[0].mxu0
        %v2927 = vadd.f32 %v2721, %v2926
        %v2928 = vpop.f32.mrb[0].mxu0
        %v2929 = vadd.f32 %v2725, %v2928
        %2930 = vmatprep.mubr.bf16.mxu0 %v2671
        %2931 = vmatmul.mubr.bf16.gmra.mrb[0].mxu0 %v2670
        %v2932 = vpop.f32.mrb[0].mxu0
        %v2933 = vadd.f32 %v2721, %v2932
        %v2934 = vpop.f32.mrb[0].mxu0
        %v2935 = vadd.f32 %v2725, %v2934
        %v2936 = vpop.f32.mrb[0].mxu0
        %v2937 = vadd.f32 %v2721, %v2936
        %v2938 = vpop.f32.mrb[0].mxu0
        %v2939 = vadd.f32 %v2725, %v2938
        %2940 = vmatprep.mubr.bf16.mxu0 %v2673
        %2941 = vmatmul.mubr.bf16.gmra.mrb[0].mxu0 %v2672
        %v2942 = vpop.f32.mrb[0].mxu0
        %v2943 = vadd.f32 %v2721, %v2942
        %v2944 = vpop.f32.mrb[0].mxu0
        %v2945 = vadd.f32 %v2725, %v2944
        %v2946 = vpop.f32.mrb[0].mxu0
        %v2947 = vadd.f32 %v2721, %v2946
        %v2948 = vpop.f32.mrb[0].mxu0
        %v2949 = vadd.f32 %v2725, %v2948
        %2950 = vmatprep.mubr.bf16.mxu0 %v2675
        %2951 = vmatmul.mubr.bf16.gmra.mrb[0].mxu0 %v2674
        %v2952 = vpop.f32.mrb[0].mxu0
        %v2953 = vadd.f32 %v2721, %v2952
        %v2954 = vpop.f32.mrb[0].mxu0
        %v2955 = vadd.f32 %v2725, %v2954
        %v2956 = vpop.f32.mrb[0].mxu0
        %v2957 = vadd.f32 %v2721, %v2956
        %v2958 = vpop.f32.mrb[0].mxu0
        %v2959 = vadd.f32 %v2725, %v2958
        %2960 = vmatprep.mubr.bf16.mxu0 %v2677
        %2961 = vmatmul.mubr.bf16.gmra.mrb[0].mxu0 %v2676
        %v2962 = vpop.f32.mrb[0].mxu0
        %v2963 = vadd.f32 %v2721, %v2962
        %v2964 = vpop.f32.mrb[0].mxu0
        %v2965 = vadd.f32 %v2725, %v2964
        %v2966 = vpop.f32.mrb[0].mxu0
        %v2967 = vadd.f32 %v2721, %v2966
        %v2968 = vpop.f32.mrb[0].mxu0
        %v2969 = vadd.f32 %v2725, %v2968
        %2970 = vmatprep.mubr.bf16.mxu0 %v2679
        %2971 = vmatmul.mubr.bf16.gmra.mrb[0].mxu0 %v2678
        %v2972 = vpop.f32.mrb[0].mxu0
        %v2973 = vadd.f32 %v2721, %v2972
        %v2974 = vpop.f32.mrb[0].mxu0
        %v2975 = vadd.f32 %v2725, %v2974
        %v2976 = vpop.f32.mrb[0].mxu0
        %v2977 = vadd.f32 %v2721, %v2976
        %v2978 = vpop.f32.mrb[0].mxu0
        %v2979 = vadd.f32 %v2725, %v2978
        %2980 = vmatprep.mubr.bf16.mxu0 %v2681
        %2981 = vmatmul.mubr.bf16.gmra.mrb[0].mxu0 %v2680
        %v2982 = vpop.f32.mrb[0].mxu0
        %v2983 = vadd.f32 %v2721, %v2982
        %v2984 = vpop.f32.mrb[0].mxu0
        %v2985 = vadd.f32 %v2725, %v2984
        %v2986 = vpop.f32.mrb[0].mxu0
        %v2987 = vadd.f32 %v2721, %v2986
        %v2988 = vpop.f32.mrb[0].mxu0
        %v2989 = vadd.f32 %v2725, %v2988
        %2990 = vmatprep.mubr.bf16.mxu0 %v2683
        %2991 = vmatmul.mubr.bf16.gmra.mrb[0].mxu0 %v2682
        %v2992 = vpop.f32.mrb[0].mxu0
        %v2993 = vadd.f32 %v2721, %v2992
        %v2994 = vpop.f32.mrb[0].mxu0
        %v2995 = vadd.f32 %v2725, %v2994
        %v2996 = vpop.f32.mrb[0].mxu0
        %v2997 = vadd.f32 %v2721, %v2996
        %v2998 = vpop.f32.mrb[0].mxu0
        %v2999 = vadd.f32 %v2725, %v2998
        %3000 = vdwg.mxu0
        %v3001 = vmax.f32 %v2923, 0.0
        %v3002 = vmax.f32 %v2925, 0.0
        %v3003 = vmax.f32 %v2927, 0.0
        %v3004 = vmax.f32 %v2929, 0.0
        %v3005 = vmax.f32 %v2933, 0.0
        %v3006 = vmax.f32 %v2935, 0.0
        %v3007 = vmax.f32 %v2937, 0.0
        %v3008 = vmax.f32 %v2939, 0.0
        %v3009 = vmax.f32 %v2943, 0.0
        %v3010 = vmax.f32 %v2945, 0.0
        %v3011 = vmax.f32 %v2947, 0.0
        %v3012 = vmax.f32 %v2949, 0.0
        %v3013 = vmax.f32 %v2953, 0.0
        %v3014 = vmax.f32 %v2955, 0.0
        %v3015 = vmax.f32 %v2957, 0.0
        %v3016 = vmax.f32 %v2959, 0.0
        %v3017 = vmax.f32 %v2963, 0.0
        %v3018 = vmax.f32 %v2965, 0.0
        %v3019 = vmax.f32 %v2967, 0.0
        %v3020 = vmax.f32 %v2969, 0.0
        %v3021 = vmax.f32 %v2973, 0.0
        %v3022 = vmax.f32 %v2975, 0.0
        %v3023 = vmax.f32 %v2977, 0.0
        %v3024 = vmax.f32 %v2979, 0.0
        %v3025 = vmax.f32 %v2983, 0.0
        %v3026 = vmax.f32 %v2985, 0.0
        %v3027 = vmax.f32 %v2987, 0.0
        %v3028 = vmax.f32 %v2989, 0.0
        %v3029 = vmax.f32 %v2993, 0.0
        %v3030 = vmax.f32 %v2995, 0.0
        %v3031 = vmax.f32 %v2997, 0.0
        %v3032 = vmax.f32 %v2999, 0.0
        %v3033 = vld [vmem:[%s15] sm:$0x3]
        %v3035 = vlaneseq
        %v3036 = vshrl.u32 %v3035, 7
        %v3037 = vsub.s32 0, %v3036
        %v3038 = vrot.slane %v3033, %v3037
        %v3039 = vlaneseq
        %v3040 = vshrl.u32 %v3039, 7
        %v3041 = vsub.s32 1, %v3040
        %v3042 = vrot.slane %v3033, %v3041
        %v3045 = vmul.f32 %v3001, %v3038
        %v3046 = vmul.f32 %v3002, %v3042
        %v3047 = vmul.f32 %v3003, %v3038
        %v3048 = vmul.f32 %v3004, %v3042
        %v3049 = vmul.f32 %v3005, %v3038
        %v3050 = vmul.f32 %v3006, %v3042
        %v3051 = vmul.f32 %v3007, %v3038
        %v3052 = vmul.f32 %v3008, %v3042
        %v3053 = vmul.f32 %v3009, %v3038
        %v3054 = vmul.f32 %v3010, %v3042
        %v3055 = vmul.f32 %v3011, %v3038
        %v3056 = vmul.f32 %v3012, %v3042
        %v3057 = vmul.f32 %v3013, %v3038
        %v3058 = vmul.f32 %v3014, %v3042
        %v3059 = vmul.f32 %v3015, %v3038
        %v3060 = vmul.f32 %v3016, %v3042
        %v3061 = vmul.f32 %v3017, %v3038
        %v3062 = vmul.f32 %v3018, %v3042
        %v3063 = vmul.f32 %v3019, %v3038
        %v3064 = vmul.f32 %v3020, %v3042
        %v3065 = vmul.f32 %v3021, %v3038
        %v3066 = vmul.f32 %v3022, %v3042
        %v3067 = vmul.f32 %v3023, %v3038
        %v3068 = vmul.f32 %v3024, %v3042
        %v3069 = vmul.f32 %v3025, %v3038
        %v3070 = vmul.f32 %v3026, %v3042
        %v3071 = vmul.f32 %v3027, %v3038
        %v3072 = vmul.f32 %v3028, %v3042
        %v3073 = vmul.f32 %v3029, %v3038
        %v3074 = vmul.f32 %v3030, %v3042
        %v3075 = vmul.f32 %v3031, %v3038
        %v3076 = vmul.f32 %v3032, %v3042
        %v3077 = vadd.f32 %v3045, %v3046
        %3078 = vadd.xlane.f32.xlu0 %v3077
        %v3079 = vpop.xlane.xlu0 %3078
        %v3080 = vadd.f32 %v3047, %v3048
        %3081 = vadd.xlane.f32.xlu0 %v3080
        %v3082 = vpop.xlane.xlu0 %3081
        %v3083 = vadd.f32 %v3049, %v3050
        %3084 = vadd.xlane.f32.xlu0 %v3083
        %v3085 = vpop.xlane.xlu0 %3084
        %v3086 = vadd.f32 %v3051, %v3052
        %3087 = vadd.xlane.f32.xlu0 %v3086
        %v3088 = vpop.xlane.xlu0 %3087
        %v3089 = vadd.f32 %v3053, %v3054
        %3090 = vadd.xlane.f32.xlu0 %v3089
        %v3091 = vpop.xlane.xlu0 %3090
        %v3092 = vadd.f32 %v3055, %v3056
        %3093 = vadd.xlane.f32.xlu0 %v3092
        %v3094 = vpop.xlane.xlu0 %3093
        %v3095 = vadd.f32 %v3057, %v3058
        %3096 = vadd.xlane.f32.xlu0 %v3095
        %v3097 = vpop.xlane.xlu0 %3096
        %v3098 = vadd.f32 %v3059, %v3060
        %3099 = vadd.xlane.f32.xlu0 %v3098
        %v3100 = vpop.xlane.xlu0 %3099
        %v3101 = vadd.f32 %v3061, %v3062
        %3102 = vadd.xlane.f32.xlu0 %v3101
        %v3103 = vpop.xlane.xlu0 %3102
        %v3104 = vadd.f32 %v3063, %v3064
        %3105 = vadd.xlane.f32.xlu0 %v3104
        %v3106 = vpop.xlane.xlu0 %3105
        %v3107 = vadd.f32 %v3065, %v3066
        %3108 = vadd.xlane.f32.xlu0 %v3107
        %v3109 = vpop.xlane.xlu0 %3108
        %v3110 = vadd.f32 %v3067, %v3068
        %3111 = vadd.xlane.f32.xlu0 %v3110
        %v3112 = vpop.xlane.xlu0 %3111
        %v3113 = vadd.f32 %v3069, %v3070
        %3114 = vadd.xlane.f32.xlu0 %v3113
        %v3115 = vpop.xlane.xlu0 %3114
        %v3116 = vadd.f32 %v3071, %v3072
        %3117 = vadd.xlane.f32.xlu0 %v3116
        %v3118 = vpop.xlane.xlu0 %3117
        %v3119 = vadd.f32 %v3073, %v3074
        %3120 = vadd.xlane.f32.xlu0 %v3119
        %v3121 = vpop.xlane.xlu0 %3120
        %v3122 = vadd.f32 %v3075, %v3076
        %3123 = vadd.xlane.f32.xlu0 %v3122
        %v3124 = vpop.xlane.xlu0 %3123
        %v3125 = vld [vmem:[#allocation2] sm:$0x1]
        %v3127 = vlaneseq
        %v3128 = vshrl.u32 %v3127, 7
        %v3129 = vsub.s32 0, %v3128
        %v3130 = vrot.slane %v3125, %v3129
        %v3132 = vadd.f32 %v3079, %v3130
        %v3133 = vadd.f32 %v3082, %v3130
        %v3134 = vadd.f32 %v3085, %v3130
        %v3135 = vadd.f32 %v3088, %v3130
        %v3136 = vadd.f32 %v3091, %v3130
        %v3137 = vadd.f32 %v3094, %v3130
        %v3138 = vadd.f32 %v3097, %v3130
        %v3139 = vadd.f32 %v3100, %v3130
        %v3140 = vadd.f32 %v3103, %v3130
        %v3141 = vadd.f32 %v3106, %v3130
        %v3142 = vadd.f32 %v3109, %v3130
        %v3143 = vadd.f32 %v3112, %v3130
        %v3144 = vadd.f32 %v3115, %v3130
        %v3145 = vadd.f32 %v3118, %v3130
        %v3146 = vadd.f32 %v3121, %v3130
        %v3147 = vadd.f32 %v3124, %v3130
        %vm3148 = vcmask 7168
        %3149 = vst.msk [vmem:[%s625] sm:$0xff] %vm3148, %v3132
        %3150 = vst.msk [vmem:[%s625 + $0x8] sm:$0xff] %vm3148, %v3133
        %3151 = vst.msk [vmem:[%s625 + $0x10] sm:$0xff] %vm3148, %v3134
        %3152 = vst.msk [vmem:[%s625 + $0x18] sm:$0xff] %vm3148, %v3135
        %3153 = vst.msk [vmem:[%s625 + $0x20] sm:$0xff] %vm3148, %v3136
        %3154 = vst.msk [vmem:[%s625 + $0x28] sm:$0xff] %vm3148, %v3137
        %3155 = vst.msk [vmem:[%s625 + $0x30] sm:$0xff] %vm3148, %v3138
        %3156 = vst.msk [vmem:[%s625 + $0x38] sm:$0xff] %vm3148, %v3139
        %3157 = vst.msk [vmem:[%s625 + $0x40] sm:$0xff] %vm3148, %v3140
        %3158 = vst.msk [vmem:[%s625 + $0x48] sm:$0xff] %vm3148, %v3141
        %3159 = vst.msk [vmem:[%s625 + $0x50] sm:$0xff] %vm3148, %v3142
        %3160 = vst.msk [vmem:[%s625 + $0x58] sm:$0xff] %vm3148, %v3143
        %3161 = vst.msk [vmem:[%s625 + $0x60] sm:$0xff] %vm3148, %v3144
        %3162 = vst.msk [vmem:[%s625 + $0x68] sm:$0xff] %vm3148, %v3145
        %3163 = vst.msk [vmem:[%s625 + $0x70] sm:$0xff] %vm3148, %v3146
        %3164 = vst.msk [vmem:[%s625 + $0x78] sm:$0xff] %vm3148, %v3147
        %s3165 = smul.u32 16, %s33
        %p3166 = scmp.lt.s32.totalorder %s3165, 31
        %s3167 = scalar_select %p3166, %s3165, 31
        %s3168 = smul.addr %s3167, 8
        %s3169 = scalar_lea.vmem %s17, %s3168
        // Predicated region
        $region109: #{tpu_custom_call.1} parent=87 // pred_check
          %p3170 = pneg %p413
        $region110: #{tpu_custom_call.1} parent=87 // pred_check_branch
          %3172 = sbr.rel (%p3170) target = $region112
        $region111: #{tpu_custom_call.1} parent=87 // pred_region
          %s3173 = smul.u32 16, %s33
        $region112: #{tpu_custom_call.1} parent=87 // pred_fallthru
          _
      $region88: #{tpu_custom_call.1} parent=5 // pred_fallthru
        _
      %p3174 = scmp.le.s32.totalorder 2, %s28
      // Predicated region
      $region113: #{tpu_custom_call.1} parent=5 // pred_check
        %p3175 = pneg %p3174
      $region114: #{tpu_custom_call.1} parent=5 // pred_check_branch
        %3177 = sbr.rel (%p3175) target = $region116
      $region115: #{tpu_custom_call.1} parent=5 // pred_region
        %s3178 = ssub.s32 %s28, 2
        // Predicated region
        $region117: #{tpu_custom_call.1} parent=115 // pred_check
          %p3179 = pneg %p419
        $region118: #{tpu_custom_call.1} parent=115 // pred_check_branch
          %3181 = sbr.rel (%p3179) target = $region120
        $region119: #{tpu_custom_call.1} parent=115 // pred_region
          %s3182 = smul.u32 16, %s34
          %p3183 = scmp.lt.s32.totalorder %s3182, 31
          %s3184 = scalar_select %p3183, %s3182, 31
          %s3185 = smul.addr %s3184, 8
          %s3186 = scalar_lea.vmem %s17, %s3185
        $region120: #{tpu_custom_call.1} parent=115 // pred_fallthru
          _
      $region116: #{tpu_custom_call.1} parent=5 // pred_fallthru
        _
    $region6: #{tpu_custom_call.1} parent=1 // loop_footer
      %s32 = sadd.s32 1, %s28
    $region7: #{tpu_custom_call.1} parent=1 // loop_footer_branch
      %27 = sbr.rel target = $region3
    $region8: #{tpu_custom_call.1} parent=1 // loop_exit
      _
    %3187 = vsyncpa [#allocation4], 1
    %s3188 = scalar_lea.sflag [#allocation4], 1
    %3189 = vsyncpa %s3188, 1
    %3190 = vsyncpa [#allocation6], 1
    %3191 = vsyncpa [#allocation9], 1

// kernel: tpu_custom_call.1
$region0: #{tpu_custom_call.1}
  #allocation0 [shape = 'u32[]', space=smem, size = 0x4, offset = 0x4, fixed_abs, tag = 'smem constant byte address 0x4 - core index']
  #allocation1 [shape = 'u32[144,128]{1,0:T(1,128)}', space=vmem, size = 0x12000, scoped, tag = 'internal scratch']
  #allocation2 [shape = 'f32[1,1]{1,0:T(1,128)S(1)}', space=vmem, size = 0x200, scoped, tag = 'scoped memory for tpu_custom_call.1']
  %s0 = inlined_call_operand.vmem [shape: f32[256,1], index: 0, kind: input, shape index: {}]
  %s1 = inlined_call_operand.vmem [shape: f32[1,256], index: 1, kind: input, shape index: {}]
  %s2 = inlined_call_operand.vmem [shape: f32[1,256], index: 2, kind: input, shape index: {}]
  %s3 = inlined_call_operand.vmem [shape: bf16[256,256], index: 3, kind: input, shape index: {}]
  %s4 = inlined_call_operand.vmem [shape: f32[1,256], index: 4, kind: input, shape index: {}]
  %s5 = inlined_call_operand.hbm [shape: bf16[256,256], index: 5, kind: input, shape index: {}]
  %s6 = inlined_call_operand.vmem [shape: f32[1,256], index: 6, kind: input, shape index: {}]
  %s7 = inlined_call_operand.hbm [shape: bf16[256,256], index: 7, kind: input, shape index: {}]
  %s8 = inlined_call_operand.vmem [shape: f32[1,256], index: 8, kind: input, shape index: {}]
  %s9 = inlined_call_operand.hbm [shape: bf16[256,256], index: 9, kind: input, shape index: {}]
  %s10 = inlined_call_operand.vmem [shape: f32[1,256], index: 10, kind: input, shape index: {}]
  %s11 = inlined_call_operand.hbm [shape: bf16[256,256], index: 11, kind: input, shape index: {}]
  %s12 = inlined_call_operand.vmem [shape: f32[1,256], index: 12, kind: input, shape index: {}]
  %s13 = inlined_call_operand.hbm [shape: bf16[256,256], index: 13, kind: input, shape index: {}]
  %s14 = inlined_call_operand.vmem [shape: f32[1,256], index: 14, kind: input, shape index: {}]
  %s15 = inlined_call_operand.vmem [shape: f32[1,256], index: 15, kind: input, shape index: {}]
  %s16 = inlined_call_operand.<no memory space> [shape: f32[1,1], index: 16, kind: input, shape index: {}]
  %s17 = inlined_call_operand.vmem [shape: f32[256,1], index: 17, kind: output, shape index: {}]
  %s18 = sld [smem:[#allocation0]]
  $region121: #{tpu_custom_call.1} parent=0
    _
  %s20 = ssub.s32 1, %s18
  %s21 = scalar_select 0, %s20, %s18
  %v22 = vstv %s16
  %23 = vst [vmem:[#allocation2] sm:$0x1] %v22
  $region1: #{tpu_custom_call.1} parent=0
    #allocation3 [shape = 'u8[131072]{0}', space=vmem, size = 0x20000, scoped, tag = 'input window, operand 5, single buffered']
    #allocation4 [shape = 's32[2]{0}', space=sflag, size = 0x8, scoped, tag = 'scoped memory for tpu_custom_call.1']
    #allocation5 [shape = 'u8[131072]{0}', space=vmem, size = 0x20000, scoped, tag = 'input window, operand 7, single buffered']
    #allocation6 [shape = 's32[1]{0}', space=sflag, size = 0x4, scoped, tag = 'scoped memory for tpu_custom_call.1']
    #allocation7 [shape = 'u8[131072]{0}', space=vmem, size = 0x20000, scoped, tag = 'input window, operand 9, single buffered']
    #allocation8 [shape = 'u8[131072]{0}', space=vmem, size = 0x20000, scoped, tag = 'input window, operand 11, single buffered']
    #allocation9 [shape = 's32[1]{0}', space=sflag, size = 0x4, scoped, tag = 'scoped memory for tpu_custom_call.1']
    #allocation10 [shape = 'u8[131072]{0}', space=vmem, size = 0x20000, scoped, tag = 'input window, operand 13, single buffered']
    %24 = vsyncpa [#allocation4], 0
    %25 = vsyncpa [#allocation6], 0
    %26 = vsyncpa [#allocation9], 0
    loop: start=0, step=1, limit=4
    $region2: #{tpu_custom_call.1} parent=1 // loop_pre_header
      _
    $region3: #{tpu_custom_call.1} parent=1 // loop_header
      %s28 = sphi 0, %s32
      %p29 = scmp.ge.s32.totalorder %s28, 4
      %s38 = sphi 0, %s40
      %s41 = sphi 0, %s38
      %s42 = sphi 0, %s41
      %s58 = sphi 0, %s42
      %s62 = sphi 0, %s62
      %s64 = sphi 0, %s62
      %s65 = sphi 0, %s64
      %s79 = sphi 0, %s65
      %s83 = sphi 0, %s83
      %s85 = sphi 0, %s83
      %s86 = sphi 0, %s85
      %s100 = sphi 0, %s86
      %s104 = sphi 0, %s104
      %s106 = sphi 0, %s104
      %s107 = sphi 0, %s106
      %s121 = sphi 0, %s107
      %s125 = sphi 0, %s125
      %s127 = sphi 0, %s125
      %s128 = sphi 0, %s127
      %s142 = sphi 0, %s128
      %s146 = sphi 0, %s146
      %s148 = sphi 0, %s146
      %s149 = sphi 0, %s148
      %s163 = sphi 0, %s149
      %s167 = sphi 0, %s167
      %s169 = sphi 0, %s167
      %s170 = sphi 0, %s169
      %s184 = sphi 0, %s170
      %s188 = sphi 0, %s188
      %s190 = sphi 0, %s188
      %s191 = sphi 0, %s190
      %s205 = sphi 0, %s191
      %s209 = sphi 0, %s209
      %s211 = sphi 0, %s209
      %s212 = sphi 0, %s211
      %s226 = sphi 0, %s212
      %s230 = sphi 0, %s230
      %s232 = sphi 0, %s230
      %s233 = sphi 0, %s232
      %s247 = sphi 0, %s233
      %s251 = sphi 0, %s251
      %s253 = sphi 0, %s251
      %s254 = sphi 0, %s253
      %s268 = sphi 0, %s254
      %s272 = sphi 0, %s272
      %s274 = sphi 0, %s272
      %s275 = sphi 0, %s274
      %s289 = sphi 0, %s275
      %s293 = sphi 0, %s293
      %s295 = sphi 0, %s293
      %s296 = sphi 0, %s295
      %s310 = sphi 0, %s296
      %s314 = sphi 0, %s314
      %s316 = sphi 0, %s314
      %s317 = sphi 0, %s316
      %s331 = sphi 0, %s317
      %s335 = sphi 0, %s335
      %s337 = sphi 0, %s335
      %s338 = sphi 0, %s337
      %s352 = sphi 0, %s338
      %s356 = sphi 0, %s356
      %s358 = sphi 0, %s356
      %s359 = sphi 0, %s358
      %s373 = sphi 0, %s359
      %s377 = sphi 0, %s377
      %s379 = sphi 0, %s377
      %s380 = sphi 0, %s379
      %s394 = sphi 0, %s380
      %s400 = sphi 0, %s402
      %s403 = sphi 0, %s400
      %s404 = sphi 0, %s403
      %s420 = sphi 0, %s404
    $region4: #{tpu_custom_call.1} parent=1 // loop_header_branch
      %31 = sbr.rel (%p29) target = $region8
    $region5: #{tpu_custom_call.1} parent=1 // loop_body
      %s33 = ssub.s32 %s28, 1
      %s34 = ssub.s32 %s28, 2
      %s35 = sadd.s32 %s28, 1
      %s36 = ssub.s32 %s28, %s35
      %p37 = scmp.eq.s32.totalorder %s36, 0
      %s39 = sadd.s32 %s38, 1
      %s40 = scalar_select %p37, %s38, %s39
      %p43 = pneg %p37
      %p44 = scmp.eq.s32.totalorder %s28, 1
      %p45 = por %p43, %p44
      %p46 = scmp.ne.s32.totalorder %s38, %s41
      %p47 = scmp.eq.s32.totalorder %s28, 0
      %p48 = por %p46, %p47
      %p49 = scmp.ne.s32.totalorder %s38, %s41
      %p50 = scmp.eq.s32.totalorder %s33, 1
      %p51 = por %p49, %p50
      %p52 = scmp.ne.s32.totalorder %s41, %s42
      %p53 = scmp.eq.s32.totalorder %s33, 0
      %p54 = por %p52, %p53
      %p55 = scmp.ne.s32.totalorder %s41, %s42
      %p56 = scmp.eq.s32.totalorder %s34, 1
      %p57 = por %p55, %p56
      %p59 = scmp.ne.s32.totalorder %s42, %s58
      %p60 = scmp.eq.s32.totalorder %s34, 0
      %p61 = por %p59, %p60
      %s63 = sadd.s32 %s62, 1
      %p66 = scmp.eq.s32.totalorder %s28, 1
      %p67 = scmp.ne.s32.totalorder %s62, %s64
      %p68 = scmp.eq.s32.totalorder %s28, 0
      %p69 = por %p67, %p68
      %p70 = scmp.ne.s32.totalorder %s62, %s64
      %p71 = scmp.eq.s32.totalorder %s33, 1
      %p72 = por %p70, %p71
      %p73 = scmp.ne.s32.totalorder %s64, %s65
      %p74 = scmp.eq.s32.totalorder %s33, 0
      %p75 = por %p73, %p74
      %p76 = scmp.ne.s32.totalorder %s64, %s65
      %p77 = scmp.eq.s32.totalorder %s34, 1
      %p78 = por %p76, %p77
      %p80 = scmp.ne.s32.totalorder %s65, %s79
      %p81 = scmp.eq.s32.totalorder %s34, 0
      %p82 = por %p80, %p81
      %s84 = sadd.s32 %s83, 1
      %p87 = scmp.eq.s32.totalorder %s28, 1
      %p88 = scmp.ne.s32.totalorder %s83, %s85
      %p89 = scmp.eq.s32.totalorder %s28, 0
      %p90 = por %p88, %p89
      %p91 = scmp.ne.s32.totalorder %s83, %s85
      %p92 = scmp.eq.s32.totalorder %s33, 1
      %p93 = por %p91, %p92
      %p94 = scmp.ne.s32.totalorder %s85, %s86
      %p95 = scmp.eq.s32.totalorder %s33, 0
      %p96 = por %p94, %p95
      %p97 = scmp.ne.s32.totalorder %s85, %s86
      %p98 = scmp.eq.s32.totalorder %s34, 1
      %p99 = por %p97, %p98
      %p101 = scmp.ne.s32.totalorder %s86, %s100
      %p102 = scmp.eq.s32.totalorder %s34, 0
      %p103 = por %p101, %p102
      %s105 = sadd.s32 %s104, 1
      %p108 = scmp.eq.s32.totalorder %s28, 1
      %p109 = scmp.ne.s32.totalorder %s104, %s106
      %p110 = scmp.eq.s32.totalorder %s28, 0
      %p111 = por %p109, %p110
      %p112 = scmp.ne.s32.totalorder %s104, %s106
      %p113 = scmp.eq.s32.totalorder %s33, 1
      %p114 = por %p112, %p113
      %p115 = scmp.ne.s32.totalorder %s106, %s107
      %p116 = scmp.eq.s32.totalorder %s33, 0
      %p117 = por %p115, %p116
      %p118 = scmp.ne.s32.totalorder %s106, %s107
      %p119 = scmp.eq.s32.totalorder %s34, 1
      %p120 = por %p118, %p119
      %p122 = scmp.ne.s32.totalorder %s107, %s121
      %p123 = scmp.eq.s32.totalorder %s34, 0
      %p124 = por %p122, %p123
      %s126 = sadd.s32 %s125, 1
      %p129 = scmp.eq.s32.totalorder %s28, 1
      %p130 = scmp.ne.s32.totalorder %s125, %s127
      %p131 = scmp.eq.s32.totalorder %s28, 0
      %p132 = por %p130, %p131
      %p133 = scmp.ne.s32.totalorder %s125, %s127
      %p134 = scmp.eq.s32.totalorder %s33, 1
      %p135 = por %p133, %p134
      %p136 = scmp.ne.s32.totalorder %s127, %s128
      %p137 = scmp.eq.s32.totalorder %s33, 0
      %p138 = por %p136, %p137
      %p139 = scmp.ne.s32.totalorder %s127, %s128
      %p140 = scmp.eq.s32.totalorder %s34, 1
      %p141 = por %p139, %p140
      %p143 = scmp.ne.s32.totalorder %s128, %s142
      %p144 = scmp.eq.s32.totalorder %s34, 0
      %p145 = por %p143, %p144
      %s147 = sadd.s32 %s146, 1
      %p150 = scmp.eq.s32.totalorder %s28, 1
      %p151 = scmp.ne.s32.totalorder %s146, %s148
      %p152 = scmp.eq.s32.totalorder %s28, 0
      %p153 = por %p151, %p152
      %p154 = scmp.ne.s32.totalorder %s146, %s148
      %p155 = scmp.eq.s32.totalorder %s33, 1
      %p156 = por %p154, %p155
      %p157 = scmp.ne.s32.totalorder %s148, %s149
      %p158 = scmp.eq.s32.totalorder %s33, 0
      %p159 = por %p157, %p158
      %p160 = scmp.ne.s32.totalorder %s148, %s149
      %p161 = scmp.eq.s32.totalorder %s34, 1
      %p162 = por %p160, %p161
      %p164 = scmp.ne.s32.totalorder %s149, %s163
      %p165 = scmp.eq.s32.totalorder %s34, 0
      %p166 = por %p164, %p165
      %s168 = sadd.s32 %s167, 1
      %p171 = scmp.eq.s32.totalorder %s28, 1
      %p172 = scmp.ne.s32.totalorder %s167, %s169
      %p173 = scmp.eq.s32.totalorder %s28, 0
      %p174 = por %p172, %p173
      %p175 = scmp.ne.s32.totalorder %s167, %s169
      %p176 = scmp.eq.s32.totalorder %s33, 1
      %p177 = por %p175, %p176
      %p178 = scmp.ne.s32.totalorder %s169, %s170
      %p179 = scmp.eq.s32.totalorder %s33, 0
      %p180 = por %p178, %p179
      %p181 = scmp.ne.s32.totalorder %s169, %s170
      %p182 = scmp.eq.s32.totalorder %s34, 1
      %p183 = por %p181, %p182
      %p185 = scmp.ne.s32.totalorder %s170, %s184
      %p186 = scmp.eq.s32.totalorder %s34, 0
      %p187 = por %p185, %p186
      %s189 = sadd.s32 %s188, 1
      %p192 = scmp.eq.s32.totalorder %s28, 1
      %p193 = scmp.ne.s32.totalorder %s188, %s190
      %p194 = scmp.eq.s32.totalorder %s28, 0
      %p195 = por %p193, %p194
      %p196 = scmp.ne.s32.totalorder %s188, %s190
      %p197 = scmp.eq.s32.totalorder %s33, 1
      %p198 = por %p196, %p197
      %p199 = scmp.ne.s32.totalorder %s190, %s191
      %p200 = scmp.eq.s32.totalorder %s33, 0
      %p201 = por %p199, %p200
      %p202 = scmp.ne.s32.totalorder %s190, %s191
      %p203 = scmp.eq.s32.totalorder %s34, 1
      %p204 = por %p202, %p203
      %p206 = scmp.ne.s32.totalorder %s191, %s205
      %p207 = scmp.eq.s32.totalorder %s34, 0
      %p208 = por %p206, %p207
      %s210 = sadd.s32 %s209, 1
      %p213 = scmp.eq.s32.totalorder %s28, 1
      %p214 = scmp.ne.s32.totalorder %s209, %s211
      %p215 = scmp.eq.s32.totalorder %s28, 0
      %p216 = por %p214, %p215
      %p217 = scmp.ne.s32.totalorder %s209, %s211
      %p218 = scmp.eq.s32.totalorder %s33, 1
      %p219 = por %p217, %p218
      %p220 = scmp.ne.s32.totalorder %s211, %s212
      %p221 = scmp.eq.s32.totalorder %s33, 0
      %p222 = por %p220, %p221
      %p223 = scmp.ne.s32.totalorder %s211, %s212
      %p224 = scmp.eq.s32.totalorder %s34, 1
      %p225 = por %p223, %p224
      %p227 = scmp.ne.s32.totalorder %s212, %s226
      %p228 = scmp.eq.s32.totalorder %s34, 0
      %p229 = por %p227, %p228
      %s231 = sadd.s32 %s230, 1
      %p234 = scmp.eq.s32.totalorder %s28, 1
      %p235 = scmp.ne.s32.totalorder %s230, %s232
      %p236 = scmp.eq.s32.totalorder %s28, 0
      %p237 = por %p235, %p236
      %p238 = scmp.ne.s32.totalorder %s230, %s232
      %p239 = scmp.eq.s32.totalorder %s33, 1
      %p240 = por %p238, %p239
      %p241 = scmp.ne.s32.totalorder %s232, %s233
      %p242 = scmp.eq.s32.totalorder %s33, 0
      %p243 = por %p241, %p242
      %p244 = scmp.ne.s32.totalorder %s232, %s233
      %p245 = scmp.eq.s32.totalorder %s34, 1
      %p246 = por %p244, %p245
      %p248 = scmp.ne.s32.totalorder %s233, %s247
      %p249 = scmp.eq.s32.totalorder %s34, 0
      %p250 = por %p248, %p249
      %s252 = sadd.s32 %s251, 1
      %p255 = scmp.eq.s32.totalorder %s28, 1
      %p256 = scmp.ne.s32.totalorder %s251, %s253
      %p257 = scmp.eq.s32.totalorder %s28, 0
      %p258 = por %p256, %p257
      %p259 = scmp.ne.s32.totalorder %s251, %s253
      %p260 = scmp.eq.s32.totalorder %s33, 1
      %p261 = por %p259, %p260
      %p262 = scmp.ne.s32.totalorder %s253, %s254
      %p263 = scmp.eq.s32.totalorder %s33, 0
      %p264 = por %p262, %p263
      %p265 = scmp.ne.s32.totalorder %s253, %s254
      %p266 = scmp.eq.s32.totalorder %s34, 1
      %p267 = por %p265, %p266
      %p269 = scmp.ne.s32.totalorder %s254, %s268
      %p270 = scmp.eq.s32.totalorder %s34, 0
      %p271 = por %p269, %p270
      %s273 = sadd.s32 %s272, 1
      %p276 = scmp.eq.s32.totalorder %s28, 1
      %p277 = scmp.ne.s32.totalorder %s272, %s274
      %p278 = scmp.eq.s32.totalorder %s28, 0
      %p279 = por %p277, %p278
      %p280 = scmp.ne.s32.totalorder %s272, %s274
      %p281 = scmp.eq.s32.totalorder %s33, 1
      %p282 = por %p280, %p281
      %p283 = scmp.ne.s32.totalorder %s274, %s275
      %p284 = scmp.eq.s32.totalorder %s33, 0
      %p285 = por %p283, %p284
      %p286 = scmp.ne.s32.totalorder %s274, %s275
      %p287 = scmp.eq.s32.totalorder %s34, 1
      %p288 = por %p286, %p287
      %p290 = scmp.ne.s32.totalorder %s275, %s289
      %p291 = scmp.eq.s32.totalorder %s34, 0
      %p292 = por %p290, %p291
      %s294 = sadd.s32 %s293, 1
      %p297 = scmp.eq.s32.totalorder %s28, 1
      %p298 = scmp.ne.s32.totalorder %s293, %s295
      %p299 = scmp.eq.s32.totalorder %s28, 0
      %p300 = por %p298, %p299
      %p301 = scmp.ne.s32.totalorder %s293, %s295
      %p302 = scmp.eq.s32.totalorder %s33, 1
      %p303 = por %p301, %p302
      %p304 = scmp.ne.s32.totalorder %s295, %s296
      %p305 = scmp.eq.s32.totalorder %s33, 0
      %p306 = por %p304, %p305
      %p307 = scmp.ne.s32.totalorder %s295, %s296
      %p308 = scmp.eq.s32.totalorder %s34, 1
      %p309 = por %p307, %p308
      %p311 = scmp.ne.s32.totalorder %s296, %s310
      %p312 = scmp.eq.s32.totalorder %s34, 0
      %p313 = por %p311, %p312
      %s315 = sadd.s32 %s314, 1
      %p318 = scmp.eq.s32.totalorder %s28, 1
      %p319 = scmp.ne.s32.totalorder %s314, %s316
      %p320 = scmp.eq.s32.totalorder %s28, 0
      %p321 = por %p319, %p320
      %p322 = scmp.ne.s32.totalorder %s314, %s316
      %p323 = scmp.eq.s32.totalorder %s33, 1
      %p324 = por %p322, %p323
      %p325 = scmp.ne.s32.totalorder %s316, %s317
      %p326 = scmp.eq.s32.totalorder %s33, 0
      %p327 = por %p325, %p326
      %p328 = scmp.ne.s32.totalorder %s316, %s317
      %p329 = scmp.eq.s32.totalorder %s34, 1
      %p330 = por %p328, %p329
      %p332 = scmp.ne.s32.totalorder %s317, %s331
      %p333 = scmp.eq.s32.totalorder %s34, 0
      %p334 = por %p332, %p333
      %s336 = sadd.s32 %s335, 1
      %p339 = scmp.eq.s32.totalorder %s28, 1
      %p340 = scmp.ne.s32.totalorder %s335, %s337
      %p341 = scmp.eq.s32.totalorder %s28, 0
      %p342 = por %p340, %p341
      %p343 = scmp.ne.s32.totalorder %s335, %s337
      %p344 = scmp.eq.s32.totalorder %s33, 1
      %p345 = por %p343, %p344
      %p346 = scmp.ne.s32.totalorder %s337, %s338
      %p347 = scmp.eq.s32.totalorder %s33, 0
      %p348 = por %p346, %p347
      %p349 = scmp.ne.s32.totalorder %s337, %s338
      %p350 = scmp.eq.s32.totalorder %s34, 1
      %p351 = por %p349, %p350
      %p353 = scmp.ne.s32.totalorder %s338, %s352
      %p354 = scmp.eq.s32.totalorder %s34, 0
      %p355 = por %p353, %p354
      %s357 = sadd.s32 %s356, 1
      %p360 = scmp.eq.s32.totalorder %s28, 1
      %p361 = scmp.ne.s32.totalorder %s356, %s358
      %p362 = scmp.eq.s32.totalorder %s28, 0
      %p363 = por %p361, %p362
      %p364 = scmp.ne.s32.totalorder %s356, %s358
      %p365 = scmp.eq.s32.totalorder %s33, 1
      %p366 = por %p364, %p365
      %p367 = scmp.ne.s32.totalorder %s358, %s359
      %p368 = scmp.eq.s32.totalorder %s33, 0
      %p369 = por %p367, %p368
      %p370 = scmp.ne.s32.totalorder %s358, %s359
      %p371 = scmp.eq.s32.totalorder %s34, 1
      %p372 = por %p370, %p371
      %p374 = scmp.ne.s32.totalorder %s359, %s373
      %p375 = scmp.eq.s32.totalorder %s34, 0
      %p376 = por %p374, %p375
      %s378 = sadd.s32 %s377, 1
      %p381 = scmp.eq.s32.totalorder %s28, 1
      %p382 = scmp.ne.s32.totalorder %s377, %s379
      %p383 = scmp.eq.s32.totalorder %s28, 0
      %p384 = por %p382, %p383
      %p385 = scmp.ne.s32.totalorder %s377, %s379
      %p386 = scmp.eq.s32.totalorder %s33, 1
      %p387 = por %p385, %p386
      %p388 = scmp.ne.s32.totalorder %s379, %s380
      %p389 = scmp.eq.s32.totalorder %s33, 0
      %p390 = por %p388, %p389
      %p391 = scmp.ne.s32.totalorder %s379, %s380
      %p392 = scmp.eq.s32.totalorder %s34, 1
      %p393 = por %p391, %p392
      %p395 = scmp.ne.s32.totalorder %s380, %s394
      %p396 = scmp.eq.s32.totalorder %s34, 0
      %p397 = por %p395, %p396
      %s398 = ssub.s32 %s28, %s35
      %p399 = scmp.eq.s32.totalorder %s398, 0
      %s401 = sadd.s32 %s400, 1
      %s402 = scalar_select %p399, %s400, %s401
      %p405 = pneg %p399
      %p406 = scmp.eq.s32.totalorder %s28, 1
      %p407 = por %p405, %p406
      %p408 = scmp.ne.s32.totalorder %s400, %s403
      %p409 = scmp.eq.s32.totalorder %s28, 0
      %p410 = por %p408, %p409
      %p411 = scmp.ne.s32.totalorder %s400, %s403
      %p412 = scmp.eq.s32.totalorder %s33, 1
      %p413 = por %p411, %p412
      %p414 = scmp.ne.s32.totalorder %s403, %s404
      %p415 = scmp.eq.s32.totalorder %s33, 0
      %p416 = por %p414, %p415
      %p417 = scmp.ne.s32.totalorder %s403, %s404
      %p418 = scmp.eq.s32.totalorder %s34, 1
      %p419 = por %p417, %p418
      %p421 = scmp.ne.s32.totalorder %s404, %s420
      %p422 = scmp.eq.s32.totalorder %s34, 0
      %p423 = por %p421, %p422
      %p424 = scmp.le.s32.totalorder 1, %s28
      %p425 = scmp.lt.s32.totalorder %s28, 3
      %p426 = pnand %p424, %p425
      %p427 = pneg %p426
      // Predicated region
      $region9: #{tpu_custom_call.1} parent=5 // pred_check
        _
      $region10: #{tpu_custom_call.1} parent=5 // pred_check_branch
        %429 = sbr.rel (%p426) target = $region12
      $region11: #{tpu_custom_call.1} parent=5 // pred_region
        %s430 = ssub.s32 %s28, 1
        // Predicated region
        $region13: #{tpu_custom_call.1} parent=11 // pred_check
          %p431 = pneg %p75
        $region14: #{tpu_custom_call.1} parent=11 // pred_check_branch
          %433 = sbr.rel (%p431) target = $region16
        $region15: #{tpu_custom_call.1} parent=11 // pred_region
          _
        $region16: #{tpu_custom_call.1} parent=11 // pred_fallthru
          _
        // Predicated region
        $region17: #{tpu_custom_call.1} parent=11 // pred_check
          %p434 = pneg %p96
        $region18: #{tpu_custom_call.1} parent=11 // pred_check_branch
          %436 = sbr.rel (%p434) target = $region20
        $region19: #{tpu_custom_call.1} parent=11 // pred_region
          _
        $region20: #{tpu_custom_call.1} parent=11 // pred_fallthru
          _
        // Predicated region
        $region21: #{tpu_custom_call.1} parent=11 // pred_check
          %p437 = pneg %p117
        $region22: #{tpu_custom_call.1} parent=11 // pred_check_branch
          %439 = sbr.rel (%p437) target = $region24
        $region23: #{tpu_custom_call.1} parent=11 // pred_region
          _
        $region24: #{tpu_custom_call.1} parent=11 // pred_fallthru
          _
        // Predicated region
        $region25: #{tpu_custom_call.1} parent=11 // pred_check
          %p440 = pneg %p138
        $region26: #{tpu_custom_call.1} parent=11 // pred_check_branch
          %442 = sbr.rel (%p440) target = $region28
        $region27: #{tpu_custom_call.1} parent=11 // pred_region
          _
        $region28: #{tpu_custom_call.1} parent=11 // pred_fallthru
          _
        // Predicated region
        $region29: #{tpu_custom_call.1} parent=11 // pred_check
          %p443 = pneg %p159
        $region30: #{tpu_custom_call.1} parent=11 // pred_check_branch
          %445 = sbr.rel (%p443) target = $region32
        $region31: #{tpu_custom_call.1} parent=11 // pred_region
          %s447 = ssub.s32 4096, 4096
          %448 = vsyncadd [#allocation4], %s447
          %s449 = sshll.u32 [#allocation3], 4
          %s450 = int_to_ptr.vmem [resolvable:$true] %s449
          %455 = dma.hbm_to_vmem [thread:$0]  %s5, 4096, %s450, [#allocation4], 128, 128, 8
        $region32: #{tpu_custom_call.1} parent=11 // pred_fallthru
          _
        // Predicated region
        $region33: #{tpu_custom_call.1} parent=11 // pred_check
          %p456 = pneg %p180
        $region34: #{tpu_custom_call.1} parent=11 // pred_check_branch
          %458 = sbr.rel (%p456) target = $region36
        $region35: #{tpu_custom_call.1} parent=11 // pred_region
          _
        $region36: #{tpu_custom_call.1} parent=11 // pred_fallthru
          _
        // Predicated region
        $region37: #{tpu_custom_call.1} parent=11 // pred_check
          %p459 = pneg %p201
        $region38: #{tpu_custom_call.1} parent=11 // pred_check_branch
          %461 = sbr.rel (%p459) target = $region40
        $region39: #{tpu_custom_call.1} parent=11 // pred_region
          %s463 = ssub.s32 4096, 4096
          %464 = vsyncadd [#allocation6], %s463
          %s465 = sshll.u32 [#allocation5], 4
          %s466 = int_to_ptr.vmem [resolvable:$true] %s465
          %471 = dma.hbm_to_vmem [thread:$0]  %s7, 4096, %s466, [#allocation6], 128, 128, 8
        $region40: #{tpu_custom_call.1} parent=11 // pred_fallthru
          _
        // Predicated region
        $region41: #{tpu_custom_call.1} parent=11 // pred_check
          %p472 = pneg %p222
        $region42: #{tpu_custom_call.1} parent=11 // pred_check_branch
          %474 = sbr.rel (%p472) target = $region44
        $region43: #{tpu_custom_call.1} parent=11 // pred_region
          _
        $region44: #{tpu_custom_call.1} parent=11 // pred_fallthru
          _
        // Predicated region
        $region45: #{tpu_custom_call.1} parent=11 // pred_check
          %p475 = pneg %p243
        $region46: #{tpu_custom_call.1} parent=11 // pred_check_branch
          %477 = sbr.rel (%p475) target = $region48
        $region47: #{tpu_custom_call.1} parent=11 // pred_region
          %s479 = ssub.s32 4096, 4096
          %480 = vsyncadd [#allocation6], %s479
          %s481 = sshll.u32 [#allocation7], 4
          %s482 = int_to_ptr.vmem [resolvable:$true] %s481
          %487 = dma.hbm_to_vmem [thread:$0]  %s9, 4096, %s482, [#allocation6], 128, 128, 8
        $region48: #{tpu_custom_call.1} parent=11 // pred_fallthru
          _
        // Predicated region
        $region49: #{tpu_custom_call.1} parent=11 // pred_check
          %p488 = pneg %p264
        $region50: #{tpu_custom_call.1} parent=11 // pred_check_branch
          %490 = sbr.rel (%p488) target = $region52
        $region51: #{tpu_custom_call.1} parent=11 // pred_region
          _
        $region52: #{tpu_custom_call.1} parent=11 // pred_fallthru
          _
        // Predicated region
        $region53: #{tpu_custom_call.1} parent=11 // pred_check
          %p491 = pneg %p285
        $region54: #{tpu_custom_call.1} parent=11 // pred_check_branch
          %493 = sbr.rel (%p491) target = $region56
        $region55: #{tpu_custom_call.1} parent=11 // pred_region
          %s495 = ssub.s32 4096, 4096
          %496 = vsyncadd [#allocation9], %s495
          %s497 = sshll.u32 [#allocation8], 4
          %s498 = int_to_ptr.vmem [resolvable:$true] %s497
          %503 = dma.hbm_to_vmem [thread:$0]  %s11, 4096, %s498, [#allocation9], 128, 128, 8
        $region56: #{tpu_custom_call.1} parent=11 // pred_fallthru
          _
        // Predicated region
        $region57: #{tpu_custom_call.1} parent=11 // pred_check
          %p504 = pneg %p306
        $region58: #{tpu_custom_call.1} parent=11 // pred_check_branch
          %506 = sbr.rel (%p504) target = $region60
        $region59: #{tpu_custom_call.1} parent=11 // pred_region
          _
        $region60: #{tpu_custom_call.1} parent=11 // pred_fallthru
          _
        // Predicated region
        $region61: #{tpu_custom_call.1} parent=11 // pred_check
          %p507 = pneg %p327
        $region62: #{tpu_custom_call.1} parent=11 // pred_check_branch
          %509 = sbr.rel (%p507) target = $region64
        $region63: #{tpu_custom_call.1} parent=11 // pred_region
          %s511 = ssub.s32 4096, 4096
          %512 = vsyncadd [#allocation9], %s511
          %s513 = sshll.u32 [#allocation10], 4
          %s514 = int_to_ptr.vmem [resolvable:$true] %s513
          %519 = dma.hbm_to_vmem [thread:$0]  %s13, 4096, %s514, [#allocation9], 128, 128, 8
        $region64: #{tpu_custom_call.1} parent=11 // pred_fallthru
          _
        // Predicated region
        $region65: #{tpu_custom_call.1} parent=11 // pred_check
          %p520 = pneg %p348
        $region66: #{tpu_custom_call.1} parent=11 // pred_check_branch
          %522 = sbr.rel (%p520) target = $region68
        $region67: #{tpu_custom_call.1} parent=11 // pred_region
          _
        $region68: #{tpu_custom_call.1} parent=11 // pred_fallthru
          _
        // Predicated region
        $region69: #{tpu_custom_call.1} parent=11 // pred_check
          %p523 = pneg %p369
        $region70: #{tpu_custom_call.1} parent=11 // pred_check_branch
          %525 = sbr.rel (%p523) target = $region72
        $region71: #{tpu_custom_call.1} parent=11 // pred_region
          _
        $region72: #{tpu_custom_call.1} parent=11 // pred_fallthru
          _
        // Predicated region
        $region73: #{tpu_custom_call.1} parent=11 // pred_check
          %p526 = pneg %p390
        $region74: #{tpu_custom_call.1} parent=11 // pred_check_branch
          %528 = sbr.rel (%p526) target = $region76
        $region75: #{tpu_custom_call.1} parent=11 // pred_region
          _
        $region76: #{tpu_custom_call.1} parent=11 // pred_fallthru
          _
      $region12: #{tpu_custom_call.1} parent=5 // pred_fallthru
        _
      %p529 = scmp.lt.s32.totalorder %s28, 2
      // Predicated region
      $region77: #{tpu_custom_call.1} parent=5 // pred_check
        %p530 = pneg %p529
      $region78: #{tpu_custom_call.1} parent=5 // pred_check_branch
        %532 = sbr.rel (%p530) target = $region80
      $region79: #{tpu_custom_call.1} parent=5 // pred_region
        // Predicated region
        $region81: #{tpu_custom_call.1} parent=79 // pred_check
          %p533 = pneg %p48
        $region82: #{tpu_custom_call.1} parent=79 // pred_check_branch
          %535 = sbr.rel (%p533) target = $region84
        $region83: #{tpu_custom_call.1} parent=79 // pred_region
          %s536 = smul.u32 16, %s28
          %p537 = scmp.lt.s32.totalorder %s536, 31
          %s538 = scalar_select %p537, %s536, 31
          %s539 = smul.addr %s538, 8
          %s540 = scalar_lea.vmem %s0, %s539
          %s541 = smul.u32 16, %s28
        $region84: #{tpu_custom_call.1} parent=79 // pred_fallthru
          _
      $region80: #{tpu_custom_call.1} parent=5 // pred_fallthru
        _
      %p542 = scmp.le.s32.totalorder 1, %s28
      %p543 = scmp.lt.s32.totalorder %s28, 3
      %p544 = pnand %p542, %p543
      %p545 = pneg %p544
      // Predicated region
      $region85: #{tpu_custom_call.1} parent=5 // pred_check
        _
      $region86: #{tpu_custom_call.1} parent=5 // pred_check_branch
        %547 = sbr.rel (%p544) target = $region88
      $region87: #{tpu_custom_call.1} parent=5 // pred_region
        %s548 = ssub.s32 %s28, 1
        // Predicated region
        $region89: #{tpu_custom_call.1} parent=87 // pred_check
          %p549 = pneg %p159
        $region90: #{tpu_custom_call.1} parent=87 // pred_check_branch
          %551 = sbr.rel (%p549) target = $region92
        $region91: #{tpu_custom_call.1} parent=87 // pred_region
          %552 = dma.done [#allocation4], 4096
        $region92: #{tpu_custom_call.1} parent=87 // pred_fallthru
          _
        // Predicated region
        $region93: #{tpu_custom_call.1} parent=87 // pred_check
          %p553 = pneg %p201
        $region94: #{tpu_custom_call.1} parent=87 // pred_check_branch
          %555 = sbr.rel (%p553) target = $region96
        $region95: #{tpu_custom_call.1} parent=87 // pred_region
          %556 = dma.done [#allocation6], 4096
        $region96: #{tpu_custom_call.1} parent=87 // pred_fallthru
          _
        // Predicated region
        $region97: #{tpu_custom_call.1} parent=87 // pred_check
          %p557 = pneg %p243
        $region98: #{tpu_custom_call.1} parent=87 // pred_check_branch
          %559 = sbr.rel (%p557) target = $region100
        $region99: #{tpu_custom_call.1} parent=87 // pred_region
          %560 = dma.done [#allocation6], 4096
        $region100: #{tpu_custom_call.1} parent=87 // pred_fallthru
          _
        // Predicated region
        $region101: #{tpu_custom_call.1} parent=87 // pred_check
          %p561 = pneg %p285
        $region102: #{tpu_custom_call.1} parent=87 // pred_check_branch
          %563 = sbr.rel (%p561) target = $region104
        $region103: #{tpu_custom_call.1} parent=87 // pred_region
          %564 = dma.done [#allocation9], 4096
        $region104: #{tpu_custom_call.1} parent=87 // pred_fallthru
          _
        // Predicated region
        $region105: #{tpu_custom_call.1} parent=87 // pred_check
          %p565 = pneg %p327
        $region106: #{tpu_custom_call.1} parent=87 // pred_check_branch
          %567 = sbr.rel (%p565) target = $region108
        $region107: #{tpu_custom_call.1} parent=87 // pred_region
          %568 = dma.done [#allocation9], 4096
        $region108: #{tpu_custom_call.1} parent=87 // pred_fallthru
          _
        %s569 = smul.u32 16, %s33
        %p570 = scmp.lt.s32.totalorder %s569, 31
        %s571 = scalar_select %p570, %s569, 31
        %s572 = smul.addr %s571, 8
        %s573 = scalar_lea.vmem %s0, %s572
        %p574 = pneg %p54
        %p575 = pneg %p51
        %p576 = pneg %p75
        %p577 = pneg %p72
        %p578 = pneg %p96
        %p579 = pneg %p93
        %p580 = pneg %p117
        %p581 = pneg %p114
        %p582 = pneg %p138
        %p583 = pneg %p135
        %p584 = pneg %p159
        %p585 = pneg %p156
        %p586 = pneg %p180
        %p587 = pneg %p177
        %p588 = pneg %p201
        %p589 = pneg %p198
        %p590 = pneg %p222
        %p591 = pneg %p219
        %p592 = pneg %p243
        %p593 = pneg %p240
        %p594 = pneg %p264
        %p595 = pneg %p261
        %p596 = pneg %p285
        %p597 = pneg %p282
        %p598 = pneg %p306
        %p599 = pneg %p303
        %p600 = pneg %p327
        %p601 = pneg %p324
        %p602 = pneg %p348
        %p603 = pneg %p345
        %p604 = pneg %p369
        %p605 = pneg %p366
        %p606 = pneg %p390
        %p607 = pneg %p387
        %p608 = pneg %p416
        %p609 = pneg %p413
        %s610 = smul.u32 16, %s33
        %p611 = scmp.lt.s32.totalorder %s610, 31
        %s612 = scalar_select %p611, %s610, 31
        %s613 = smul.addr %s612, 8
        %s614 = scalar_lea.vmem %s17, %s613
        %s615 = smul.u32 16, %s33
        %p616 = scmp.lt.s32.totalorder %s615, 31
        %s617 = scalar_select %p616, %s615, 31
        %s618 = smul.addr %s617, 8
        %s619 = scalar_lea.vmem %s0, %s618
        %s620 = smul.u32 16, %s33
        %s621 = smul.u32 16, %s33
        %p622 = scmp.lt.s32.totalorder %s621, 31
        %s623 = scalar_select %p622, %s621, 31
        %s624 = smul.addr %s623, 8
        %s625 = scalar_lea.vmem %s17, %s624
        %s626 = smul.u32 16, %s33
        %v627 = vld [vmem:[%s619] sm:$0xff]
        %v628 = vld [vmem:[%s619 + $0x8] sm:$0xff]
        %v629 = vld [vmem:[%s619 + $0x10] sm:$0xff]
        %v630 = vld [vmem:[%s619 + $0x18] sm:$0xff]
        %v631 = vld [vmem:[%s619 + $0x20] sm:$0xff]
        %v632 = vld [vmem:[%s619 + $0x28] sm:$0xff]
        %v633 = vld [vmem:[%s619 + $0x30] sm:$0xff]
        %v634 = vld [vmem:[%s619 + $0x38] sm:$0xff]
        %v635 = vld [vmem:[%s619 + $0x40] sm:$0xff]
        %v636 = vld [vmem:[%s619 + $0x48] sm:$0xff]
        %v637 = vld [vmem:[%s619 + $0x50] sm:$0xff]
        %v638 = vld [vmem:[%s619 + $0x58] sm:$0xff]
        %v639 = vld [vmem:[%s619 + $0x60] sm:$0xff]
        %v640 = vld [vmem:[%s619 + $0x68] sm:$0xff]
        %v641 = vld [vmem:[%s619 + $0x70] sm:$0xff]
        %v642 = vld [vmem:[%s619 + $0x78] sm:$0xff]
        %v643 = vld [vmem:[%s1] sm:$0x3]
        %645 = vset.pattern.permute.xlu0 0
        %646 = vperm.xlu0 %645, %v627
        %v647 = vpop.permute.xlu0 %646
        %650 = vset.pattern.permute.xlu0 0
        %651 = vperm.xlu0 %650, %v628
        %v652 = vpop.permute.xlu0 %651
        %655 = vset.pattern.permute.xlu0 0
        %656 = vperm.xlu0 %655, %v629
        %v657 = vpop.permute.xlu0 %656
        %660 = vset.pattern.permute.xlu0 0
        %661 = vperm.xlu0 %660, %v630
        %v662 = vpop.permute.xlu0 %661
        %665 = vset.pattern.permute.xlu0 0
        %666 = vperm.xlu0 %665, %v631
        %v667 = vpop.permute.xlu0 %666
        %670 = vset.pattern.permute.xlu0 0
        %671 = vperm.xlu0 %670, %v632
        %v672 = vpop.permute.xlu0 %671
        %675 = vset.pattern.permute.xlu0 0
        %676 = vperm.xlu0 %675, %v633
        %v677 = vpop.permute.xlu0 %676
        %680 = vset.pattern.permute.xlu0 0
        %681 = vperm.xlu0 %680, %v634
        %v682 = vpop.permute.xlu0 %681
        %685 = vset.pattern.permute.xlu0 0
        %686 = vperm.xlu0 %685, %v635
        %v687 = vpop.permute.xlu0 %686
        %690 = vset.pattern.permute.xlu0 0
        %691 = vperm.xlu0 %690, %v636
        %v692 = vpop.permute.xlu0 %691
        %695 = vset.pattern.permute.xlu0 0
        %696 = vperm.xlu0 %695, %v637
        %v697 = vpop.permute.xlu0 %696
        %700 = vset.pattern.permute.xlu0 0
        %701 = vperm.xlu0 %700, %v638
        %v702 = vpop.permute.xlu0 %701
        %705 = vset.pattern.permute.xlu0 0
        %706 = vperm.xlu0 %705, %v639
        %v707 = vpop.permute.xlu0 %706
        %710 = vset.pattern.permute.xlu0 0
        %711 = vperm.xlu0 %710, %v640
        %v712 = vpop.permute.xlu0 %711
        %715 = vset.pattern.permute.xlu0 0
        %716 = vperm.xlu0 %715, %v641
        %v717 = vpop.permute.xlu0 %716
        %720 = vset.pattern.permute.xlu0 0
        %721 = vperm.xlu0 %720, %v642
        %v722 = vpop.permute.xlu0 %721
        %v725 = vlaneseq
        %v726 = vshrl.u32 %v725, 7
        %v727 = vsub.s32 0, %v726
        %v728 = vrot.slane %v643, %v727
        %v729 = vlaneseq
        %v730 = vshrl.u32 %v729, 7
        %v731 = vsub.s32 1, %v730
        %v732 = vrot.slane %v643, %v731
        %v735 = vmul.f32 %v647, %v728
        %v736 = vmul.f32 %v647, %v732
        %v737 = vmul.f32 %v652, %v728
        %v738 = vmul.f32 %v652, %v732
        %v739 = vmul.f32 %v657, %v728
        %v740 = vmul.f32 %v657, %v732
        %v741 = vmul.f32 %v662, %v728
        %v742 = vmul.f32 %v662, %v732
        %v743 = vmul.f32 %v667, %v728
        %v744 = vmul.f32 %v667, %v732
        %v745 = vmul.f32 %v672, %v728
        %v746 = vmul.f32 %v672, %v732
        %v747 = vmul.f32 %v677, %v728
        %v748 = vmul.f32 %v677, %v732
        %v749 = vmul.f32 %v682, %v728
        %v750 = vmul.f32 %v682, %v732
        %v751 = vmul.f32 %v687, %v728
        %v752 = vmul.f32 %v687, %v732
        %v753 = vmul.f32 %v692, %v728
        %v754 = vmul.f32 %v692, %v732
        %v755 = vmul.f32 %v697, %v728
        %v756 = vmul.f32 %v697, %v732
        %v757 = vmul.f32 %v702, %v728
        %v758 = vmul.f32 %v702, %v732
        %v759 = vmul.f32 %v707, %v728
        %v760 = vmul.f32 %v707, %v732
        %v761 = vmul.f32 %v712, %v728
        %v762 = vmul.f32 %v712, %v732
        %v763 = vmul.f32 %v717, %v728
        %v764 = vmul.f32 %v717, %v732
        %v765 = vmul.f32 %v722, %v728
        %v766 = vmul.f32 %v722, %v732
        %v767 = vld [vmem:[%s2] sm:$0x3]
        %v769 = vlaneseq
        %v770 = vshrl.u32 %v769, 7
        %v771 = vsub.s32 0, %v770
        %v772 = vrot.slane %v767, %v771
        %v773 = vlaneseq
        %v774 = vshrl.u32 %v773, 7
        %v775 = vsub.s32 1, %v774
        %v776 = vrot.slane %v767, %v775
        %v779 = vadd.f32 %v735, %v772
        %v780 = vadd.f32 %v736, %v776
        %v781 = vadd.f32 %v737, %v772
        %v782 = vadd.f32 %v738, %v776
        %v783 = vadd.f32 %v739, %v772
        %v784 = vadd.f32 %v740, %v776
        %v785 = vadd.f32 %v741, %v772
        %v786 = vadd.f32 %v742, %v776
        %v787 = vadd.f32 %v743, %v772
        %v788 = vadd.f32 %v744, %v776
        %v789 = vadd.f32 %v745, %v772
        %v790 = vadd.f32 %v746, %v776
        %v791 = vadd.f32 %v747, %v772
        %v792 = vadd.f32 %v748, %v776
        %v793 = vadd.f32 %v749, %v772
        %v794 = vadd.f32 %v750, %v776
        %v795 = vadd.f32 %v751, %v772
        %v796 = vadd.f32 %v752, %v776
        %v797 = vadd.f32 %v753, %v772
        %v798 = vadd.f32 %v754, %v776
        %v799 = vadd.f32 %v755, %v772
        %v800 = vadd.f32 %v756, %v776
        %v801 = vadd.f32 %v757, %v772
        %v802 = vadd.f32 %v758, %v776
        %v803 = vadd.f32 %v759, %v772
        %v804 = vadd.f32 %v760, %v776
        %v805 = vadd.f32 %v761, %v772
        %v806 = vadd.f32 %v762, %v776
        %v807 = vadd.f32 %v763, %v772
        %v808 = vadd.f32 %v764, %v776
        %v809 = vadd.f32 %v765, %v772
        %v810 = vadd.f32 %v766, %v776
        %v811 = vmax.f32 %v779, 0.0
        %v812 = vmax.f32 %v780, 0.0
        %v813 = vmax.f32 %v781, 0.0
        %v814 = vmax.f32 %v782, 0.0
        %v815 = vmax.f32 %v783, 0.0
        %v816 = vmax.f32 %v784, 0.0
        %v817 = vmax.f32 %v785, 0.0
        %v818 = vmax.f32 %v786, 0.0
        %v819 = vmax.f32 %v787, 0.0
        %v820 = vmax.f32 %v788, 0.0
        %v821 = vmax.f32 %v789, 0.0
        %v822 = vmax.f32 %v790, 0.0
        %v823 = vmax.f32 %v791, 0.0
        %v824 = vmax.f32 %v792, 0.0
        %v825 = vmax.f32 %v793, 0.0
        %v826 = vmax.f32 %v794, 0.0
        %v827 = vmax.f32 %v795, 0.0
        %v828 = vmax.f32 %v796, 0.0
        %v829 = vmax.f32 %v797, 0.0
        %v830 = vmax.f32 %v798, 0.0
        %v831 = vmax.f32 %v799, 0.0
        %v832 = vmax.f32 %v800, 0.0
        %v833 = vmax.f32 %v801, 0.0
        %v834 = vmax.f32 %v802, 0.0
        %v835 = vmax.f32 %v803, 0.0
        %v836 = vmax.f32 %v804, 0.0
        %v837 = vmax.f32 %v805, 0.0
        %v838 = vmax.f32 %v806, 0.0
        %v839 = vmax.f32 %v807, 0.0
        %v840 = vmax.f32 %v808, 0.0
        %v841 = vmax.f32 %v809, 0.0
        %v842 = vmax.f32 %v810, 0.0
        %v843 = vpack.c.bf16 %v813, %v811
        %v844 = vpack.c.bf16 %v814, %v812
        %v845 = vpack.c.bf16 %v817, %v815
        %v846 = vpack.c.bf16 %v818, %v816
        %v847 = vpack.c.bf16 %v821, %v819
        %v848 = vpack.c.bf16 %v822, %v820
        %v849 = vpack.c.bf16 %v825, %v823
        %v850 = vpack.c.bf16 %v826, %v824
        %v851 = vpack.c.bf16 %v829, %v827
        %v852 = vpack.c.bf16 %v830, %v828
        %v853 = vpack.c.bf16 %v833, %v831
        %v854 = vpack.c.bf16 %v834, %v832
        %v855 = vpack.c.bf16 %v837, %v835
        %v856 = vpack.c.bf16 %v838, %v836
        %v857 = vpack.c.bf16 %v841, %v839
        %v858 = vpack.c.bf16 %v842, %v840
        %v859 = vld [vmem:[%s3] sm:$0xff]
        %v860 = vld [vmem:[%s3 + $0x8] sm:$0xff]
        %v861 = vld [vmem:[%s3 + $0x10] sm:$0xff]
        %v862 = vld [vmem:[%s3 + $0x18] sm:$0xff]
        %v863 = vld [vmem:[%s3 + $0x20] sm:$0xff]
        %v864 = vld [vmem:[%s3 + $0x28] sm:$0xff]
        %v865 = vld [vmem:[%s3 + $0x30] sm:$0xff]
        %v866 = vld [vmem:[%s3 + $0x38] sm:$0xff]
        %v867 = vld [vmem:[%s3 + $0x40] sm:$0xff]
        %v868 = vld [vmem:[%s3 + $0x48] sm:$0xff]
        %v869 = vld [vmem:[%s3 + $0x50] sm:$0xff]
        %v870 = vld [vmem:[%s3 + $0x58] sm:$0xff]
        %v871 = vld [vmem:[%s3 + $0x60] sm:$0xff]
        %v872 = vld [vmem:[%s3 + $0x68] sm:$0xff]
        %v873 = vld [vmem:[%s3 + $0x70] sm:$0xff]
        %v874 = vld [vmem:[%s3 + $0x78] sm:$0xff]
        %v875 = vld [vmem:[%s3 + $0x80] sm:$0xff]
        %v876 = vld [vmem:[%s3 + $0x88] sm:$0xff]
        %v877 = vld [vmem:[%s3 + $0x90] sm:$0xff]
        %v878 = vld [vmem:[%s3 + $0x98] sm:$0xff]
        %v879 = vld [vmem:[%s3 + $0xa0] sm:$0xff]
        %v880 = vld [vmem:[%s3 + $0xa8] sm:$0xff]
        %v881 = vld [vmem:[%s3 + $0xb0] sm:$0xff]
        %v882 = vld [vmem:[%s3 + $0xb8] sm:$0xff]
        %v883 = vld [vmem:[%s3 + $0xc0] sm:$0xff]
        %v884 = vld [vmem:[%s3 + $0xc8] sm:$0xff]
        %v885 = vld [vmem:[%s3 + $0xd0] sm:$0xff]
        %v886 = vld [vmem:[%s3 + $0xd8] sm:$0xff]
        %v887 = vld [vmem:[%s3 + $0xe0] sm:$0xff]
        %v888 = vld [vmem:[%s3 + $0xe8] sm:$0xff]
        %v889 = vld [vmem:[%s3 + $0xf0] sm:$0xff]
        %v890 = vld [vmem:[%s3 + $0xf8] sm:$0xff]
        %v891 = vld [vmem:[%s4] sm:$0x3]
        %v893 = vlaneseq
        %v894 = vshrl.u32 %v893, 7
        %v895 = vsub.s32 0, %v894
        %v896 = vrot.slane %v891, %v895
        %v897 = vlaneseq
        %v898 = vshrl.u32 %v897, 7
        %v899 = vsub.s32 1, %v898
        %v900 = vrot.slane %v891, %v899
        %v935 = vunpack.c.l.b16 %v859
        %v936 = vunpack.c.h.b16 %v859
        %v937 = vunpack.c.l.b16 %v860
        %v938 = vunpack.c.h.b16 %v860
        %v939 = vunpack.c.l.b16 %v861
        %v940 = vunpack.c.h.b16 %v861
        %v941 = vunpack.c.l.b16 %v862
        %v942 = vunpack.c.h.b16 %v862
        %v943 = vunpack.c.l.b16 %v863
        %v944 = vunpack.c.h.b16 %v863
        %v945 = vunpack.c.l.b16 %v864
        %v946 = vunpack.c.h.b16 %v864
        %v947 = vunpack.c.l.b16 %v865
        %v948 = vunpack.c.h.b16 %v865
        %v949 = vunpack.c.l.b16 %v866
        %v950 = vunpack.c.h.b16 %v866
        %v951 = vunpack.c.l.b16 %v867
        %v952 = vunpack.c.h.b16 %v867
        %v953 = vunpack.c.l.b16 %v868
        %v954 = vunpack.c.h.b16 %v868
        %v955 = vunpack.c.l.b16 %v869
        %v956 = vunpack.c.h.b16 %v869
        %v957 = vunpack.c.l.b16 %v870
        %v958 = vunpack.c.h.b16 %v870
        %v959 = vunpack.c.l.b16 %v871
        %v960 = vunpack.c.h.b16 %v871
        %v961 = vunpack.c.l.b16 %v872
        %v962 = vunpack.c.h.b16 %v872
        %v963 = vunpack.c.l.b16 %v873
        %v964 = vunpack.c.h.b16 %v873
        %v965 = vunpack.c.l.b16 %v874
        %v966 = vunpack.c.h.b16 %v874
        %v967 = vunpack.c.l.b16 %v875
        %v968 = vunpack.c.h.b16 %v875
        %v969 = vunpack.c.l.b16 %v876
        %v970 = vunpack.c.h.b16 %v876
        %v971 = vunpack.c.l.b16 %v877
        %v972 = vunpack.c.h.b16 %v877
        %v973 = vunpack.c.l.b16 %v878
        %v974 = vunpack.c.h.b16 %v878
        %v975 = vunpack.c.l.b16 %v879
        %v976 = vunpack.c.h.b16 %v879
        %v977 = vunpack.c.l.b16 %v880
        %v978 = vunpack.c.h.b16 %v880
        %v979 = vunpack.c.l.b16 %v881
        %v980 = vunpack.c.h.b16 %v881
        %v981 = vunpack.c.l.b16 %v882
        %v982 = vunpack.c.h.b16 %v882
        %v983 = vunpack.c.l.b16 %v883
        %v984 = vunpack.c.h.b16 %v883
        %v985 = vunpack.c.l.b16 %v884
        %v986 = vunpack.c.h.b16 %v884
        %v987 = vunpack.c.l.b16 %v885
        %v988 = vunpack.c.h.b16 %v885
        %v989 = vunpack.c.l.b16 %v886
        %v990 = vunpack.c.h.b16 %v886
        %v991 = vunpack.c.l.b16 %v887
        %v992 = vunpack.c.h.b16 %v887
        %v993 = vunpack.c.l.b16 %v888
        %v994 = vunpack.c.h.b16 %v888
        %v995 = vunpack.c.l.b16 %v889
        %v996 = vunpack.c.h.b16 %v889
        %v997 = vunpack.c.l.b16 %v890
        %v998 = vunpack.c.h.b16 %v890
        %v999 = vpack.c.b16 %v937, %v935
        %v1000 = vpack.c.b16 %v938, %v936
        %v1001 = vpack.c.b16 %v941, %v939
        %v1002 = vpack.c.b16 %v942, %v940
        %v1003 = vpack.c.b16 %v945, %v943
        %v1004 = vpack.c.b16 %v946, %v944
        %v1005 = vpack.c.b16 %v949, %v947
        %v1006 = vpack.c.b16 %v950, %v948
        %v1007 = vpack.c.b16 %v953, %v951
        %v1008 = vpack.c.b16 %v954, %v952
        %v1009 = vpack.c.b16 %v957, %v955
        %v1010 = vpack.c.b16 %v958, %v956
        %v1011 = vpack.c.b16 %v961, %v959
        %v1012 = vpack.c.b16 %v962, %v960
        %v1013 = vpack.c.b16 %v965, %v963
        %v1014 = vpack.c.b16 %v966, %v964
        %v1015 = vpack.c.b16 %v969, %v967
        %v1016 = vpack.c.b16 %v970, %v968
        %v1017 = vpack.c.b16 %v973, %v971
        %v1018 = vpack.c.b16 %v974, %v972
        %v1019 = vpack.c.b16 %v977, %v975
        %v1020 = vpack.c.b16 %v978, %v976
        %v1021 = vpack.c.b16 %v981, %v979
        %v1022 = vpack.c.b16 %v982, %v980
        %v1023 = vpack.c.b16 %v985, %v983
        %v1024 = vpack.c.b16 %v986, %v984
        %v1025 = vpack.c.b16 %v989, %v987
        %v1026 = vpack.c.b16 %v990, %v988
        %v1027 = vpack.c.b16 %v993, %v991
        %v1028 = vpack.c.b16 %v994, %v992
        %v1029 = vpack.c.b16 %v997, %v995
        %v1030 = vpack.c.b16 %v998, %v996
        %1063 = vmatprep.subr.bf16.mxu0 %v1000
        %1064 = vmatpush1.bf16.msra.mxu0 %v999
        %1065 = vmatprep.subr.bf16.mxu0 %v1002
        %1066 = vmatpush1.bf16.msra.mxu0 %v1001
        %1067 = vmatprep.subr.bf16.mxu0 %v1004
        %1068 = vmatpush1.bf16.msra.mxu0 %v1003
        %1069 = vmatprep.subr.bf16.mxu0 %v1006
        %1070 = vmatpush1.bf16.msra.mxu0 %v1005
        %1071 = vmatprep.subr.bf16.mxu0 %v1008
        %1072 = vmatpush1.bf16.msra.mxu0 %v1007
        %1073 = vmatprep.subr.bf16.mxu0 %v1010
        %1074 = vmatpush1.bf16.msra.mxu0 %v1009
        %1075 = vmatprep.subr.bf16.mxu0 %v1012
        %1076 = vmatpush1.bf16.msra.mxu0 %v1011
        %1077 = vmatprep.subr.bf16.mxu0 %v1014
        %1078 = vmatpush1.bf16.msra.mxu0 %v1013
        %1079 = vmatprep.subr.bf16.mxu0 %v1016
        %1080 = vmatpush1.bf16.msra.mxu0 %v1015
        %1081 = vmatprep.subr.bf16.mxu0 %v1018
        %1082 = vmatpush1.bf16.msra.mxu0 %v1017
        %1083 = vmatprep.subr.bf16.mxu0 %v1020
        %1084 = vmatpush1.bf16.msra.mxu0 %v1019
        %1085 = vmatprep.subr.bf16.mxu0 %v1022
        %1086 = vmatpush1.bf16.msra.mxu0 %v1021
        %1087 = vmatprep.subr.bf16.mxu0 %v1024
        %1088 = vmatpush1.bf16.msra.mxu0 %v1023
        %1089 = vmatprep.subr.bf16.mxu0 %v1026
        %1090 = vmatpush1.bf16.msra.mxu0 %v1025
        %1091 = vmatprep.subr.bf16.mxu0 %v1028
        %1092 = vmatpush1.bf16.msra.mxu0 %v1027
        %1093 = vmatprep.subr.bf16.mxu0 %v1030
        %1094 = vmatpush1.bf16.msra.mxu0 %v1029
        %1095 = vmatprep.mubr.bf16.mxu0 %v844
        %1096 = vmatmul.mubr.bf16.gmra.mrb[0].mxu0 %v843
        %v1097 = vpop.f32.mrb[0].mxu0
        %v1098 = vadd.f32 %v896, %v1097
        %v1099 = vpop.f32.mrb[0].mxu0
        %v1100 = vadd.f32 %v900, %v1099
        %v1101 = vpop.f32.mrb[0].mxu0
        %v1102 = vadd.f32 %v896, %v1101
        %v1103 = vpop.f32.mrb[0].mxu0
        %v1104 = vadd.f32 %v900, %v1103
        %1105 = vmatprep.mubr.bf16.mxu0 %v846
        %1106 = vmatmul.mubr.bf16.gmra.mrb[0].mxu0 %v845
        %v1107 = vpop.f32.mrb[0].mxu0
        %v1108 = vadd.f32 %v896, %v1107
        %v1109 = vpop.f32.mrb[0].mxu0
        %v1110 = vadd.f32 %v900, %v1109
        %v1111 = vpop.f32.mrb[0].mxu0
        %v1112 = vadd.f32 %v896, %v1111
        %v1113 = vpop.f32.mrb[0].mxu0
        %v1114 = vadd.f32 %v900, %v1113
        %1115 = vmatprep.mubr.bf16.mxu0 %v848
        %1116 = vmatmul.mubr.bf16.gmra.mrb[0].mxu0 %v847
        %v1117 = vpop.f32.mrb[0].mxu0
        %v1118 = vadd.f32 %v896, %v1117
        %v1119 = vpop.f32.mrb[0].mxu0
        %v1120 = vadd.f32 %v900, %v1119
        %v1121 = vpop.f32.mrb[0].mxu0
        %v1122 = vadd.f32 %v896, %v1121
        %v1123 = vpop.f32.mrb[0].mxu0
        %v1124 = vadd.f32 %v900, %v1123
        %1125 = vmatprep.mubr.bf16.mxu0 %v850
        %1126 = vmatmul.mubr.bf16.gmra.mrb[0].mxu0 %v849
        %v1127 = vpop.f32.mrb[0].mxu0
        %v1128 = vadd.f32 %v896, %v1127
        %v1129 = vpop.f32.mrb[0].mxu0
        %v1130 = vadd.f32 %v900, %v1129
        %v1131 = vpop.f32.mrb[0].mxu0
        %v1132 = vadd.f32 %v896, %v1131
        %v1133 = vpop.f32.mrb[0].mxu0
        %v1134 = vadd.f32 %v900, %v1133
        %1135 = vmatprep.mubr.bf16.mxu0 %v852
        %1136 = vmatmul.mubr.bf16.gmra.mrb[0].mxu0 %v851
        %v1137 = vpop.f32.mrb[0].mxu0
        %v1138 = vadd.f32 %v896, %v1137
        %v1139 = vpop.f32.mrb[0].mxu0
        %v1140 = vadd.f32 %v900, %v1139
        %v1141 = vpop.f32.mrb[0].mxu0
        %v1142 = vadd.f32 %v896, %v1141
        %v1143 = vpop.f32.mrb[0].mxu0
        %v1144 = vadd.f32 %v900, %v1143
        %1145 = vmatprep.mubr.bf16.mxu0 %v854
        %1146 = vmatmul.mubr.bf16.gmra.mrb[0].mxu0 %v853
        %v1147 = vpop.f32.mrb[0].mxu0
        %v1148 = vadd.f32 %v896, %v1147
        %v1149 = vpop.f32.mrb[0].mxu0
        %v1150 = vadd.f32 %v900, %v1149
        %v1151 = vpop.f32.mrb[0].mxu0
        %v1152 = vadd.f32 %v896, %v1151
        %v1153 = vpop.f32.mrb[0].mxu0
        %v1154 = vadd.f32 %v900, %v1153
        %1155 = vmatprep.mubr.bf16.mxu0 %v856
        %1156 = vmatmul.mubr.bf16.gmra.mrb[0].mxu0 %v855
        %v1157 = vpop.f32.mrb[0].mxu0
        %v1158 = vadd.f32 %v896, %v1157
        %v1159 = vpop.f32.mrb[0].mxu0
        %v1160 = vadd.f32 %v900, %v1159
        %v1161 = vpop.f32.mrb[0].mxu0
        %v1162 = vadd.f32 %v896, %v1161
        %v1163 = vpop.f32.mrb[0].mxu0
        %v1164 = vadd.f32 %v900, %v1163
        %1165 = vmatprep.mubr.bf16.mxu0 %v858
        %1166 = vmatmul.mubr.bf16.gmra.mrb[0].mxu0 %v857
        %v1167 = vpop.f32.mrb[0].mxu0
        %v1168 = vadd.f32 %v896, %v1167
        %v1169 = vpop.f32.mrb[0].mxu0
        %v1170 = vadd.f32 %v900, %v1169
        %v1171 = vpop.f32.mrb[0].mxu0
        %v1172 = vadd.f32 %v896, %v1171
        %v1173 = vpop.f32.mrb[0].mxu0
        %v1174 = vadd.f32 %v900, %v1173
        %1175 = vdwg.mxu0
        %v1176 = vmax.f32 %v1098, 0.0
        %v1177 = vmax.f32 %v1100, 0.0
        %v1178 = vmax.f32 %v1102, 0.0
        %v1179 = vmax.f32 %v1104, 0.0
        %v1180 = vmax.f32 %v1108, 0.0
        %v1181 = vmax.f32 %v1110, 0.0
        %v1182 = vmax.f32 %v1112, 0.0
        %v1183 = vmax.f32 %v1114, 0.0
        %v1184 = vmax.f32 %v1118, 0.0
        %v1185 = vmax.f32 %v1120, 0.0
        %v1186 = vmax.f32 %v1122, 0.0
        %v1187 = vmax.f32 %v1124, 0.0
        %v1188 = vmax.f32 %v1128, 0.0
        %v1189 = vmax.f32 %v1130, 0.0
        %v1190 = vmax.f32 %v1132, 0.0
        %v1191 = vmax.f32 %v1134, 0.0
        %v1192 = vmax.f32 %v1138, 0.0
        %v1193 = vmax.f32 %v1140, 0.0
        %v1194 = vmax.f32 %v1142, 0.0
        %v1195 = vmax.f32 %v1144, 0.0
        %v1196 = vmax.f32 %v1148, 0.0
        %v1197 = vmax.f32 %v1150, 0.0
        %v1198 = vmax.f32 %v1152, 0.0
        %v1199 = vmax.f32 %v1154, 0.0
        %v1200 = vmax.f32 %v1158, 0.0
        %v1201 = vmax.f32 %v1160, 0.0
        %v1202 = vmax.f32 %v1162, 0.0
        %v1203 = vmax.f32 %v1164, 0.0
        %v1204 = vmax.f32 %v1168, 0.0
        %v1205 = vmax.f32 %v1170, 0.0
        %v1206 = vmax.f32 %v1172, 0.0
        %v1207 = vmax.f32 %v1174, 0.0
        %v1208 = vpack.c.bf16 %v1178, %v1176
        %v1209 = vpack.c.bf16 %v1179, %v1177
        %v1210 = vpack.c.bf16 %v1182, %v1180
        %v1211 = vpack.c.bf16 %v1183, %v1181
        %v1212 = vpack.c.bf16 %v1186, %v1184
        %v1213 = vpack.c.bf16 %v1187, %v1185
        %v1214 = vpack.c.bf16 %v1190, %v1188
        %v1215 = vpack.c.bf16 %v1191, %v1189
        %v1216 = vpack.c.bf16 %v1194, %v1192
        %v1217 = vpack.c.bf16 %v1195, %v1193
        %v1218 = vpack.c.bf16 %v1198, %v1196
        %v1219 = vpack.c.bf16 %v1199, %v1197
        %v1220 = vpack.c.bf16 %v1202, %v1200
        %v1221 = vpack.c.bf16 %v1203, %v1201
        %v1222 = vpack.c.bf16 %v1206, %v1204
        %v1223 = vpack.c.bf16 %v1207, %v1205
        %v1224 = vld [vmem:[#allocation3] sm:$0xff]
        %v1225 = vld [vmem:[#allocation3 + $0x8] sm:$0xff]
        %v1226 = vld [vmem:[#allocation3 + $0x10] sm:$0xff]
        %v1227 = vld [vmem:[#allocation3 + $0x18] sm:$0xff]
        %v1228 = vld [vmem:[#allocation3 + $0x20] sm:$0xff]
        %v1229 = vld [vmem:[#allocation3 + $0x28] sm:$0xff]
        %v1230 = vld [vmem:[#allocation3 + $0x30] sm:$0xff]
        %v1231 = vld [vmem:[#allocation3 + $0x38] sm:$0xff]
        %v1232 = vld [vmem:[#allocation3 + $0x40] sm:$0xff]
        %v1233 = vld [vmem:[#allocation3 + $0x48] sm:$0xff]
        %v1234 = vld [vmem:[#allocation3 + $0x50] sm:$0xff]
        %v1235 = vld [vmem:[#allocation3 + $0x58] sm:$0xff]
        %v1236 = vld [vmem:[#allocation3 + $0x60] sm:$0xff]
        %v1237 = vld [vmem:[#allocation3 + $0x68] sm:$0xff]
        %v1238 = vld [vmem:[#allocation3 + $0x70] sm:$0xff]
        %v1239 = vld [vmem:[#allocation3 + $0x78] sm:$0xff]
        %v1240 = vld [vmem:[#allocation3 + $0x80] sm:$0xff]
        %v1241 = vld [vmem:[#allocation3 + $0x88] sm:$0xff]
        %v1242 = vld [vmem:[#allocation3 + $0x90] sm:$0xff]
        %v1243 = vld [vmem:[#allocation3 + $0x98] sm:$0xff]
        %v1244 = vld [vmem:[#allocation3 + $0xa0] sm:$0xff]
        %v1245 = vld [vmem:[#allocation3 + $0xa8] sm:$0xff]
        %v1246 = vld [vmem:[#allocation3 + $0xb0] sm:$0xff]
        %v1247 = vld [vmem:[#allocation3 + $0xb8] sm:$0xff]
        %v1248 = vld [vmem:[#allocation3 + $0xc0] sm:$0xff]
        %v1249 = vld [vmem:[#allocation3 + $0xc8] sm:$0xff]
        %v1250 = vld [vmem:[#allocation3 + $0xd0] sm:$0xff]
        %v1251 = vld [vmem:[#allocation3 + $0xd8] sm:$0xff]
        %v1252 = vld [vmem:[#allocation3 + $0xe0] sm:$0xff]
        %v1253 = vld [vmem:[#allocation3 + $0xe8] sm:$0xff]
        %v1254 = vld [vmem:[#allocation3 + $0xf0] sm:$0xff]
        %v1255 = vld [vmem:[#allocation3 + $0xf8] sm:$0xff]
        %v1256 = vld [vmem:[%s6] sm:$0x3]
        %v1258 = vlaneseq
        %v1259 = vshrl.u32 %v1258, 7
        %v1260 = vsub.s32 0, %v1259
        %v1261 = vrot.slane %v1256, %v1260
        %v1262 = vlaneseq
        %v1263 = vshrl.u32 %v1262, 7
        %v1264 = vsub.s32 1, %v1263
        %v1265 = vrot.slane %v1256, %v1264
        %v1300 = vunpack.c.l.b16 %v1224
        %v1301 = vunpack.c.h.b16 %v1224
        %v1302 = vunpack.c.l.b16 %v1225
        %v1303 = vunpack.c.h.b16 %v1225
        %v1304 = vunpack.c.l.b16 %v1226
        %v1305 = vunpack.c.h.b16 %v1226
        %v1306 = vunpack.c.l.b16 %v1227
        %v1307 = vunpack.c.h.b16 %v1227
        %v1308 = vunpack.c.l.b16 %v1228
        %v1309 = vunpack.c.h.b16 %v1228
        %v1310 = vunpack.c.l.b16 %v1229
        %v1311 = vunpack.c.h.b16 %v1229
        %v1312 = vunpack.c.l.b16 %v1230
        %v1313 = vunpack.c.h.b16 %v1230
        %v1314 = vunpack.c.l.b16 %v1231
        %v1315 = vunpack.c.h.b16 %v1231
        %v1316 = vunpack.c.l.b16 %v1232
        %v1317 = vunpack.c.h.b16 %v1232
        %v1318 = vunpack.c.l.b16 %v1233
        %v1319 = vunpack.c.h.b16 %v1233
        %v1320 = vunpack.c.l.b16 %v1234
        %v1321 = vunpack.c.h.b16 %v1234
        %v1322 = vunpack.c.l.b16 %v1235
        %v1323 = vunpack.c.h.b16 %v1235
        %v1324 = vunpack.c.l.b16 %v1236
        %v1325 = vunpack.c.h.b16 %v1236
        %v1326 = vunpack.c.l.b16 %v1237
        %v1327 = vunpack.c.h.b16 %v1237
        %v1328 = vunpack.c.l.b16 %v1238
        %v1329 = vunpack.c.h.b16 %v1238
        %v1330 = vunpack.c.l.b16 %v1239
        %v1331 = vunpack.c.h.b16 %v1239
        %v1332 = vunpack.c.l.b16 %v1240
        %v1333 = vunpack.c.h.b16 %v1240
        %v1334 = vunpack.c.l.b16 %v1241
        %v1335 = vunpack.c.h.b16 %v1241
        %v1336 = vunpack.c.l.b16 %v1242
        %v1337 = vunpack.c.h.b16 %v1242
        %v1338 = vunpack.c.l.b16 %v1243
        %v1339 = vunpack.c.h.b16 %v1243
        %v1340 = vunpack.c.l.b16 %v1244
        %v1341 = vunpack.c.h.b16 %v1244
        %v1342 = vunpack.c.l.b16 %v1245
        %v1343 = vunpack.c.h.b16 %v1245
        %v1344 = vunpack.c.l.b16 %v1246
        %v1345 = vunpack.c.h.b16 %v1246
        %v1346 = vunpack.c.l.b16 %v1247
        %v1347 = vunpack.c.h.b16 %v1247
        %v1348 = vunpack.c.l.b16 %v1248
        %v1349 = vunpack.c.h.b16 %v1248
        %v1350 = vunpack.c.l.b16 %v1249
        %v1351 = vunpack.c.h.b16 %v1249
        %v1352 = vunpack.c.l.b16 %v1250
        %v1353 = vunpack.c.h.b16 %v1250
        %v1354 = vunpack.c.l.b16 %v1251
        %v1355 = vunpack.c.h.b16 %v1251
        %v1356 = vunpack.c.l.b16 %v1252
        %v1357 = vunpack.c.h.b16 %v1252
        %v1358 = vunpack.c.l.b16 %v1253
        %v1359 = vunpack.c.h.b16 %v1253
        %v1360 = vunpack.c.l.b16 %v1254
        %v1361 = vunpack.c.h.b16 %v1254
        %v1362 = vunpack.c.l.b16 %v1255
        %v1363 = vunpack.c.h.b16 %v1255
        %v1364 = vpack.c.b16 %v1302, %v1300
        %v1365 = vpack.c.b16 %v1303, %v1301
        %v1366 = vpack.c.b16 %v1306, %v1304
        %v1367 = vpack.c.b16 %v1307, %v1305
        %v1368 = vpack.c.b16 %v1310, %v1308
        %v1369 = vpack.c.b16 %v1311, %v1309
        %v1370 = vpack.c.b16 %v1314, %v1312
        %v1371 = vpack.c.b16 %v1315, %v1313
        %v1372 = vpack.c.b16 %v1318, %v1316
        %v1373 = vpack.c.b16 %v1319, %v1317
        %v1374 = vpack.c.b16 %v1322, %v1320
        %v1375 = vpack.c.b16 %v1323, %v1321
        %v1376 = vpack.c.b16 %v1326, %v1324
        %v1377 = vpack.c.b16 %v1327, %v1325
        %v1378 = vpack.c.b16 %v1330, %v1328
        %v1379 = vpack.c.b16 %v1331, %v1329
        %v1380 = vpack.c.b16 %v1334, %v1332
        %v1381 = vpack.c.b16 %v1335, %v1333
        %v1382 = vpack.c.b16 %v1338, %v1336
        %v1383 = vpack.c.b16 %v1339, %v1337
        %v1384 = vpack.c.b16 %v1342, %v1340
        %v1385 = vpack.c.b16 %v1343, %v1341
        %v1386 = vpack.c.b16 %v1346, %v1344
        %v1387 = vpack.c.b16 %v1347, %v1345
        %v1388 = vpack.c.b16 %v1350, %v1348
        %v1389 = vpack.c.b16 %v1351, %v1349
        %v1390 = vpack.c.b16 %v1354, %v1352
        %v1391 = vpack.c.b16 %v1355, %v1353
        %v1392 = vpack.c.b16 %v1358, %v1356
        %v1393 = vpack.c.b16 %v1359, %v1357
        %v1394 = vpack.c.b16 %v1362, %v1360
        %v1395 = vpack.c.b16 %v1363, %v1361
        %1428 = vmatprep.subr.bf16.mxu0 %v1365
        %1429 = vmatpush1.bf16.msra.mxu0 %v1364
        %1430 = vmatprep.subr.bf16.mxu0 %v1367
        %1431 = vmatpush1.bf16.msra.mxu0 %v1366
        %1432 = vmatprep.subr.bf16.mxu0 %v1369
        %1433 = vmatpush1.bf16.msra.mxu0 %v1368
        %1434 = vmatprep.subr.bf16.mxu0 %v1371
        %1435 = vmatpush1.bf16.msra.mxu0 %v1370
        %1436 = vmatprep.subr.bf16.mxu0 %v1373
        %1437 = vmatpush1.bf16.msra.mxu0 %v1372
        %1438 = vmatprep.subr.bf16.mxu0 %v1375
        %1439 = vmatpush1.bf16.msra.mxu0 %v1374
        %1440 = vmatprep.subr.bf16.mxu0 %v1377
        %1441 = vmatpush1.bf16.msra.mxu0 %v1376
        %1442 = vmatprep.subr.bf16.mxu0 %v1379
        %1443 = vmatpush1.bf16.msra.mxu0 %v1378
        %1444 = vmatprep.subr.bf16.mxu0 %v1381
        %1445 = vmatpush1.bf16.msra.mxu0 %v1380
        %1446 = vmatprep.subr.bf16.mxu0 %v1383
        %1447 = vmatpush1.bf16.msra.mxu0 %v1382
        %1448 = vmatprep.subr.bf16.mxu0 %v1385
        %1449 = vmatpush1.bf16.msra.mxu0 %v1384
        %1450 = vmatprep.subr.bf16.mxu0 %v1387
        %1451 = vmatpush1.bf16.msra.mxu0 %v1386
        %1452 = vmatprep.subr.bf16.mxu0 %v1389
        %1453 = vmatpush1.bf16.msra.mxu0 %v1388
        %1454 = vmatprep.subr.bf16.mxu0 %v1391
        %1455 = vmatpush1.bf16.msra.mxu0 %v1390
        %1456 = vmatprep.subr.bf16.mxu0 %v1393
        %1457 = vmatpush1.bf16.msra.mxu0 %v1392
        %1458 = vmatprep.subr.bf16.mxu0 %v1395
        %1459 = vmatpush1.bf16.msra.mxu0 %v1394
        %1460 = vmatprep.mubr.bf16.mxu0 %v1209
        %1461 = vmatmul.mubr.bf16.gmra.mrb[0].mxu0 %v1208
        %v1462 = vpop.f32.mrb[0].mxu0
        %v1463 = vadd.f32 %v1261, %v1462
        %v1464 = vpop.f32.mrb[0].mxu0
        %v1465 = vadd.f32 %v1265, %v1464
        %v1466 = vpop.f32.mrb[0].mxu0
        %v1467 = vadd.f32 %v1261, %v1466
        %v1468 = vpop.f32.mrb[0].mxu0
        %v1469 = vadd.f32 %v1265, %v1468
        %1470 = vmatprep.mubr.bf16.mxu0 %v1211
        %1471 = vmatmul.mubr.bf16.gmra.mrb[0].mxu0 %v1210
        %v1472 = vpop.f32.mrb[0].mxu0
        %v1473 = vadd.f32 %v1261, %v1472
        %v1474 = vpop.f32.mrb[0].mxu0
        %v1475 = vadd.f32 %v1265, %v1474
        %v1476 = vpop.f32.mrb[0].mxu0
        %v1477 = vadd.f32 %v1261, %v1476
        %v1478 = vpop.f32.mrb[0].mxu0
        %v1479 = vadd.f32 %v1265, %v1478
        %1480 = vmatprep.mubr.bf16.mxu0 %v1213
        %1481 = vmatmul.mubr.bf16.gmra.mrb[0].mxu0 %v1212
        %v1482 = vpop.f32.mrb[0].mxu0
        %v1483 = vadd.f32 %v1261, %v1482
        %v1484 = vpop.f32.mrb[0].mxu0
        %v1485 = vadd.f32 %v1265, %v1484
        %v1486 = vpop.f32.mrb[0].mxu0
        %v1487 = vadd.f32 %v1261, %v1486
        %v1488 = vpop.f32.mrb[0].mxu0
        %v1489 = vadd.f32 %v1265, %v1488
        %1490 = vmatprep.mubr.bf16.mxu0 %v1215
        %1491 = vmatmul.mubr.bf16.gmra.mrb[0].mxu0 %v1214
        %v1492 = vpop.f32.mrb[0].mxu0
        %v1493 = vadd.f32 %v1261, %v1492
        %v1494 = vpop.f32.mrb[0].mxu0
        %v1495 = vadd.f32 %v1265, %v1494
        %v1496 = vpop.f32.mrb[0].mxu0
        %v1497 = vadd.f32 %v1261, %v1496
        %v1498 = vpop.f32.mrb[0].mxu0
        %v1499 = vadd.f32 %v1265, %v1498
        %1500 = vmatprep.mubr.bf16.mxu0 %v1217
        %1501 = vmatmul.mubr.bf16.gmra.mrb[0].mxu0 %v1216
        %v1502 = vpop.f32.mrb[0].mxu0
        %v1503 = vadd.f32 %v1261, %v1502
        %v1504 = vpop.f32.mrb[0].mxu0
        %v1505 = vadd.f32 %v1265, %v1504
        %v1506 = vpop.f32.mrb[0].mxu0
        %v1507 = vadd.f32 %v1261, %v1506
        %v1508 = vpop.f32.mrb[0].mxu0
        %v1509 = vadd.f32 %v1265, %v1508
        %1510 = vmatprep.mubr.bf16.mxu0 %v1219
        %1511 = vmatmul.mubr.bf16.gmra.mrb[0].mxu0 %v1218
        %v1512 = vpop.f32.mrb[0].mxu0
        %v1513 = vadd.f32 %v1261, %v1512
        %v1514 = vpop.f32.mrb[0].mxu0
        %v1515 = vadd.f32 %v1265, %v1514
        %v1516 = vpop.f32.mrb[0].mxu0
        %v1517 = vadd.f32 %v1261, %v1516
        %v1518 = vpop.f32.mrb[0].mxu0
        %v1519 = vadd.f32 %v1265, %v1518
        %1520 = vmatprep.mubr.bf16.mxu0 %v1221
        %1521 = vmatmul.mubr.bf16.gmra.mrb[0].mxu0 %v1220
        %v1522 = vpop.f32.mrb[0].mxu0
        %v1523 = vadd.f32 %v1261, %v1522
        %v1524 = vpop.f32.mrb[0].mxu0
        %v1525 = vadd.f32 %v1265, %v1524
        %v1526 = vpop.f32.mrb[0].mxu0
        %v1527 = vadd.f32 %v1261, %v1526
        %v1528 = vpop.f32.mrb[0].mxu0
        %v1529 = vadd.f32 %v1265, %v1528
        %1530 = vmatprep.mubr.bf16.mxu0 %v1223
        %1531 = vmatmul.mubr.bf16.gmra.mrb[0].mxu0 %v1222
        %v1532 = vpop.f32.mrb[0].mxu0
        %v1533 = vadd.f32 %v1261, %v1532
        %v1534 = vpop.f32.mrb[0].mxu0
        %v1535 = vadd.f32 %v1265, %v1534
        %v1536 = vpop.f32.mrb[0].mxu0
        %v1537 = vadd.f32 %v1261, %v1536
        %v1538 = vpop.f32.mrb[0].mxu0
        %v1539 = vadd.f32 %v1265, %v1538
        %1540 = vdwg.mxu0
        %v1541 = vmax.f32 %v1463, 0.0
        %v1542 = vmax.f32 %v1465, 0.0
        %v1543 = vmax.f32 %v1467, 0.0
        %v1544 = vmax.f32 %v1469, 0.0
        %v1545 = vmax.f32 %v1473, 0.0
        %v1546 = vmax.f32 %v1475, 0.0
        %v1547 = vmax.f32 %v1477, 0.0
        %v1548 = vmax.f32 %v1479, 0.0
        %v1549 = vmax.f32 %v1483, 0.0
        %v1550 = vmax.f32 %v1485, 0.0
        %v1551 = vmax.f32 %v1487, 0.0
        %v1552 = vmax.f32 %v1489, 0.0
        %v1553 = vmax.f32 %v1493, 0.0
        %v1554 = vmax.f32 %v1495, 0.0
        %v1555 = vmax.f32 %v1497, 0.0
        %v1556 = vmax.f32 %v1499, 0.0
        %v1557 = vmax.f32 %v1503, 0.0
        %v1558 = vmax.f32 %v1505, 0.0
        %v1559 = vmax.f32 %v1507, 0.0
        %v1560 = vmax.f32 %v1509, 0.0
        %v1561 = vmax.f32 %v1513, 0.0
        %v1562 = vmax.f32 %v1515, 0.0
        %v1563 = vmax.f32 %v1517, 0.0
        %v1564 = vmax.f32 %v1519, 0.0
        %v1565 = vmax.f32 %v1523, 0.0
        %v1566 = vmax.f32 %v1525, 0.0
        %v1567 = vmax.f32 %v1527, 0.0
        %v1568 = vmax.f32 %v1529, 0.0
        %v1569 = vmax.f32 %v1533, 0.0
        %v1570 = vmax.f32 %v1535, 0.0
        %v1571 = vmax.f32 %v1537, 0.0
        %v1572 = vmax.f32 %v1539, 0.0
        %v1573 = vpack.c.bf16 %v1543, %v1541
        %v1574 = vpack.c.bf16 %v1544, %v1542
        %v1575 = vpack.c.bf16 %v1547, %v1545
        %v1576 = vpack.c.bf16 %v1548, %v1546
        %v1577 = vpack.c.bf16 %v1551, %v1549
        %v1578 = vpack.c.bf16 %v1552, %v1550
        %v1579 = vpack.c.bf16 %v1555, %v1553
        %v1580 = vpack.c.bf16 %v1556, %v1554
        %v1581 = vpack.c.bf16 %v1559, %v1557
        %v1582 = vpack.c.bf16 %v1560, %v1558
        %v1583 = vpack.c.bf16 %v1563, %v1561
        %v1584 = vpack.c.bf16 %v1564, %v1562
        %v1585 = vpack.c.bf16 %v1567, %v1565
        %v1586 = vpack.c.bf16 %v1568, %v1566
        %v1587 = vpack.c.bf16 %v1571, %v1569
        %v1588 = vpack.c.bf16 %v1572, %v1570
        %v1589 = vld [vmem:[#allocation5] sm:$0xff]
        %v1590 = vld [vmem:[#allocation5 + $0x8] sm:$0xff]
        %v1591 = vld [vmem:[#allocation5 + $0x10] sm:$0xff]
        %v1592 = vld [vmem:[#allocation5 + $0x18] sm:$0xff]
        %v1593 = vld [vmem:[#allocation5 + $0x20] sm:$0xff]
        %v1594 = vld [vmem:[#allocation5 + $0x28] sm:$0xff]
        %v1595 = vld [vmem:[#allocation5 + $0x30] sm:$0xff]
        %v1596 = vld [vmem:[#allocation5 + $0x38] sm:$0xff]
        %v1597 = vld [vmem:[#allocation5 + $0x40] sm:$0xff]
        %v1598 = vld [vmem:[#allocation5 + $0x48] sm:$0xff]
        %v1599 = vld [vmem:[#allocation5 + $0x50] sm:$0xff]
        %v1600 = vld [vmem:[#allocation5 + $0x58] sm:$0xff]
        %v1601 = vld [vmem:[#allocation5 + $0x60] sm:$0xff]
        %v1602 = vld [vmem:[#allocation5 + $0x68] sm:$0xff]
        %v1603 = vld [vmem:[#allocation5 + $0x70] sm:$0xff]
        %v1604 = vld [vmem:[#allocation5 + $0x78] sm:$0xff]
        %v1605 = vld [vmem:[#allocation5 + $0x80] sm:$0xff]
        %v1606 = vld [vmem:[#allocation5 + $0x88] sm:$0xff]
        %v1607 = vld [vmem:[#allocation5 + $0x90] sm:$0xff]
        %v1608 = vld [vmem:[#allocation5 + $0x98] sm:$0xff]
        %v1609 = vld [vmem:[#allocation5 + $0xa0] sm:$0xff]
        %v1610 = vld [vmem:[#allocation5 + $0xa8] sm:$0xff]
        %v1611 = vld [vmem:[#allocation5 + $0xb0] sm:$0xff]
        %v1612 = vld [vmem:[#allocation5 + $0xb8] sm:$0xff]
        %v1613 = vld [vmem:[#allocation5 + $0xc0] sm:$0xff]
        %v1614 = vld [vmem:[#allocation5 + $0xc8] sm:$0xff]
        %v1615 = vld [vmem:[#allocation5 + $0xd0] sm:$0xff]
        %v1616 = vld [vmem:[#allocation5 + $0xd8] sm:$0xff]
        %v1617 = vld [vmem:[#allocation5 + $0xe0] sm:$0xff]
        %v1618 = vld [vmem:[#allocation5 + $0xe8] sm:$0xff]
        %v1619 = vld [vmem:[#allocation5 + $0xf0] sm:$0xff]
        %v1620 = vld [vmem:[#allocation5 + $0xf8] sm:$0xff]
        %v1621 = vld [vmem:[%s8] sm:$0x3]
        %v1623 = vlaneseq
        %v1624 = vshrl.u32 %v1623, 7
        %v1625 = vsub.s32 0, %v1624
        %v1626 = vrot.slane %v1621, %v1625
        %v1627 = vlaneseq
        %v1628 = vshrl.u32 %v1627, 7
        %v1629 = vsub.s32 1, %v1628
        %v1630 = vrot.slane %v1621, %v1629
        %v1665 = vunpack.c.l.b16 %v1589
        %v1666 = vunpack.c.h.b16 %v1589
        %v1667 = vunpack.c.l.b16 %v1590
        %v1668 = vunpack.c.h.b16 %v1590
        %v1669 = vunpack.c.l.b16 %v1591
        %v1670 = vunpack.c.h.b16 %v1591
        %v1671 = vunpack.c.l.b16 %v1592
        %v1672 = vunpack.c.h.b16 %v1592
        %v1673 = vunpack.c.l.b16 %v1593
        %v1674 = vunpack.c.h.b16 %v1593
        %v1675 = vunpack.c.l.b16 %v1594
        %v1676 = vunpack.c.h.b16 %v1594
        %v1677 = vunpack.c.l.b16 %v1595
        %v1678 = vunpack.c.h.b16 %v1595
        %v1679 = vunpack.c.l.b16 %v1596
        %v1680 = vunpack.c.h.b16 %v1596
        %v1681 = vunpack.c.l.b16 %v1597
        %v1682 = vunpack.c.h.b16 %v1597
        %v1683 = vunpack.c.l.b16 %v1598
        %v1684 = vunpack.c.h.b16 %v1598
        %v1685 = vunpack.c.l.b16 %v1599
        %v1686 = vunpack.c.h.b16 %v1599
        %v1687 = vunpack.c.l.b16 %v1600
        %v1688 = vunpack.c.h.b16 %v1600
        %v1689 = vunpack.c.l.b16 %v1601
        %v1690 = vunpack.c.h.b16 %v1601
        %v1691 = vunpack.c.l.b16 %v1602
        %v1692 = vunpack.c.h.b16 %v1602
        %v1693 = vunpack.c.l.b16 %v1603
        %v1694 = vunpack.c.h.b16 %v1603
        %v1695 = vunpack.c.l.b16 %v1604
        %v1696 = vunpack.c.h.b16 %v1604
        %v1697 = vunpack.c.l.b16 %v1605
        %v1698 = vunpack.c.h.b16 %v1605
        %v1699 = vunpack.c.l.b16 %v1606
        %v1700 = vunpack.c.h.b16 %v1606
        %v1701 = vunpack.c.l.b16 %v1607
        %v1702 = vunpack.c.h.b16 %v1607
        %v1703 = vunpack.c.l.b16 %v1608
        %v1704 = vunpack.c.h.b16 %v1608
        %v1705 = vunpack.c.l.b16 %v1609
        %v1706 = vunpack.c.h.b16 %v1609
        %v1707 = vunpack.c.l.b16 %v1610
        %v1708 = vunpack.c.h.b16 %v1610
        %v1709 = vunpack.c.l.b16 %v1611
        %v1710 = vunpack.c.h.b16 %v1611
        %v1711 = vunpack.c.l.b16 %v1612
        %v1712 = vunpack.c.h.b16 %v1612
        %v1713 = vunpack.c.l.b16 %v1613
        %v1714 = vunpack.c.h.b16 %v1613
        %v1715 = vunpack.c.l.b16 %v1614
        %v1716 = vunpack.c.h.b16 %v1614
        %v1717 = vunpack.c.l.b16 %v1615
        %v1718 = vunpack.c.h.b16 %v1615
        %v1719 = vunpack.c.l.b16 %v1616
        %v1720 = vunpack.c.h.b16 %v1616
        %v1721 = vunpack.c.l.b16 %v1617
        %v1722 = vunpack.c.h.b16 %v1617
        %v1723 = vunpack.c.l.b16 %v1618
        %v1724 = vunpack.c.h.b16 %v1618
        %v1725 = vunpack.c.l.b16 %v1619
        %v1726 = vunpack.c.h.b16 %v1619
        %v1727 = vunpack.c.l.b16 %v1620
        %v1728 = vunpack.c.h.b16 %v1620
        %v1729 = vpack.c.b16 %v1667, %v1665
        %v1730 = vpack.c.b16 %v1668, %v1666
        %v1731 = vpack.c.b16 %v1671, %v1669
        %v1732 = vpack.c.b16 %v1672, %v1670
        %v1733 = vpack.c.b16 %v1675, %v1673
        %v1734 = vpack.c.b16 %v1676, %v1674
        %v1735 = vpack.c.b16 %v1679, %v1677
        %v1736 = vpack.c.b16 %v1680, %v1678
        %v1737 = vpack.c.b16 %v1683, %v1681
        %v1738 = vpack.c.b16 %v1684, %v1682
        %v1739 = vpack.c.b16 %v1687, %v1685
        %v1740 = vpack.c.b16 %v1688, %v1686
        %v1741 = vpack.c.b16 %v1691, %v1689
        %v1742 = vpack.c.b16 %v1692, %v1690
        %v1743 = vpack.c.b16 %v1695, %v1693
        %v1744 = vpack.c.b16 %v1696, %v1694
        %v1745 = vpack.c.b16 %v1699, %v1697
        %v1746 = vpack.c.b16 %v1700, %v1698
        %v1747 = vpack.c.b16 %v1703, %v1701
        %v1748 = vpack.c.b16 %v1704, %v1702
        %v1749 = vpack.c.b16 %v1707, %v1705
        %v1750 = vpack.c.b16 %v1708, %v1706
        %v1751 = vpack.c.b16 %v1711, %v1709
        %v1752 = vpack.c.b16 %v1712, %v1710
        %v1753 = vpack.c.b16 %v1715, %v1713
        %v1754 = vpack.c.b16 %v1716, %v1714
        %v1755 = vpack.c.b16 %v1719, %v1717
        %v1756 = vpack.c.b16 %v1720, %v1718
        %v1757 = vpack.c.b16 %v1723, %v1721
        %v1758 = vpack.c.b16 %v1724, %v1722
        %v1759 = vpack.c.b16 %v1727, %v1725
        %v1760 = vpack.c.b16 %v1728, %v1726
        %1793 = vmatprep.subr.bf16.mxu0 %v1730
        %1794 = vmatpush1.bf16.msra.mxu0 %v1729
        %1795 = vmatprep.subr.bf16.mxu0 %v1732
        %1796 = vmatpush1.bf16.msra.mxu0 %v1731
        %1797 = vmatprep.subr.bf16.mxu0 %v1734
        %1798 = vmatpush1.bf16.msra.mxu0 %v1733
        %1799 = vmatprep.subr.bf16.mxu0 %v1736
        %1800 = vmatpush1.bf16.msra.mxu0 %v1735
        %1801 = vmatprep.subr.bf16.mxu0 %v1738
        %1802 = vmatpush1.bf16.msra.mxu0 %v1737
        %1803 = vmatprep.subr.bf16.mxu0 %v1740
        %1804 = vmatpush1.bf16.msra.mxu0 %v1739
        %1805 = vmatprep.subr.bf16.mxu0 %v1742
        %1806 = vmatpush1.bf16.msra.mxu0 %v1741
        %1807 = vmatprep.subr.bf16.mxu0 %v1744
        %1808 = vmatpush1.bf16.msra.mxu0 %v1743
        %1809 = vmatprep.subr.bf16.mxu0 %v1746
        %1810 = vmatpush1.bf16.msra.mxu0 %v1745
        %1811 = vmatprep.subr.bf16.mxu0 %v1748
        %1812 = vmatpush1.bf16.msra.mxu0 %v1747
        %1813 = vmatprep.subr.bf16.mxu0 %v1750
        %1814 = vmatpush1.bf16.msra.mxu0 %v1749
        %1815 = vmatprep.subr.bf16.mxu0 %v1752
        %1816 = vmatpush1.bf16.msra.mxu0 %v1751
        %1817 = vmatprep.subr.bf16.mxu0 %v1754
        %1818 = vmatpush1.bf16.msra.mxu0 %v1753
        %1819 = vmatprep.subr.bf16.mxu0 %v1756
        %1820 = vmatpush1.bf16.msra.mxu0 %v1755
        %1821 = vmatprep.subr.bf16.mxu0 %v1758
        %1822 = vmatpush1.bf16.msra.mxu0 %v1757
        %1823 = vmatprep.subr.bf16.mxu0 %v1760
        %1824 = vmatpush1.bf16.msra.mxu0 %v1759
        %1825 = vmatprep.mubr.bf16.mxu0 %v1574
        %1826 = vmatmul.mubr.bf16.gmra.mrb[0].mxu0 %v1573
        %v1827 = vpop.f32.mrb[0].mxu0
        %v1828 = vadd.f32 %v1626, %v1827
        %v1829 = vpop.f32.mrb[0].mxu0
        %v1830 = vadd.f32 %v1630, %v1829
        %v1831 = vpop.f32.mrb[0].mxu0
        %v1832 = vadd.f32 %v1626, %v1831
        %v1833 = vpop.f32.mrb[0].mxu0
        %v1834 = vadd.f32 %v1630, %v1833
        %1835 = vmatprep.mubr.bf16.mxu0 %v1576
        %1836 = vmatmul.mubr.bf16.gmra.mrb[0].mxu0 %v1575
        %v1837 = vpop.f32.mrb[0].mxu0
        %v1838 = vadd.f32 %v1626, %v1837
        %v1839 = vpop.f32.mrb[0].mxu0
        %v1840 = vadd.f32 %v1630, %v1839
        %v1841 = vpop.f32.mrb[0].mxu0
        %v1842 = vadd.f32 %v1626, %v1841
        %v1843 = vpop.f32.mrb[0].mxu0
        %v1844 = vadd.f32 %v1630, %v1843
        %1845 = vmatprep.mubr.bf16.mxu0 %v1578
        %1846 = vmatmul.mubr.bf16.gmra.mrb[0].mxu0 %v1577
        %v1847 = vpop.f32.mrb[0].mxu0
        %v1848 = vadd.f32 %v1626, %v1847
        %v1849 = vpop.f32.mrb[0].mxu0
        %v1850 = vadd.f32 %v1630, %v1849
        %v1851 = vpop.f32.mrb[0].mxu0
        %v1852 = vadd.f32 %v1626, %v1851
        %v1853 = vpop.f32.mrb[0].mxu0
        %v1854 = vadd.f32 %v1630, %v1853
        %1855 = vmatprep.mubr.bf16.mxu0 %v1580
        %1856 = vmatmul.mubr.bf16.gmra.mrb[0].mxu0 %v1579
        %v1857 = vpop.f32.mrb[0].mxu0
        %v1858 = vadd.f32 %v1626, %v1857
        %v1859 = vpop.f32.mrb[0].mxu0
        %v1860 = vadd.f32 %v1630, %v1859
        %v1861 = vpop.f32.mrb[0].mxu0
        %v1862 = vadd.f32 %v1626, %v1861
        %v1863 = vpop.f32.mrb[0].mxu0
        %v1864 = vadd.f32 %v1630, %v1863
        %1865 = vmatprep.mubr.bf16.mxu0 %v1582
        %1866 = vmatmul.mubr.bf16.gmra.mrb[0].mxu0 %v1581
        %v1867 = vpop.f32.mrb[0].mxu0
        %v1868 = vadd.f32 %v1626, %v1867
        %v1869 = vpop.f32.mrb[0].mxu0
        %v1870 = vadd.f32 %v1630, %v1869
        %v1871 = vpop.f32.mrb[0].mxu0
        %v1872 = vadd.f32 %v1626, %v1871
        %v1873 = vpop.f32.mrb[0].mxu0
        %v1874 = vadd.f32 %v1630, %v1873
        %1875 = vmatprep.mubr.bf16.mxu0 %v1584
        %1876 = vmatmul.mubr.bf16.gmra.mrb[0].mxu0 %v1583
        %v1877 = vpop.f32.mrb[0].mxu0
        %v1878 = vadd.f32 %v1626, %v1877
        %v1879 = vpop.f32.mrb[0].mxu0
        %v1880 = vadd.f32 %v1630, %v1879
        %v1881 = vpop.f32.mrb[0].mxu0
        %v1882 = vadd.f32 %v1626, %v1881
        %v1883 = vpop.f32.mrb[0].mxu0
        %v1884 = vadd.f32 %v1630, %v1883
        %1885 = vmatprep.mubr.bf16.mxu0 %v1586
        %1886 = vmatmul.mubr.bf16.gmra.mrb[0].mxu0 %v1585
        %v1887 = vpop.f32.mrb[0].mxu0
        %v1888 = vadd.f32 %v1626, %v1887
        %v1889 = vpop.f32.mrb[0].mxu0
        %v1890 = vadd.f32 %v1630, %v1889
        %v1891 = vpop.f32.mrb[0].mxu0
        %v1892 = vadd.f32 %v1626, %v1891
        %v1893 = vpop.f32.mrb[0].mxu0
        %v1894 = vadd.f32 %v1630, %v1893
        %1895 = vmatprep.mubr.bf16.mxu0 %v1588
        %1896 = vmatmul.mubr.bf16.gmra.mrb[0].mxu0 %v1587
        %v1897 = vpop.f32.mrb[0].mxu0
        %v1898 = vadd.f32 %v1626, %v1897
        %v1899 = vpop.f32.mrb[0].mxu0
        %v1900 = vadd.f32 %v1630, %v1899
        %v1901 = vpop.f32.mrb[0].mxu0
        %v1902 = vadd.f32 %v1626, %v1901
        %v1903 = vpop.f32.mrb[0].mxu0
        %v1904 = vadd.f32 %v1630, %v1903
        %1905 = vdwg.mxu0
        %v1906 = vmax.f32 %v1828, 0.0
        %v1907 = vmax.f32 %v1830, 0.0
        %v1908 = vmax.f32 %v1832, 0.0
        %v1909 = vmax.f32 %v1834, 0.0
        %v1910 = vmax.f32 %v1838, 0.0
        %v1911 = vmax.f32 %v1840, 0.0
        %v1912 = vmax.f32 %v1842, 0.0
        %v1913 = vmax.f32 %v1844, 0.0
        %v1914 = vmax.f32 %v1848, 0.0
        %v1915 = vmax.f32 %v1850, 0.0
        %v1916 = vmax.f32 %v1852, 0.0
        %v1917 = vmax.f32 %v1854, 0.0
        %v1918 = vmax.f32 %v1858, 0.0
        %v1919 = vmax.f32 %v1860, 0.0
        %v1920 = vmax.f32 %v1862, 0.0
        %v1921 = vmax.f32 %v1864, 0.0
        %v1922 = vmax.f32 %v1868, 0.0
        %v1923 = vmax.f32 %v1870, 0.0
        %v1924 = vmax.f32 %v1872, 0.0
        %v1925 = vmax.f32 %v1874, 0.0
        %v1926 = vmax.f32 %v1878, 0.0
        %v1927 = vmax.f32 %v1880, 0.0
        %v1928 = vmax.f32 %v1882, 0.0
        %v1929 = vmax.f32 %v1884, 0.0
        %v1930 = vmax.f32 %v1888, 0.0
        %v1931 = vmax.f32 %v1890, 0.0
        %v1932 = vmax.f32 %v1892, 0.0
        %v1933 = vmax.f32 %v1894, 0.0
        %v1934 = vmax.f32 %v1898, 0.0
        %v1935 = vmax.f32 %v1900, 0.0
        %v1936 = vmax.f32 %v1902, 0.0
        %v1937 = vmax.f32 %v1904, 0.0
        %v1938 = vpack.c.bf16 %v1908, %v1906
        %v1939 = vpack.c.bf16 %v1909, %v1907
        %v1940 = vpack.c.bf16 %v1912, %v1910
        %v1941 = vpack.c.bf16 %v1913, %v1911
        %v1942 = vpack.c.bf16 %v1916, %v1914
        %v1943 = vpack.c.bf16 %v1917, %v1915
        %v1944 = vpack.c.bf16 %v1920, %v1918
        %v1945 = vpack.c.bf16 %v1921, %v1919
        %v1946 = vpack.c.bf16 %v1924, %v1922
        %v1947 = vpack.c.bf16 %v1925, %v1923
        %v1948 = vpack.c.bf16 %v1928, %v1926
        %v1949 = vpack.c.bf16 %v1929, %v1927
        %v1950 = vpack.c.bf16 %v1932, %v1930
        %v1951 = vpack.c.bf16 %v1933, %v1931
        %v1952 = vpack.c.bf16 %v1936, %v1934
        %v1953 = vpack.c.bf16 %v1937, %v1935
        %v1954 = vld [vmem:[#allocation7] sm:$0xff]
        %v1955 = vld [vmem:[#allocation7 + $0x8] sm:$0xff]
        %v1956 = vld [vmem:[#allocation7 + $0x10] sm:$0xff]
        %v1957 = vld [vmem:[#allocation7 + $0x18] sm:$0xff]
        %v1958 = vld [vmem:[#allocation7 + $0x20] sm:$0xff]
        %v1959 = vld [vmem:[#allocation7 + $0x28] sm:$0xff]
        %v1960 = vld [vmem:[#allocation7 + $0x30] sm:$0xff]
        %v1961 = vld [vmem:[#allocation7 + $0x38] sm:$0xff]
        %v1962 = vld [vmem:[#allocation7 + $0x40] sm:$0xff]
        %v1963 = vld [vmem:[#allocation7 + $0x48] sm:$0xff]
        %v1964 = vld [vmem:[#allocation7 + $0x50] sm:$0xff]
        %v1965 = vld [vmem:[#allocation7 + $0x58] sm:$0xff]
        %v1966 = vld [vmem:[#allocation7 + $0x60] sm:$0xff]
        %v1967 = vld [vmem:[#allocation7 + $0x68] sm:$0xff]
        %v1968 = vld [vmem:[#allocation7 + $0x70] sm:$0xff]
        %v1969 = vld [vmem:[#allocation7 + $0x78] sm:$0xff]
        %v1970 = vld [vmem:[#allocation7 + $0x80] sm:$0xff]
        %v1971 = vld [vmem:[#allocation7 + $0x88] sm:$0xff]
        %v1972 = vld [vmem:[#allocation7 + $0x90] sm:$0xff]
        %v1973 = vld [vmem:[#allocation7 + $0x98] sm:$0xff]
        %v1974 = vld [vmem:[#allocation7 + $0xa0] sm:$0xff]
        %v1975 = vld [vmem:[#allocation7 + $0xa8] sm:$0xff]
        %v1976 = vld [vmem:[#allocation7 + $0xb0] sm:$0xff]
        %v1977 = vld [vmem:[#allocation7 + $0xb8] sm:$0xff]
        %v1978 = vld [vmem:[#allocation7 + $0xc0] sm:$0xff]
        %v1979 = vld [vmem:[#allocation7 + $0xc8] sm:$0xff]
        %v1980 = vld [vmem:[#allocation7 + $0xd0] sm:$0xff]
        %v1981 = vld [vmem:[#allocation7 + $0xd8] sm:$0xff]
        %v1982 = vld [vmem:[#allocation7 + $0xe0] sm:$0xff]
        %v1983 = vld [vmem:[#allocation7 + $0xe8] sm:$0xff]
        %v1984 = vld [vmem:[#allocation7 + $0xf0] sm:$0xff]
        %v1985 = vld [vmem:[#allocation7 + $0xf8] sm:$0xff]
        %v1986 = vld [vmem:[%s10] sm:$0x3]
        %v1988 = vlaneseq
        %v1989 = vshrl.u32 %v1988, 7
        %v1990 = vsub.s32 0, %v1989
        %v1991 = vrot.slane %v1986, %v1990
        %v1992 = vlaneseq
        %v1993 = vshrl.u32 %v1992, 7
        %v1994 = vsub.s32 1, %v1993
        %v1995 = vrot.slane %v1986, %v1994
        %v2030 = vunpack.c.l.b16 %v1954
        %v2031 = vunpack.c.h.b16 %v1954
        %v2032 = vunpack.c.l.b16 %v1955
        %v2033 = vunpack.c.h.b16 %v1955
        %v2034 = vunpack.c.l.b16 %v1956
        %v2035 = vunpack.c.h.b16 %v1956
        %v2036 = vunpack.c.l.b16 %v1957
        %v2037 = vunpack.c.h.b16 %v1957
        %v2038 = vunpack.c.l.b16 %v1958
        %v2039 = vunpack.c.h.b16 %v1958
        %v2040 = vunpack.c.l.b16 %v1959
        %v2041 = vunpack.c.h.b16 %v1959
        %v2042 = vunpack.c.l.b16 %v1960
        %v2043 = vunpack.c.h.b16 %v1960
        %v2044 = vunpack.c.l.b16 %v1961
        %v2045 = vunpack.c.h.b16 %v1961
        %v2046 = vunpack.c.l.b16 %v1962
        %v2047 = vunpack.c.h.b16 %v1962
        %v2048 = vunpack.c.l.b16 %v1963
        %v2049 = vunpack.c.h.b16 %v1963
        %v2050 = vunpack.c.l.b16 %v1964
        %v2051 = vunpack.c.h.b16 %v1964
        %v2052 = vunpack.c.l.b16 %v1965
        %v2053 = vunpack.c.h.b16 %v1965
        %v2054 = vunpack.c.l.b16 %v1966
        %v2055 = vunpack.c.h.b16 %v1966
        %v2056 = vunpack.c.l.b16 %v1967
        %v2057 = vunpack.c.h.b16 %v1967
        %v2058 = vunpack.c.l.b16 %v1968
        %v2059 = vunpack.c.h.b16 %v1968
        %v2060 = vunpack.c.l.b16 %v1969
        %v2061 = vunpack.c.h.b16 %v1969
        %v2062 = vunpack.c.l.b16 %v1970
        %v2063 = vunpack.c.h.b16 %v1970
        %v2064 = vunpack.c.l.b16 %v1971
        %v2065 = vunpack.c.h.b16 %v1971
        %v2066 = vunpack.c.l.b16 %v1972
        %v2067 = vunpack.c.h.b16 %v1972
        %v2068 = vunpack.c.l.b16 %v1973
        %v2069 = vunpack.c.h.b16 %v1973
        %v2070 = vunpack.c.l.b16 %v1974
        %v2071 = vunpack.c.h.b16 %v1974
        %v2072 = vunpack.c.l.b16 %v1975
        %v2073 = vunpack.c.h.b16 %v1975
        %v2074 = vunpack.c.l.b16 %v1976
        %v2075 = vunpack.c.h.b16 %v1976
        %v2076 = vunpack.c.l.b16 %v1977
        %v2077 = vunpack.c.h.b16 %v1977
        %v2078 = vunpack.c.l.b16 %v1978
        %v2079 = vunpack.c.h.b16 %v1978
        %v2080 = vunpack.c.l.b16 %v1979
        %v2081 = vunpack.c.h.b16 %v1979
        %v2082 = vunpack.c.l.b16 %v1980
        %v2083 = vunpack.c.h.b16 %v1980
        %v2084 = vunpack.c.l.b16 %v1981
        %v2085 = vunpack.c.h.b16 %v1981
        %v2086 = vunpack.c.l.b16 %v1982
        %v2087 = vunpack.c.h.b16 %v1982
        %v2088 = vunpack.c.l.b16 %v1983
        %v2089 = vunpack.c.h.b16 %v1983
        %v2090 = vunpack.c.l.b16 %v1984
        %v2091 = vunpack.c.h.b16 %v1984
        %v2092 = vunpack.c.l.b16 %v1985
        %v2093 = vunpack.c.h.b16 %v1985
        %v2094 = vpack.c.b16 %v2032, %v2030
        %v2095 = vpack.c.b16 %v2033, %v2031
        %v2096 = vpack.c.b16 %v2036, %v2034
        %v2097 = vpack.c.b16 %v2037, %v2035
        %v2098 = vpack.c.b16 %v2040, %v2038
        %v2099 = vpack.c.b16 %v2041, %v2039
        %v2100 = vpack.c.b16 %v2044, %v2042
        %v2101 = vpack.c.b16 %v2045, %v2043
        %v2102 = vpack.c.b16 %v2048, %v2046
        %v2103 = vpack.c.b16 %v2049, %v2047
        %v2104 = vpack.c.b16 %v2052, %v2050
        %v2105 = vpack.c.b16 %v2053, %v2051
        %v2106 = vpack.c.b16 %v2056, %v2054
        %v2107 = vpack.c.b16 %v2057, %v2055
        %v2108 = vpack.c.b16 %v2060, %v2058
        %v2109 = vpack.c.b16 %v2061, %v2059
        %v2110 = vpack.c.b16 %v2064, %v2062
        %v2111 = vpack.c.b16 %v2065, %v2063
        %v2112 = vpack.c.b16 %v2068, %v2066
        %v2113 = vpack.c.b16 %v2069, %v2067
        %v2114 = vpack.c.b16 %v2072, %v2070
        %v2115 = vpack.c.b16 %v2073, %v2071
        %v2116 = vpack.c.b16 %v2076, %v2074
        %v2117 = vpack.c.b16 %v2077, %v2075
        %v2118 = vpack.c.b16 %v2080, %v2078
        %v2119 = vpack.c.b16 %v2081, %v2079
        %v2120 = vpack.c.b16 %v2084, %v2082
        %v2121 = vpack.c.b16 %v2085, %v2083
        %v2122 = vpack.c.b16 %v2088, %v2086
        %v2123 = vpack.c.b16 %v2089, %v2087
        %v2124 = vpack.c.b16 %v2092, %v2090
        %v2125 = vpack.c.b16 %v2093, %v2091
        %2158 = vmatprep.subr.bf16.mxu0 %v2095
        %2159 = vmatpush1.bf16.msra.mxu0 %v2094
        %2160 = vmatprep.subr.bf16.mxu0 %v2097
        %2161 = vmatpush1.bf16.msra.mxu0 %v2096
        %2162 = vmatprep.subr.bf16.mxu0 %v2099
        %2163 = vmatpush1.bf16.msra.mxu0 %v2098
        %2164 = vmatprep.subr.bf16.mxu0 %v2101
        %2165 = vmatpush1.bf16.msra.mxu0 %v2100
        %2166 = vmatprep.subr.bf16.mxu0 %v2103
        %2167 = vmatpush1.bf16.msra.mxu0 %v2102
        %2168 = vmatprep.subr.bf16.mxu0 %v2105
        %2169 = vmatpush1.bf16.msra.mxu0 %v2104
        %2170 = vmatprep.subr.bf16.mxu0 %v2107
        %2171 = vmatpush1.bf16.msra.mxu0 %v2106
        %2172 = vmatprep.subr.bf16.mxu0 %v2109
        %2173 = vmatpush1.bf16.msra.mxu0 %v2108
        %2174 = vmatprep.subr.bf16.mxu0 %v2111
        %2175 = vmatpush1.bf16.msra.mxu0 %v2110
        %2176 = vmatprep.subr.bf16.mxu0 %v2113
        %2177 = vmatpush1.bf16.msra.mxu0 %v2112
        %2178 = vmatprep.subr.bf16.mxu0 %v2115
        %2179 = vmatpush1.bf16.msra.mxu0 %v2114
        %2180 = vmatprep.subr.bf16.mxu0 %v2117
        %2181 = vmatpush1.bf16.msra.mxu0 %v2116
        %2182 = vmatprep.subr.bf16.mxu0 %v2119
        %2183 = vmatpush1.bf16.msra.mxu0 %v2118
        %2184 = vmatprep.subr.bf16.mxu0 %v2121
        %2185 = vmatpush1.bf16.msra.mxu0 %v2120
        %2186 = vmatprep.subr.bf16.mxu0 %v2123
        %2187 = vmatpush1.bf16.msra.mxu0 %v2122
        %2188 = vmatprep.subr.bf16.mxu0 %v2125
        %2189 = vmatpush1.bf16.msra.mxu0 %v2124
        %2190 = vmatprep.mubr.bf16.mxu0 %v1939
        %2191 = vmatmul.mubr.bf16.gmra.mrb[0].mxu0 %v1938
        %v2192 = vpop.f32.mrb[0].mxu0
        %v2193 = vadd.f32 %v1991, %v2192
        %v2194 = vpop.f32.mrb[0].mxu0
        %v2195 = vadd.f32 %v1995, %v2194
        %v2196 = vpop.f32.mrb[0].mxu0
        %v2197 = vadd.f32 %v1991, %v2196
        %v2198 = vpop.f32.mrb[0].mxu0
        %v2199 = vadd.f32 %v1995, %v2198
        %2200 = vmatprep.mubr.bf16.mxu0 %v1941
        %2201 = vmatmul.mubr.bf16.gmra.mrb[0].mxu0 %v1940
        %v2202 = vpop.f32.mrb[0].mxu0
        %v2203 = vadd.f32 %v1991, %v2202
        %v2204 = vpop.f32.mrb[0].mxu0
        %v2205 = vadd.f32 %v1995, %v2204
        %v2206 = vpop.f32.mrb[0].mxu0
        %v2207 = vadd.f32 %v1991, %v2206
        %v2208 = vpop.f32.mrb[0].mxu0
        %v2209 = vadd.f32 %v1995, %v2208
        %2210 = vmatprep.mubr.bf16.mxu0 %v1943
        %2211 = vmatmul.mubr.bf16.gmra.mrb[0].mxu0 %v1942
        %v2212 = vpop.f32.mrb[0].mxu0
        %v2213 = vadd.f32 %v1991, %v2212
        %v2214 = vpop.f32.mrb[0].mxu0
        %v2215 = vadd.f32 %v1995, %v2214
        %v2216 = vpop.f32.mrb[0].mxu0
        %v2217 = vadd.f32 %v1991, %v2216
        %v2218 = vpop.f32.mrb[0].mxu0
        %v2219 = vadd.f32 %v1995, %v2218
        %2220 = vmatprep.mubr.bf16.mxu0 %v1945
        %2221 = vmatmul.mubr.bf16.gmra.mrb[0].mxu0 %v1944
        %v2222 = vpop.f32.mrb[0].mxu0
        %v2223 = vadd.f32 %v1991, %v2222
        %v2224 = vpop.f32.mrb[0].mxu0
        %v2225 = vadd.f32 %v1995, %v2224
        %v2226 = vpop.f32.mrb[0].mxu0
        %v2227 = vadd.f32 %v1991, %v2226
        %v2228 = vpop.f32.mrb[0].mxu0
        %v2229 = vadd.f32 %v1995, %v2228
        %2230 = vmatprep.mubr.bf16.mxu0 %v1947
        %2231 = vmatmul.mubr.bf16.gmra.mrb[0].mxu0 %v1946
        %v2232 = vpop.f32.mrb[0].mxu0
        %v2233 = vadd.f32 %v1991, %v2232
        %v2234 = vpop.f32.mrb[0].mxu0
        %v2235 = vadd.f32 %v1995, %v2234
        %v2236 = vpop.f32.mrb[0].mxu0
        %v2237 = vadd.f32 %v1991, %v2236
        %v2238 = vpop.f32.mrb[0].mxu0
        %v2239 = vadd.f32 %v1995, %v2238
        %2240 = vmatprep.mubr.bf16.mxu0 %v1949
        %2241 = vmatmul.mubr.bf16.gmra.mrb[0].mxu0 %v1948
        %v2242 = vpop.f32.mrb[0].mxu0
        %v2243 = vadd.f32 %v1991, %v2242
        %v2244 = vpop.f32.mrb[0].mxu0
        %v2245 = vadd.f32 %v1995, %v2244
        %v2246 = vpop.f32.mrb[0].mxu0
        %v2247 = vadd.f32 %v1991, %v2246
        %v2248 = vpop.f32.mrb[0].mxu0
        %v2249 = vadd.f32 %v1995, %v2248
        %2250 = vmatprep.mubr.bf16.mxu0 %v1951
        %2251 = vmatmul.mubr.bf16.gmra.mrb[0].mxu0 %v1950
        %v2252 = vpop.f32.mrb[0].mxu0
        %v2253 = vadd.f32 %v1991, %v2252
        %v2254 = vpop.f32.mrb[0].mxu0
        %v2255 = vadd.f32 %v1995, %v2254
        %v2256 = vpop.f32.mrb[0].mxu0
        %v2257 = vadd.f32 %v1991, %v2256
        %v2258 = vpop.f32.mrb[0].mxu0
        %v2259 = vadd.f32 %v1995, %v2258
        %2260 = vmatprep.mubr.bf16.mxu0 %v1953
        %2261 = vmatmul.mubr.bf16.gmra.mrb[0].mxu0 %v1952
        %v2262 = vpop.f32.mrb[0].mxu0
        %v2263 = vadd.f32 %v1991, %v2262
        %v2264 = vpop.f32.mrb[0].mxu0
        %v2265 = vadd.f32 %v1995, %v2264
        %v2266 = vpop.f32.mrb[0].mxu0
        %v2267 = vadd.f32 %v1991, %v2266
        %v2268 = vpop.f32.mrb[0].mxu0
        %v2269 = vadd.f32 %v1995, %v2268
        %2270 = vdwg.mxu0
        %v2271 = vmax.f32 %v2193, 0.0
        %v2272 = vmax.f32 %v2195, 0.0
        %v2273 = vmax.f32 %v2197, 0.0
        %v2274 = vmax.f32 %v2199, 0.0
        %v2275 = vmax.f32 %v2203, 0.0
        %v2276 = vmax.f32 %v2205, 0.0
        %v2277 = vmax.f32 %v2207, 0.0
        %v2278 = vmax.f32 %v2209, 0.0
        %v2279 = vmax.f32 %v2213, 0.0
        %v2280 = vmax.f32 %v2215, 0.0
        %v2281 = vmax.f32 %v2217, 0.0
        %v2282 = vmax.f32 %v2219, 0.0
        %v2283 = vmax.f32 %v2223, 0.0
        %v2284 = vmax.f32 %v2225, 0.0
        %v2285 = vmax.f32 %v2227, 0.0
        %v2286 = vmax.f32 %v2229, 0.0
        %v2287 = vmax.f32 %v2233, 0.0
        %v2288 = vmax.f32 %v2235, 0.0
        %v2289 = vmax.f32 %v2237, 0.0
        %v2290 = vmax.f32 %v2239, 0.0
        %v2291 = vmax.f32 %v2243, 0.0
        %v2292 = vmax.f32 %v2245, 0.0
        %v2293 = vmax.f32 %v2247, 0.0
        %v2294 = vmax.f32 %v2249, 0.0
        %v2295 = vmax.f32 %v2253, 0.0
        %v2296 = vmax.f32 %v2255, 0.0
        %v2297 = vmax.f32 %v2257, 0.0
        %v2298 = vmax.f32 %v2259, 0.0
        %v2299 = vmax.f32 %v2263, 0.0
        %v2300 = vmax.f32 %v2265, 0.0
        %v2301 = vmax.f32 %v2267, 0.0
        %v2302 = vmax.f32 %v2269, 0.0
        %v2303 = vpack.c.bf16 %v2273, %v2271
        %v2304 = vpack.c.bf16 %v2274, %v2272
        %v2305 = vpack.c.bf16 %v2277, %v2275
        %v2306 = vpack.c.bf16 %v2278, %v2276
        %v2307 = vpack.c.bf16 %v2281, %v2279
        %v2308 = vpack.c.bf16 %v2282, %v2280
        %v2309 = vpack.c.bf16 %v2285, %v2283
        %v2310 = vpack.c.bf16 %v2286, %v2284
        %v2311 = vpack.c.bf16 %v2289, %v2287
        %v2312 = vpack.c.bf16 %v2290, %v2288
        %v2313 = vpack.c.bf16 %v2293, %v2291
        %v2314 = vpack.c.bf16 %v2294, %v2292
        %v2315 = vpack.c.bf16 %v2297, %v2295
        %v2316 = vpack.c.bf16 %v2298, %v2296
        %v2317 = vpack.c.bf16 %v2301, %v2299
        %v2318 = vpack.c.bf16 %v2302, %v2300
        %v2319 = vld [vmem:[#allocation8] sm:$0xff]
        %v2320 = vld [vmem:[#allocation8 + $0x8] sm:$0xff]
        %v2321 = vld [vmem:[#allocation8 + $0x10] sm:$0xff]
        %v2322 = vld [vmem:[#allocation8 + $0x18] sm:$0xff]
        %v2323 = vld [vmem:[#allocation8 + $0x20] sm:$0xff]
        %v2324 = vld [vmem:[#allocation8 + $0x28] sm:$0xff]
        %v2325 = vld [vmem:[#allocation8 + $0x30] sm:$0xff]
        %v2326 = vld [vmem:[#allocation8 + $0x38] sm:$0xff]
        %v2327 = vld [vmem:[#allocation8 + $0x40] sm:$0xff]
        %v2328 = vld [vmem:[#allocation8 + $0x48] sm:$0xff]
        %v2329 = vld [vmem:[#allocation8 + $0x50] sm:$0xff]
        %v2330 = vld [vmem:[#allocation8 + $0x58] sm:$0xff]
        %v2331 = vld [vmem:[#allocation8 + $0x60] sm:$0xff]
        %v2332 = vld [vmem:[#allocation8 + $0x68] sm:$0xff]
        %v2333 = vld [vmem:[#allocation8 + $0x70] sm:$0xff]
        %v2334 = vld [vmem:[#allocation8 + $0x78] sm:$0xff]
        %v2335 = vld [vmem:[#allocation8 + $0x80] sm:$0xff]
        %v2336 = vld [vmem:[#allocation8 + $0x88] sm:$0xff]
        %v2337 = vld [vmem:[#allocation8 + $0x90] sm:$0xff]
        %v2338 = vld [vmem:[#allocation8 + $0x98] sm:$0xff]
        %v2339 = vld [vmem:[#allocation8 + $0xa0] sm:$0xff]
        %v2340 = vld [vmem:[#allocation8 + $0xa8] sm:$0xff]
        %v2341 = vld [vmem:[#allocation8 + $0xb0] sm:$0xff]
        %v2342 = vld [vmem:[#allocation8 + $0xb8] sm:$0xff]
        %v2343 = vld [vmem:[#allocation8 + $0xc0] sm:$0xff]
        %v2344 = vld [vmem:[#allocation8 + $0xc8] sm:$0xff]
        %v2345 = vld [vmem:[#allocation8 + $0xd0] sm:$0xff]
        %v2346 = vld [vmem:[#allocation8 + $0xd8] sm:$0xff]
        %v2347 = vld [vmem:[#allocation8 + $0xe0] sm:$0xff]
        %v2348 = vld [vmem:[#allocation8 + $0xe8] sm:$0xff]
        %v2349 = vld [vmem:[#allocation8 + $0xf0] sm:$0xff]
        %v2350 = vld [vmem:[#allocation8 + $0xf8] sm:$0xff]
        %v2351 = vld [vmem:[%s12] sm:$0x3]
        %v2353 = vlaneseq
        %v2354 = vshrl.u32 %v2353, 7
        %v2355 = vsub.s32 0, %v2354
        %v2356 = vrot.slane %v2351, %v2355
        %v2357 = vlaneseq
        %v2358 = vshrl.u32 %v2357, 7
        %v2359 = vsub.s32 1, %v2358
        %v2360 = vrot.slane %v2351, %v2359
        %v2395 = vunpack.c.l.b16 %v2319
        %v2396 = vunpack.c.h.b16 %v2319
        %v2397 = vunpack.c.l.b16 %v2320
        %v2398 = vunpack.c.h.b16 %v2320
        %v2399 = vunpack.c.l.b16 %v2321
        %v2400 = vunpack.c.h.b16 %v2321
        %v2401 = vunpack.c.l.b16 %v2322
        %v2402 = vunpack.c.h.b16 %v2322
        %v2403 = vunpack.c.l.b16 %v2323
        %v2404 = vunpack.c.h.b16 %v2323
        %v2405 = vunpack.c.l.b16 %v2324
        %v2406 = vunpack.c.h.b16 %v2324
        %v2407 = vunpack.c.l.b16 %v2325
        %v2408 = vunpack.c.h.b16 %v2325
        %v2409 = vunpack.c.l.b16 %v2326
        %v2410 = vunpack.c.h.b16 %v2326
        %v2411 = vunpack.c.l.b16 %v2327
        %v2412 = vunpack.c.h.b16 %v2327
        %v2413 = vunpack.c.l.b16 %v2328
        %v2414 = vunpack.c.h.b16 %v2328
        %v2415 = vunpack.c.l.b16 %v2329
        %v2416 = vunpack.c.h.b16 %v2329
        %v2417 = vunpack.c.l.b16 %v2330
        %v2418 = vunpack.c.h.b16 %v2330
        %v2419 = vunpack.c.l.b16 %v2331
        %v2420 = vunpack.c.h.b16 %v2331
        %v2421 = vunpack.c.l.b16 %v2332
        %v2422 = vunpack.c.h.b16 %v2332
        %v2423 = vunpack.c.l.b16 %v2333
        %v2424 = vunpack.c.h.b16 %v2333
        %v2425 = vunpack.c.l.b16 %v2334
        %v2426 = vunpack.c.h.b16 %v2334
        %v2427 = vunpack.c.l.b16 %v2335
        %v2428 = vunpack.c.h.b16 %v2335
        %v2429 = vunpack.c.l.b16 %v2336
        %v2430 = vunpack.c.h.b16 %v2336
        %v2431 = vunpack.c.l.b16 %v2337
        %v2432 = vunpack.c.h.b16 %v2337
        %v2433 = vunpack.c.l.b16 %v2338
        %v2434 = vunpack.c.h.b16 %v2338
        %v2435 = vunpack.c.l.b16 %v2339
        %v2436 = vunpack.c.h.b16 %v2339
        %v2437 = vunpack.c.l.b16 %v2340
        %v2438 = vunpack.c.h.b16 %v2340
        %v2439 = vunpack.c.l.b16 %v2341
        %v2440 = vunpack.c.h.b16 %v2341
        %v2441 = vunpack.c.l.b16 %v2342
        %v2442 = vunpack.c.h.b16 %v2342
        %v2443 = vunpack.c.l.b16 %v2343
        %v2444 = vunpack.c.h.b16 %v2343
        %v2445 = vunpack.c.l.b16 %v2344
        %v2446 = vunpack.c.h.b16 %v2344
        %v2447 = vunpack.c.l.b16 %v2345
        %v2448 = vunpack.c.h.b16 %v2345
        %v2449 = vunpack.c.l.b16 %v2346
        %v2450 = vunpack.c.h.b16 %v2346
        %v2451 = vunpack.c.l.b16 %v2347
        %v2452 = vunpack.c.h.b16 %v2347
        %v2453 = vunpack.c.l.b16 %v2348
        %v2454 = vunpack.c.h.b16 %v2348
        %v2455 = vunpack.c.l.b16 %v2349
        %v2456 = vunpack.c.h.b16 %v2349
        %v2457 = vunpack.c.l.b16 %v2350
        %v2458 = vunpack.c.h.b16 %v2350
        %v2459 = vpack.c.b16 %v2397, %v2395
        %v2460 = vpack.c.b16 %v2398, %v2396
        %v2461 = vpack.c.b16 %v2401, %v2399
        %v2462 = vpack.c.b16 %v2402, %v2400
        %v2463 = vpack.c.b16 %v2405, %v2403
        %v2464 = vpack.c.b16 %v2406, %v2404
        %v2465 = vpack.c.b16 %v2409, %v2407
        %v2466 = vpack.c.b16 %v2410, %v2408
        %v2467 = vpack.c.b16 %v2413, %v2411
        %v2468 = vpack.c.b16 %v2414, %v2412
        %v2469 = vpack.c.b16 %v2417, %v2415
        %v2470 = vpack.c.b16 %v2418, %v2416
        %v2471 = vpack.c.b16 %v2421, %v2419
        %v2472 = vpack.c.b16 %v2422, %v2420
        %v2473 = vpack.c.b16 %v2425, %v2423
        %v2474 = vpack.c.b16 %v2426, %v2424
        %v2475 = vpack.c.b16 %v2429, %v2427
        %v2476 = vpack.c.b16 %v2430, %v2428
        %v2477 = vpack.c.b16 %v2433, %v2431
        %v2478 = vpack.c.b16 %v2434, %v2432
        %v2479 = vpack.c.b16 %v2437, %v2435
        %v2480 = vpack.c.b16 %v2438, %v2436
        %v2481 = vpack.c.b16 %v2441, %v2439
        %v2482 = vpack.c.b16 %v2442, %v2440
        %v2483 = vpack.c.b16 %v2445, %v2443
        %v2484 = vpack.c.b16 %v2446, %v2444
        %v2485 = vpack.c.b16 %v2449, %v2447
        %v2486 = vpack.c.b16 %v2450, %v2448
        %v2487 = vpack.c.b16 %v2453, %v2451
        %v2488 = vpack.c.b16 %v2454, %v2452
        %v2489 = vpack.c.b16 %v2457, %v2455
        %v2490 = vpack.c.b16 %v2458, %v2456
        %2523 = vmatprep.subr.bf16.mxu0 %v2460
        %2524 = vmatpush1.bf16.msra.mxu0 %v2459
        %2525 = vmatprep.subr.bf16.mxu0 %v2462
        %2526 = vmatpush1.bf16.msra.mxu0 %v2461
        %2527 = vmatprep.subr.bf16.mxu0 %v2464
        %2528 = vmatpush1.bf16.msra.mxu0 %v2463
        %2529 = vmatprep.subr.bf16.mxu0 %v2466
        %2530 = vmatpush1.bf16.msra.mxu0 %v2465
        %2531 = vmatprep.subr.bf16.mxu0 %v2468
        %2532 = vmatpush1.bf16.msra.mxu0 %v2467
        %2533 = vmatprep.subr.bf16.mxu0 %v2470
        %2534 = vmatpush1.bf16.msra.mxu0 %v2469
        %2535 = vmatprep.subr.bf16.mxu0 %v2472
        %2536 = vmatpush1.bf16.msra.mxu0 %v2471
        %2537 = vmatprep.subr.bf16.mxu0 %v2474
        %2538 = vmatpush1.bf16.msra.mxu0 %v2473
        %2539 = vmatprep.subr.bf16.mxu0 %v2476
        %2540 = vmatpush1.bf16.msra.mxu0 %v2475
        %2541 = vmatprep.subr.bf16.mxu0 %v2478
        %2542 = vmatpush1.bf16.msra.mxu0 %v2477
        %2543 = vmatprep.subr.bf16.mxu0 %v2480
        %2544 = vmatpush1.bf16.msra.mxu0 %v2479
        %2545 = vmatprep.subr.bf16.mxu0 %v2482
        %2546 = vmatpush1.bf16.msra.mxu0 %v2481
        %2547 = vmatprep.subr.bf16.mxu0 %v2484
        %2548 = vmatpush1.bf16.msra.mxu0 %v2483
        %2549 = vmatprep.subr.bf16.mxu0 %v2486
        %2550 = vmatpush1.bf16.msra.mxu0 %v2485
        %2551 = vmatprep.subr.bf16.mxu0 %v2488
        %2552 = vmatpush1.bf16.msra.mxu0 %v2487
        %2553 = vmatprep.subr.bf16.mxu0 %v2490
        %2554 = vmatpush1.bf16.msra.mxu0 %v2489
        %2555 = vmatprep.mubr.bf16.mxu0 %v2304
        %2556 = vmatmul.mubr.bf16.gmra.mrb[0].mxu0 %v2303
        %v2557 = vpop.f32.mrb[0].mxu0
        %v2558 = vadd.f32 %v2356, %v2557
        %v2559 = vpop.f32.mrb[0].mxu0
        %v2560 = vadd.f32 %v2360, %v2559
        %v2561 = vpop.f32.mrb[0].mxu0
        %v2562 = vadd.f32 %v2356, %v2561
        %v2563 = vpop.f32.mrb[0].mxu0
        %v2564 = vadd.f32 %v2360, %v2563
        %2565 = vmatprep.mubr.bf16.mxu0 %v2306
        %2566 = vmatmul.mubr.bf16.gmra.mrb[0].mxu0 %v2305
        %v2567 = vpop.f32.mrb[0].mxu0
        %v2568 = vadd.f32 %v2356, %v2567
        %v2569 = vpop.f32.mrb[0].mxu0
        %v2570 = vadd.f32 %v2360, %v2569
        %v2571 = vpop.f32.mrb[0].mxu0
        %v2572 = vadd.f32 %v2356, %v2571
        %v2573 = vpop.f32.mrb[0].mxu0
        %v2574 = vadd.f32 %v2360, %v2573
        %2575 = vmatprep.mubr.bf16.mxu0 %v2308
        %2576 = vmatmul.mubr.bf16.gmra.mrb[0].mxu0 %v2307
        %v2577 = vpop.f32.mrb[0].mxu0
        %v2578 = vadd.f32 %v2356, %v2577
        %v2579 = vpop.f32.mrb[0].mxu0
        %v2580 = vadd.f32 %v2360, %v2579
        %v2581 = vpop.f32.mrb[0].mxu0
        %v2582 = vadd.f32 %v2356, %v2581
        %v2583 = vpop.f32.mrb[0].mxu0
        %v2584 = vadd.f32 %v2360, %v2583
        %2585 = vmatprep.mubr.bf16.mxu0 %v2310
        %2586 = vmatmul.mubr.bf16.gmra.mrb[0].mxu0 %v2309
        %v2587 = vpop.f32.mrb[0].mxu0
        %v2588 = vadd.f32 %v2356, %v2587
        %v2589 = vpop.f32.mrb[0].mxu0
        %v2590 = vadd.f32 %v2360, %v2589
        %v2591 = vpop.f32.mrb[0].mxu0
        %v2592 = vadd.f32 %v2356, %v2591
        %v2593 = vpop.f32.mrb[0].mxu0
        %v2594 = vadd.f32 %v2360, %v2593
        %2595 = vmatprep.mubr.bf16.mxu0 %v2312
        %2596 = vmatmul.mubr.bf16.gmra.mrb[0].mxu0 %v2311
        %v2597 = vpop.f32.mrb[0].mxu0
        %v2598 = vadd.f32 %v2356, %v2597
        %v2599 = vpop.f32.mrb[0].mxu0
        %v2600 = vadd.f32 %v2360, %v2599
        %v2601 = vpop.f32.mrb[0].mxu0
        %v2602 = vadd.f32 %v2356, %v2601
        %v2603 = vpop.f32.mrb[0].mxu0
        %v2604 = vadd.f32 %v2360, %v2603
        %2605 = vmatprep.mubr.bf16.mxu0 %v2314
        %2606 = vmatmul.mubr.bf16.gmra.mrb[0].mxu0 %v2313
        %v2607 = vpop.f32.mrb[0].mxu0
        %v2608 = vadd.f32 %v2356, %v2607
        %v2609 = vpop.f32.mrb[0].mxu0
        %v2610 = vadd.f32 %v2360, %v2609
        %v2611 = vpop.f32.mrb[0].mxu0
        %v2612 = vadd.f32 %v2356, %v2611
        %v2613 = vpop.f32.mrb[0].mxu0
        %v2614 = vadd.f32 %v2360, %v2613
        %2615 = vmatprep.mubr.bf16.mxu0 %v2316
        %2616 = vmatmul.mubr.bf16.gmra.mrb[0].mxu0 %v2315
        %v2617 = vpop.f32.mrb[0].mxu0
        %v2618 = vadd.f32 %v2356, %v2617
        %v2619 = vpop.f32.mrb[0].mxu0
        %v2620 = vadd.f32 %v2360, %v2619
        %v2621 = vpop.f32.mrb[0].mxu0
        %v2622 = vadd.f32 %v2356, %v2621
        %v2623 = vpop.f32.mrb[0].mxu0
        %v2624 = vadd.f32 %v2360, %v2623
        %2625 = vmatprep.mubr.bf16.mxu0 %v2318
        %2626 = vmatmul.mubr.bf16.gmra.mrb[0].mxu0 %v2317
        %v2627 = vpop.f32.mrb[0].mxu0
        %v2628 = vadd.f32 %v2356, %v2627
        %v2629 = vpop.f32.mrb[0].mxu0
        %v2630 = vadd.f32 %v2360, %v2629
        %v2631 = vpop.f32.mrb[0].mxu0
        %v2632 = vadd.f32 %v2356, %v2631
        %v2633 = vpop.f32.mrb[0].mxu0
        %v2634 = vadd.f32 %v2360, %v2633
        %2635 = vdwg.mxu0
        %v2636 = vmax.f32 %v2558, 0.0
        %v2637 = vmax.f32 %v2560, 0.0
        %v2638 = vmax.f32 %v2562, 0.0
        %v2639 = vmax.f32 %v2564, 0.0
        %v2640 = vmax.f32 %v2568, 0.0
        %v2641 = vmax.f32 %v2570, 0.0
        %v2642 = vmax.f32 %v2572, 0.0
        %v2643 = vmax.f32 %v2574, 0.0
        %v2644 = vmax.f32 %v2578, 0.0
        %v2645 = vmax.f32 %v2580, 0.0
        %v2646 = vmax.f32 %v2582, 0.0
        %v2647 = vmax.f32 %v2584, 0.0
        %v2648 = vmax.f32 %v2588, 0.0
        %v2649 = vmax.f32 %v2590, 0.0
        %v2650 = vmax.f32 %v2592, 0.0
        %v2651 = vmax.f32 %v2594, 0.0
        %v2652 = vmax.f32 %v2598, 0.0
        %v2653 = vmax.f32 %v2600, 0.0
        %v2654 = vmax.f32 %v2602, 0.0
        %v2655 = vmax.f32 %v2604, 0.0
        %v2656 = vmax.f32 %v2608, 0.0
        %v2657 = vmax.f32 %v2610, 0.0
        %v2658 = vmax.f32 %v2612, 0.0
        %v2659 = vmax.f32 %v2614, 0.0
        %v2660 = vmax.f32 %v2618, 0.0
        %v2661 = vmax.f32 %v2620, 0.0
        %v2662 = vmax.f32 %v2622, 0.0
        %v2663 = vmax.f32 %v2624, 0.0
        %v2664 = vmax.f32 %v2628, 0.0
        %v2665 = vmax.f32 %v2630, 0.0
        %v2666 = vmax.f32 %v2632, 0.0
        %v2667 = vmax.f32 %v2634, 0.0
        %v2668 = vpack.c.bf16 %v2638, %v2636
        %v2669 = vpack.c.bf16 %v2639, %v2637
        %v2670 = vpack.c.bf16 %v2642, %v2640
        %v2671 = vpack.c.bf16 %v2643, %v2641
        %v2672 = vpack.c.bf16 %v2646, %v2644
        %v2673 = vpack.c.bf16 %v2647, %v2645
        %v2674 = vpack.c.bf16 %v2650, %v2648
        %v2675 = vpack.c.bf16 %v2651, %v2649
        %v2676 = vpack.c.bf16 %v2654, %v2652
        %v2677 = vpack.c.bf16 %v2655, %v2653
        %v2678 = vpack.c.bf16 %v2658, %v2656
        %v2679 = vpack.c.bf16 %v2659, %v2657
        %v2680 = vpack.c.bf16 %v2662, %v2660
        %v2681 = vpack.c.bf16 %v2663, %v2661
        %v2682 = vpack.c.bf16 %v2666, %v2664
        %v2683 = vpack.c.bf16 %v2667, %v2665
        %v2684 = vld [vmem:[#allocation10] sm:$0xff]
        %v2685 = vld [vmem:[#allocation10 + $0x8] sm:$0xff]
        %v2686 = vld [vmem:[#allocation10 + $0x10] sm:$0xff]
        %v2687 = vld [vmem:[#allocation10 + $0x18] sm:$0xff]
        %v2688 = vld [vmem:[#allocation10 + $0x20] sm:$0xff]
        %v2689 = vld [vmem:[#allocation10 + $0x28] sm:$0xff]
        %v2690 = vld [vmem:[#allocation10 + $0x30] sm:$0xff]
        %v2691 = vld [vmem:[#allocation10 + $0x38] sm:$0xff]
        %v2692 = vld [vmem:[#allocation10 + $0x40] sm:$0xff]
        %v2693 = vld [vmem:[#allocation10 + $0x48] sm:$0xff]
        %v2694 = vld [vmem:[#allocation10 + $0x50] sm:$0xff]
        %v2695 = vld [vmem:[#allocation10 + $0x58] sm:$0xff]
        %v2696 = vld [vmem:[#allocation10 + $0x60] sm:$0xff]
        %v2697 = vld [vmem:[#allocation10 + $0x68] sm:$0xff]
        %v2698 = vld [vmem:[#allocation10 + $0x70] sm:$0xff]
        %v2699 = vld [vmem:[#allocation10 + $0x78] sm:$0xff]
        %v2700 = vld [vmem:[#allocation10 + $0x80] sm:$0xff]
        %v2701 = vld [vmem:[#allocation10 + $0x88] sm:$0xff]
        %v2702 = vld [vmem:[#allocation10 + $0x90] sm:$0xff]
        %v2703 = vld [vmem:[#allocation10 + $0x98] sm:$0xff]
        %v2704 = vld [vmem:[#allocation10 + $0xa0] sm:$0xff]
        %v2705 = vld [vmem:[#allocation10 + $0xa8] sm:$0xff]
        %v2706 = vld [vmem:[#allocation10 + $0xb0] sm:$0xff]
        %v2707 = vld [vmem:[#allocation10 + $0xb8] sm:$0xff]
        %v2708 = vld [vmem:[#allocation10 + $0xc0] sm:$0xff]
        %v2709 = vld [vmem:[#allocation10 + $0xc8] sm:$0xff]
        %v2710 = vld [vmem:[#allocation10 + $0xd0] sm:$0xff]
        %v2711 = vld [vmem:[#allocation10 + $0xd8] sm:$0xff]
        %v2712 = vld [vmem:[#allocation10 + $0xe0] sm:$0xff]
        %v2713 = vld [vmem:[#allocation10 + $0xe8] sm:$0xff]
        %v2714 = vld [vmem:[#allocation10 + $0xf0] sm:$0xff]
        %v2715 = vld [vmem:[#allocation10 + $0xf8] sm:$0xff]
        %v2716 = vld [vmem:[%s14] sm:$0x3]
        %v2718 = vlaneseq
        %v2719 = vshrl.u32 %v2718, 7
        %v2720 = vsub.s32 0, %v2719
        %v2721 = vrot.slane %v2716, %v2720
        %v2722 = vlaneseq
        %v2723 = vshrl.u32 %v2722, 7
        %v2724 = vsub.s32 1, %v2723
        %v2725 = vrot.slane %v2716, %v2724
        %v2760 = vunpack.c.l.b16 %v2684
        %v2761 = vunpack.c.h.b16 %v2684
        %v2762 = vunpack.c.l.b16 %v2685
        %v2763 = vunpack.c.h.b16 %v2685
        %v2764 = vunpack.c.l.b16 %v2686
        %v2765 = vunpack.c.h.b16 %v2686
        %v2766 = vunpack.c.l.b16 %v2687
        %v2767 = vunpack.c.h.b16 %v2687
        %v2768 = vunpack.c.l.b16 %v2688
        %v2769 = vunpack.c.h.b16 %v2688
        %v2770 = vunpack.c.l.b16 %v2689
        %v2771 = vunpack.c.h.b16 %v2689
        %v2772 = vunpack.c.l.b16 %v2690
        %v2773 = vunpack.c.h.b16 %v2690
        %v2774 = vunpack.c.l.b16 %v2691
        %v2775 = vunpack.c.h.b16 %v2691
        %v2776 = vunpack.c.l.b16 %v2692
        %v2777 = vunpack.c.h.b16 %v2692
        %v2778 = vunpack.c.l.b16 %v2693
        %v2779 = vunpack.c.h.b16 %v2693
        %v2780 = vunpack.c.l.b16 %v2694
        %v2781 = vunpack.c.h.b16 %v2694
        %v2782 = vunpack.c.l.b16 %v2695
        %v2783 = vunpack.c.h.b16 %v2695
        %v2784 = vunpack.c.l.b16 %v2696
        %v2785 = vunpack.c.h.b16 %v2696
        %v2786 = vunpack.c.l.b16 %v2697
        %v2787 = vunpack.c.h.b16 %v2697
        %v2788 = vunpack.c.l.b16 %v2698
        %v2789 = vunpack.c.h.b16 %v2698
        %v2790 = vunpack.c.l.b16 %v2699
        %v2791 = vunpack.c.h.b16 %v2699
        %v2792 = vunpack.c.l.b16 %v2700
        %v2793 = vunpack.c.h.b16 %v2700
        %v2794 = vunpack.c.l.b16 %v2701
        %v2795 = vunpack.c.h.b16 %v2701
        %v2796 = vunpack.c.l.b16 %v2702
        %v2797 = vunpack.c.h.b16 %v2702
        %v2798 = vunpack.c.l.b16 %v2703
        %v2799 = vunpack.c.h.b16 %v2703
        %v2800 = vunpack.c.l.b16 %v2704
        %v2801 = vunpack.c.h.b16 %v2704
        %v2802 = vunpack.c.l.b16 %v2705
        %v2803 = vunpack.c.h.b16 %v2705
        %v2804 = vunpack.c.l.b16 %v2706
        %v2805 = vunpack.c.h.b16 %v2706
        %v2806 = vunpack.c.l.b16 %v2707
        %v2807 = vunpack.c.h.b16 %v2707
        %v2808 = vunpack.c.l.b16 %v2708
        %v2809 = vunpack.c.h.b16 %v2708
        %v2810 = vunpack.c.l.b16 %v2709
        %v2811 = vunpack.c.h.b16 %v2709
        %v2812 = vunpack.c.l.b16 %v2710
        %v2813 = vunpack.c.h.b16 %v2710
        %v2814 = vunpack.c.l.b16 %v2711
        %v2815 = vunpack.c.h.b16 %v2711
        %v2816 = vunpack.c.l.b16 %v2712
        %v2817 = vunpack.c.h.b16 %v2712
        %v2818 = vunpack.c.l.b16 %v2713
        %v2819 = vunpack.c.h.b16 %v2713
        %v2820 = vunpack.c.l.b16 %v2714
        %v2821 = vunpack.c.h.b16 %v2714
        %v2822 = vunpack.c.l.b16 %v2715
        %v2823 = vunpack.c.h.b16 %v2715
        %v2824 = vpack.c.b16 %v2762, %v2760
        %v2825 = vpack.c.b16 %v2763, %v2761
        %v2826 = vpack.c.b16 %v2766, %v2764
        %v2827 = vpack.c.b16 %v2767, %v2765
        %v2828 = vpack.c.b16 %v2770, %v2768
        %v2829 = vpack.c.b16 %v2771, %v2769
        %v2830 = vpack.c.b16 %v2774, %v2772
        %v2831 = vpack.c.b16 %v2775, %v2773
        %v2832 = vpack.c.b16 %v2778, %v2776
        %v2833 = vpack.c.b16 %v2779, %v2777
        %v2834 = vpack.c.b16 %v2782, %v2780
        %v2835 = vpack.c.b16 %v2783, %v2781
        %v2836 = vpack.c.b16 %v2786, %v2784
        %v2837 = vpack.c.b16 %v2787, %v2785
        %v2838 = vpack.c.b16 %v2790, %v2788
        %v2839 = vpack.c.b16 %v2791, %v2789
        %v2840 = vpack.c.b16 %v2794, %v2792
        %v2841 = vpack.c.b16 %v2795, %v2793
        %v2842 = vpack.c.b16 %v2798, %v2796
        %v2843 = vpack.c.b16 %v2799, %v2797
        %v2844 = vpack.c.b16 %v2802, %v2800
        %v2845 = vpack.c.b16 %v2803, %v2801
        %v2846 = vpack.c.b16 %v2806, %v2804
        %v2847 = vpack.c.b16 %v2807, %v2805
        %v2848 = vpack.c.b16 %v2810, %v2808
        %v2849 = vpack.c.b16 %v2811, %v2809
        %v2850 = vpack.c.b16 %v2814, %v2812
        %v2851 = vpack.c.b16 %v2815, %v2813
        %v2852 = vpack.c.b16 %v2818, %v2816
        %v2853 = vpack.c.b16 %v2819, %v2817
        %v2854 = vpack.c.b16 %v2822, %v2820
        %v2855 = vpack.c.b16 %v2823, %v2821
        %2888 = vmatprep.subr.bf16.mxu0 %v2825
        %2889 = vmatpush1.bf16.msra.mxu0 %v2824
        %2890 = vmatprep.subr.bf16.mxu0 %v2827
        %2891 = vmatpush1.bf16.msra.mxu0 %v2826
        %2892 = vmatprep.subr.bf16.mxu0 %v2829
        %2893 = vmatpush1.bf16.msra.mxu0 %v2828
        %2894 = vmatprep.subr.bf16.mxu0 %v2831
        %2895 = vmatpush1.bf16.msra.mxu0 %v2830
        %2896 = vmatprep.subr.bf16.mxu0 %v2833
        %2897 = vmatpush1.bf16.msra.mxu0 %v2832
        %2898 = vmatprep.subr.bf16.mxu0 %v2835
        %2899 = vmatpush1.bf16.msra.mxu0 %v2834
        %2900 = vmatprep.subr.bf16.mxu0 %v2837
        %2901 = vmatpush1.bf16.msra.mxu0 %v2836
        %2902 = vmatprep.subr.bf16.mxu0 %v2839
        %2903 = vmatpush1.bf16.msra.mxu0 %v2838
        %2904 = vmatprep.subr.bf16.mxu0 %v2841
        %2905 = vmatpush1.bf16.msra.mxu0 %v2840
        %2906 = vmatprep.subr.bf16.mxu0 %v2843
        %2907 = vmatpush1.bf16.msra.mxu0 %v2842
        %2908 = vmatprep.subr.bf16.mxu0 %v2845
        %2909 = vmatpush1.bf16.msra.mxu0 %v2844
        %2910 = vmatprep.subr.bf16.mxu0 %v2847
        %2911 = vmatpush1.bf16.msra.mxu0 %v2846
        %2912 = vmatprep.subr.bf16.mxu0 %v2849
        %2913 = vmatpush1.bf16.msra.mxu0 %v2848
        %2914 = vmatprep.subr.bf16.mxu0 %v2851
        %2915 = vmatpush1.bf16.msra.mxu0 %v2850
        %2916 = vmatprep.subr.bf16.mxu0 %v2853
        %2917 = vmatpush1.bf16.msra.mxu0 %v2852
        %2918 = vmatprep.subr.bf16.mxu0 %v2855
        %2919 = vmatpush1.bf16.msra.mxu0 %v2854
        %2920 = vmatprep.mubr.bf16.mxu0 %v2669
        %2921 = vmatmul.mubr.bf16.gmra.mrb[0].mxu0 %v2668
        %v2922 = vpop.f32.mrb[0].mxu0
        %v2923 = vadd.f32 %v2721, %v2922
        %v2924 = vpop.f32.mrb[0].mxu0
        %v2925 = vadd.f32 %v2725, %v2924
        %v2926 = vpop.f32.mrb[0].mxu0
        %v2927 = vadd.f32 %v2721, %v2926
        %v2928 = vpop.f32.mrb[0].mxu0
        %v2929 = vadd.f32 %v2725, %v2928
        %2930 = vmatprep.mubr.bf16.mxu0 %v2671
        %2931 = vmatmul.mubr.bf16.gmra.mrb[0].mxu0 %v2670
        %v2932 = vpop.f32.mrb[0].mxu0
        %v2933 = vadd.f32 %v2721, %v2932
        %v2934 = vpop.f32.mrb[0].mxu0
        %v2935 = vadd.f32 %v2725, %v2934
        %v2936 = vpop.f32.mrb[0].mxu0
        %v2937 = vadd.f32 %v2721, %v2936
        %v2938 = vpop.f32.mrb[0].mxu0
        %v2939 = vadd.f32 %v2725, %v2938
        %2940 = vmatprep.mubr.bf16.mxu0 %v2673
        %2941 = vmatmul.mubr.bf16.gmra.mrb[0].mxu0 %v2672
        %v2942 = vpop.f32.mrb[0].mxu0
        %v2943 = vadd.f32 %v2721, %v2942
        %v2944 = vpop.f32.mrb[0].mxu0
        %v2945 = vadd.f32 %v2725, %v2944
        %v2946 = vpop.f32.mrb[0].mxu0
        %v2947 = vadd.f32 %v2721, %v2946
        %v2948 = vpop.f32.mrb[0].mxu0
        %v2949 = vadd.f32 %v2725, %v2948
        %2950 = vmatprep.mubr.bf16.mxu0 %v2675
        %2951 = vmatmul.mubr.bf16.gmra.mrb[0].mxu0 %v2674
        %v2952 = vpop.f32.mrb[0].mxu0
        %v2953 = vadd.f32 %v2721, %v2952
        %v2954 = vpop.f32.mrb[0].mxu0
        %v2955 = vadd.f32 %v2725, %v2954
        %v2956 = vpop.f32.mrb[0].mxu0
        %v2957 = vadd.f32 %v2721, %v2956
        %v2958 = vpop.f32.mrb[0].mxu0
        %v2959 = vadd.f32 %v2725, %v2958
        %2960 = vmatprep.mubr.bf16.mxu0 %v2677
        %2961 = vmatmul.mubr.bf16.gmra.mrb[0].mxu0 %v2676
        %v2962 = vpop.f32.mrb[0].mxu0
        %v2963 = vadd.f32 %v2721, %v2962
        %v2964 = vpop.f32.mrb[0].mxu0
        %v2965 = vadd.f32 %v2725, %v2964
        %v2966 = vpop.f32.mrb[0].mxu0
        %v2967 = vadd.f32 %v2721, %v2966
        %v2968 = vpop.f32.mrb[0].mxu0
        %v2969 = vadd.f32 %v2725, %v2968
        %2970 = vmatprep.mubr.bf16.mxu0 %v2679
        %2971 = vmatmul.mubr.bf16.gmra.mrb[0].mxu0 %v2678
        %v2972 = vpop.f32.mrb[0].mxu0
        %v2973 = vadd.f32 %v2721, %v2972
        %v2974 = vpop.f32.mrb[0].mxu0
        %v2975 = vadd.f32 %v2725, %v2974
        %v2976 = vpop.f32.mrb[0].mxu0
        %v2977 = vadd.f32 %v2721, %v2976
        %v2978 = vpop.f32.mrb[0].mxu0
        %v2979 = vadd.f32 %v2725, %v2978
        %2980 = vmatprep.mubr.bf16.mxu0 %v2681
        %2981 = vmatmul.mubr.bf16.gmra.mrb[0].mxu0 %v2680
        %v2982 = vpop.f32.mrb[0].mxu0
        %v2983 = vadd.f32 %v2721, %v2982
        %v2984 = vpop.f32.mrb[0].mxu0
        %v2985 = vadd.f32 %v2725, %v2984
        %v2986 = vpop.f32.mrb[0].mxu0
        %v2987 = vadd.f32 %v2721, %v2986
        %v2988 = vpop.f32.mrb[0].mxu0
        %v2989 = vadd.f32 %v2725, %v2988
        %2990 = vmatprep.mubr.bf16.mxu0 %v2683
        %2991 = vmatmul.mubr.bf16.gmra.mrb[0].mxu0 %v2682
        %v2992 = vpop.f32.mrb[0].mxu0
        %v2993 = vadd.f32 %v2721, %v2992
        %v2994 = vpop.f32.mrb[0].mxu0
        %v2995 = vadd.f32 %v2725, %v2994
        %v2996 = vpop.f32.mrb[0].mxu0
        %v2997 = vadd.f32 %v2721, %v2996
        %v2998 = vpop.f32.mrb[0].mxu0
        %v2999 = vadd.f32 %v2725, %v2998
        %3000 = vdwg.mxu0
        %v3001 = vmax.f32 %v2923, 0.0
        %v3002 = vmax.f32 %v2925, 0.0
        %v3003 = vmax.f32 %v2927, 0.0
        %v3004 = vmax.f32 %v2929, 0.0
        %v3005 = vmax.f32 %v2933, 0.0
        %v3006 = vmax.f32 %v2935, 0.0
        %v3007 = vmax.f32 %v2937, 0.0
        %v3008 = vmax.f32 %v2939, 0.0
        %v3009 = vmax.f32 %v2943, 0.0
        %v3010 = vmax.f32 %v2945, 0.0
        %v3011 = vmax.f32 %v2947, 0.0
        %v3012 = vmax.f32 %v2949, 0.0
        %v3013 = vmax.f32 %v2953, 0.0
        %v3014 = vmax.f32 %v2955, 0.0
        %v3015 = vmax.f32 %v2957, 0.0
        %v3016 = vmax.f32 %v2959, 0.0
        %v3017 = vmax.f32 %v2963, 0.0
        %v3018 = vmax.f32 %v2965, 0.0
        %v3019 = vmax.f32 %v2967, 0.0
        %v3020 = vmax.f32 %v2969, 0.0
        %v3021 = vmax.f32 %v2973, 0.0
        %v3022 = vmax.f32 %v2975, 0.0
        %v3023 = vmax.f32 %v2977, 0.0
        %v3024 = vmax.f32 %v2979, 0.0
        %v3025 = vmax.f32 %v2983, 0.0
        %v3026 = vmax.f32 %v2985, 0.0
        %v3027 = vmax.f32 %v2987, 0.0
        %v3028 = vmax.f32 %v2989, 0.0
        %v3029 = vmax.f32 %v2993, 0.0
        %v3030 = vmax.f32 %v2995, 0.0
        %v3031 = vmax.f32 %v2997, 0.0
        %v3032 = vmax.f32 %v2999, 0.0
        %v3033 = vld [vmem:[%s15] sm:$0x3]
        %v3035 = vlaneseq
        %v3036 = vshrl.u32 %v3035, 7
        %v3037 = vsub.s32 0, %v3036
        %v3038 = vrot.slane %v3033, %v3037
        %v3039 = vlaneseq
        %v3040 = vshrl.u32 %v3039, 7
        %v3041 = vsub.s32 1, %v3040
        %v3042 = vrot.slane %v3033, %v3041
        %v3045 = vmul.f32 %v3001, %v3038
        %v3046 = vmul.f32 %v3002, %v3042
        %v3047 = vmul.f32 %v3003, %v3038
        %v3048 = vmul.f32 %v3004, %v3042
        %v3049 = vmul.f32 %v3005, %v3038
        %v3050 = vmul.f32 %v3006, %v3042
        %v3051 = vmul.f32 %v3007, %v3038
        %v3052 = vmul.f32 %v3008, %v3042
        %v3053 = vmul.f32 %v3009, %v3038
        %v3054 = vmul.f32 %v3010, %v3042
        %v3055 = vmul.f32 %v3011, %v3038
        %v3056 = vmul.f32 %v3012, %v3042
        %v3057 = vmul.f32 %v3013, %v3038
        %v3058 = vmul.f32 %v3014, %v3042
        %v3059 = vmul.f32 %v3015, %v3038
        %v3060 = vmul.f32 %v3016, %v3042
        %v3061 = vmul.f32 %v3017, %v3038
        %v3062 = vmul.f32 %v3018, %v3042
        %v3063 = vmul.f32 %v3019, %v3038
        %v3064 = vmul.f32 %v3020, %v3042
        %v3065 = vmul.f32 %v3021, %v3038
        %v3066 = vmul.f32 %v3022, %v3042
        %v3067 = vmul.f32 %v3023, %v3038
        %v3068 = vmul.f32 %v3024, %v3042
        %v3069 = vmul.f32 %v3025, %v3038
        %v3070 = vmul.f32 %v3026, %v3042
        %v3071 = vmul.f32 %v3027, %v3038
        %v3072 = vmul.f32 %v3028, %v3042
        %v3073 = vmul.f32 %v3029, %v3038
        %v3074 = vmul.f32 %v3030, %v3042
        %v3075 = vmul.f32 %v3031, %v3038
        %v3076 = vmul.f32 %v3032, %v3042
        %v3077 = vadd.f32 %v3045, %v3046
        %3078 = vadd.xlane.f32.xlu0 %v3077
        %v3079 = vpop.xlane.xlu0 %3078
        %v3080 = vadd.f32 %v3047, %v3048
        %3081 = vadd.xlane.f32.xlu0 %v3080
        %v3082 = vpop.xlane.xlu0 %3081
        %v3083 = vadd.f32 %v3049, %v3050
        %3084 = vadd.xlane.f32.xlu0 %v3083
        %v3085 = vpop.xlane.xlu0 %3084
        %v3086 = vadd.f32 %v3051, %v3052
        %3087 = vadd.xlane.f32.xlu0 %v3086
        %v3088 = vpop.xlane.xlu0 %3087
        %v3089 = vadd.f32 %v3053, %v3054
        %3090 = vadd.xlane.f32.xlu0 %v3089
        %v3091 = vpop.xlane.xlu0 %3090
        %v3092 = vadd.f32 %v3055, %v3056
        %3093 = vadd.xlane.f32.xlu0 %v3092
        %v3094 = vpop.xlane.xlu0 %3093
        %v3095 = vadd.f32 %v3057, %v3058
        %3096 = vadd.xlane.f32.xlu0 %v3095
        %v3097 = vpop.xlane.xlu0 %3096
        %v3098 = vadd.f32 %v3059, %v3060
        %3099 = vadd.xlane.f32.xlu0 %v3098
        %v3100 = vpop.xlane.xlu0 %3099
        %v3101 = vadd.f32 %v3061, %v3062
        %3102 = vadd.xlane.f32.xlu0 %v3101
        %v3103 = vpop.xlane.xlu0 %3102
        %v3104 = vadd.f32 %v3063, %v3064
        %3105 = vadd.xlane.f32.xlu0 %v3104
        %v3106 = vpop.xlane.xlu0 %3105
        %v3107 = vadd.f32 %v3065, %v3066
        %3108 = vadd.xlane.f32.xlu0 %v3107
        %v3109 = vpop.xlane.xlu0 %3108
        %v3110 = vadd.f32 %v3067, %v3068
        %3111 = vadd.xlane.f32.xlu0 %v3110
        %v3112 = vpop.xlane.xlu0 %3111
        %v3113 = vadd.f32 %v3069, %v3070
        %3114 = vadd.xlane.f32.xlu0 %v3113
        %v3115 = vpop.xlane.xlu0 %3114
        %v3116 = vadd.f32 %v3071, %v3072
        %3117 = vadd.xlane.f32.xlu0 %v3116
        %v3118 = vpop.xlane.xlu0 %3117
        %v3119 = vadd.f32 %v3073, %v3074
        %3120 = vadd.xlane.f32.xlu0 %v3119
        %v3121 = vpop.xlane.xlu0 %3120
        %v3122 = vadd.f32 %v3075, %v3076
        %3123 = vadd.xlane.f32.xlu0 %v3122
        %v3124 = vpop.xlane.xlu0 %3123
        %v3125 = vld [vmem:[#allocation2] sm:$0x1]
        %v3127 = vlaneseq
        %v3128 = vshrl.u32 %v3127, 7
        %v3129 = vsub.s32 0, %v3128
        %v3130 = vrot.slane %v3125, %v3129
        %v3132 = vadd.f32 %v3079, %v3130
        %v3133 = vadd.f32 %v3082, %v3130
        %v3134 = vadd.f32 %v3085, %v3130
        %v3135 = vadd.f32 %v3088, %v3130
        %v3136 = vadd.f32 %v3091, %v3130
        %v3137 = vadd.f32 %v3094, %v3130
        %v3138 = vadd.f32 %v3097, %v3130
        %v3139 = vadd.f32 %v3100, %v3130
        %v3140 = vadd.f32 %v3103, %v3130
        %v3141 = vadd.f32 %v3106, %v3130
        %v3142 = vadd.f32 %v3109, %v3130
        %v3143 = vadd.f32 %v3112, %v3130
        %v3144 = vadd.f32 %v3115, %v3130
        %v3145 = vadd.f32 %v3118, %v3130
        %v3146 = vadd.f32 %v3121, %v3130
        %v3147 = vadd.f32 %v3124, %v3130
        %vm3148 = vcmask 7168
        %3149 = vst.msk [vmem:[%s625] sm:$0xff] %vm3148, %v3132
        %3150 = vst.msk [vmem:[%s625 + $0x8] sm:$0xff] %vm3148, %v3133
        %3151 = vst.msk [vmem:[%s625 + $0x10] sm:$0xff] %vm3148, %v3134
        %3152 = vst.msk [vmem:[%s625 + $0x18] sm:$0xff] %vm3148, %v3135
        %3153 = vst.msk [vmem:[%s625 + $0x20] sm:$0xff] %vm3148, %v3136
        %3154 = vst.msk [vmem:[%s625 + $0x28] sm:$0xff] %vm3148, %v3137
        %3155 = vst.msk [vmem:[%s625 + $0x30] sm:$0xff] %vm3148, %v3138
        %3156 = vst.msk [vmem:[%s625 + $0x38] sm:$0xff] %vm3148, %v3139
        %3157 = vst.msk [vmem:[%s625 + $0x40] sm:$0xff] %vm3148, %v3140
        %3158 = vst.msk [vmem:[%s625 + $0x48] sm:$0xff] %vm3148, %v3141
        %3159 = vst.msk [vmem:[%s625 + $0x50] sm:$0xff] %vm3148, %v3142
        %3160 = vst.msk [vmem:[%s625 + $0x58] sm:$0xff] %vm3148, %v3143
        %3161 = vst.msk [vmem:[%s625 + $0x60] sm:$0xff] %vm3148, %v3144
        %3162 = vst.msk [vmem:[%s625 + $0x68] sm:$0xff] %vm3148, %v3145
        %3163 = vst.msk [vmem:[%s625 + $0x70] sm:$0xff] %vm3148, %v3146
        %3164 = vst.msk [vmem:[%s625 + $0x78] sm:$0xff] %vm3148, %v3147
        %s3165 = smul.u32 16, %s33
        %p3166 = scmp.lt.s32.totalorder %s3165, 31
        %s3167 = scalar_select %p3166, %s3165, 31
        %s3168 = smul.addr %s3167, 8
        %s3169 = scalar_lea.vmem %s17, %s3168
        // Predicated region
        $region109: #{tpu_custom_call.1} parent=87 // pred_check
          %p3170 = pneg %p413
        $region110: #{tpu_custom_call.1} parent=87 // pred_check_branch
          %3172 = sbr.rel (%p3170) target = $region112
        $region111: #{tpu_custom_call.1} parent=87 // pred_region
          %s3173 = smul.u32 16, %s33
        $region112: #{tpu_custom_call.1} parent=87 // pred_fallthru
          _
      $region88: #{tpu_custom_call.1} parent=5 // pred_fallthru
        _
      %p3174 = scmp.le.s32.totalorder 2, %s28
      // Predicated region
      $region113: #{tpu_custom_call.1} parent=5 // pred_check
        %p3175 = pneg %p3174
      $region114: #{tpu_custom_call.1} parent=5 // pred_check_branch
        %3177 = sbr.rel (%p3175) target = $region116
      $region115: #{tpu_custom_call.1} parent=5 // pred_region
        %s3178 = ssub.s32 %s28, 2
        // Predicated region
        $region117: #{tpu_custom_call.1} parent=115 // pred_check
          %p3179 = pneg %p419
        $region118: #{tpu_custom_call.1} parent=115 // pred_check_branch
          %3181 = sbr.rel (%p3179) target = $region120
        $region119: #{tpu_custom_call.1} parent=115 // pred_region
          %s3182 = smul.u32 16, %s34
          %p3183 = scmp.lt.s32.totalorder %s3182, 31
          %s3184 = scalar_select %p3183, %s3182, 31
          %s3185 = smul.addr %s3184, 8
          %s3186 = scalar_lea.vmem %s17, %s3185
        $region120: #{tpu_custom_call.1} parent=115 // pred_fallthru
          _
      $region116: #{tpu_custom_call.1} parent=5 // pred_fallthru
        _
    $region6: #{tpu_custom_call.1} parent=1 // loop_footer
      %s32 = sadd.s32 1, %s28
    $region7: #{tpu_custom_call.1} parent=1 // loop_footer_branch
      %27 = sbr.rel target = $region3
    $region8: #{tpu_custom_call.1} parent=1 // loop_exit
      _
    %3187 = vsyncpa [#allocation4], 1
    %s3188 = scalar_lea.sflag [#allocation4], 1
    %3189 = vsyncpa %s3188, 1
    %3190 = vsyncpa [#allocation6], 1
    %3191 = vsyncpa [#allocation9], 1

</llo_original>
